<compile_context>
chip_gen: v7x
topology: tpu7x:2x2x1
jax: 0.10.0
libtpu: 0.0.40
codegen_flags: <defaults>
</compile_context>

<pallas_src>
import jax
import jax.numpy as jnp
import numpy as np
from jax.experimental import pallas as pl
from jax.experimental.pallas import tpu as pltpu


# --------------------------------------------------------------------------------------
# Fused kernel: whole ResNet forward for ONE image per grid step.
# Activation layout: padded "row slabs" (H+2, W*C) bf16 in VMEM scratch; padded row r
# holds input row r-1 (rows 0 and H+1 stay zero = conv padding), lane index = w*C + c.
# A 3x3 conv = sum of 3 row-window matmuls against row-Toeplitz weights (W*Cin, Wo*Cout).
# Stride-2 row gathering is a tiny 0/1 selection matmul (sel2 / sel3); its ky=1 result is
# reused by the conv1x1 downsample branch.
# --------------------------------------------------------------------------------------
def _resnet_fused_kernel(x_ref, stem_t_ref, t_ref, b_ref, sel2_ref, sel3_ref,
                         o_ref, a1, a2, a3, a4, a5, a6):
    f32 = jnp.float32
    bf16 = jnp.bfloat16

    # Zero the padded-activation scratches (halo rows double as the conv zero padding).
    for a in (a1, a2, a3, a4, a5, a6):
        a[...] = jnp.zeros_like(a)

    # ---- stem: conv3x3(3->16, s1) + BN + LeakyReLU(0.2) --------------------------------
    y = jnp.zeros((16, 256), f32)
    for ky in range(3):
        y += jnp.dot(x_ref[0, ky:ky + 16, :], stem_t_ref[ky],
                     preferred_element_type=f32)
    y += b_ref[0:1, :]
    y = jnp.where(y >= 0.0, y, 0.2 * y)
    a1[1:17, :] = y.astype(bf16)

    # ---- layer1 / BasicBlock(16->16, s1), identity residual ----------------------------
    y = jnp.zeros((16, 256), f32)
    for ky in range(3):
        y += jnp.dot(a1[ky:ky + 16, :], t_ref[0 + ky], preferred_element_type=f32)
    y = jnp.maximum(y + b_ref[1:2, :], 0.0)
    a2[1:17, :] = y.astype(bf16)

    y = jnp.zeros((16, 256), f32)
    for ky in range(3):
        y += jnp.dot(a2[ky:ky + 16, :], t_ref[3 + ky], preferred_element_type=f32)
    y = jnp.maximum(y + b_ref[2:3, :] + a1[1:17, :].astype(f32), 0.0)
    a3[1:17, :] = y.astype(bf16)

    # ---- layer2 / BasicBlock(16->32, s2), conv1x1 downsample ---------------------------
    src = a3[...]                                    # (18, 256) bf16
    y = jnp.zeros((8, 256), f32)
    center = None
    for ky in range(3):
        lhs = jnp.dot(sel2_ref[ky], src, preferred_element_type=f32).astype(bf16)
        if ky == 1:
            center = lhs                             # rows 2h+1: reused by downsample
        y += jnp.dot(lhs, t_ref[6 + ky], preferred_element_type=f32)
    y = jnp.maximum(y + b_ref[3:4, :], 0.0)
    a4[1:9, :] = y.astype(bf16)

    ds = jnp.dot(center, t_ref[18], preferred_element_type=f32)   # bn_d bias folded in b_ref[4]

    y = jnp.zeros((8, 256), f32)
    for ky in range(3):
        y += jnp.dot(a4[ky:ky + 8, :], t_ref[9 + ky], preferred_element_type=f32)
    y = jnp.maximum(y + b_ref[4:5, :] + ds, 0.0)
    a5[1:9, :] = y.astype(bf16)

    # ---- layer3 / BasicBlock(32->64, s2), conv1x1 downsample ---------------------------
    src = a5[...]                                    # (10, 256) bf16
    y = jnp.zeros((4, 256), f32)
    center = None
    for ky in range(3):
        lhs = jnp.dot(sel3_ref[ky], src, preferred_element_type=f32).astype(bf16)
        if ky == 1:
            center = lhs
        y += jnp.dot(lhs, t_ref[12 + ky], preferred_element_type=f32)
    y = jnp.maximum(y + b_ref[5:6, :], 0.0)
    a6[1:5, :] = y.astype(bf16)

    ds = jnp.dot(center, t_ref[19], preferred_element_type=f32)   # bn_d bias folded in b_ref[6]

    y = jnp.zeros((4, 256), f32)
    for ky in range(3):
        y += jnp.dot(a6[ky:ky + 4, :], t_ref[15 + ky], preferred_element_type=f32)
    y = jnp.maximum(y + b_ref[6:7, :] + ds, 0.0)
    o_ref[0, :, :] = y.astype(o_ref.dtype)


# --------------------------------------------------------------------------------------
# Wrapper: packs the NCHW input into padded bf16 row slabs and calls the fused kernel.
# --------------------------------------------------------------------------------------
def resnet_forward(packed, x_nchw):
    n, c, h, w = x_nchw.shape
    assert (c, h, w) == (3, 16, 16), "kernel is built for 3x16x16 inputs"

    # NCHW -> (N, H+2, W*3) bf16 row slabs; padded row r holds pixel row r-1.
    x_rows = jnp.transpose(x_nchw, (0, 2, 3, 1)).reshape(n, h, w * 3)
    x_rows = jnp.pad(x_rows, ((0, 0), (1, 1), (0, 0))).astype(jnp.bfloat16)

    out = pl.pallas_call(
        _resnet_fused_kernel,
        out_shape=jax.ShapeDtypeStruct((n, 4, 256), jnp.float32),
        grid=(n,),
        in_specs=[
            pl.BlockSpec((1, h + 2, w * 3), lambda i: (i, 0, 0)),   # per-image input rows
            pl.BlockSpec((3, 48, 256), lambda i: (0, 0, 0)),        # stem Toeplitz taps
            pl.BlockSpec((20, 256, 256), lambda i: (0, 0, 0)),      # block Toeplitz taps
            pl.BlockSpec((8, 256), lambda i: (0, 0)),               # folded-BN bias rows
            pl.BlockSpec((3, 8, 18), lambda i: (0, 0, 0)),          # stride-2 row select (layer2)
            pl.BlockSpec((3, 4, 10), lambda i: (0, 0, 0)),          # stride-2 row select (layer3)
        ],
        out_specs=pl.BlockSpec((1, 4, 256), lambda i: (i, 0, 0)),
        scratch_shapes=[
            pltpu.VMEM((18, 256), jnp.bfloat16),   # stem out          (16x16x16)
            pltpu.VMEM((18, 256), jnp.bfloat16),   # block1 conv1 out
            pltpu.VMEM((18, 256), jnp.bfloat16),   # block1 out
            pltpu.VMEM((10, 256), jnp.bfloat16),   # block2 conv1 out  (8x8x32)
            pltpu.VMEM((10, 256), jnp.bfloat16),   # block2 out
            pltpu.VMEM((6, 256), jnp.bfloat16),    # block3 conv1 out  (4x4x64)
        ],
        compiler_params=pltpu.CompilerParams(
            dimension_semantics=("parallel",),     # batch axis -> megacore on v7x
        ),
    )(x_rows, packed["stem_t"], packed["t"], packed["b"],
      packed["sel2"], packed["sel3"])

    lx3 = out.reshape(n, 4, 4, 64)
    return jnp.transpose(lx3, (0, 3, 1, 2))        # back to NCHW


# --------------------------------------------------------------------------------------
# Deterministic parameter construction + row-Toeplitz packing (inference-mode BN folded).
# --------------------------------------------------------------------------------------
def _he_conv(key, shape):
    fan_in = int(np.prod(shape[:-1]))
    return jnp.sqrt(2.0 / fan_in) * jax.random.normal(key, shape, dtype=jnp.float32)


def _bn_fold(key, c):
    k1, k2, k3, k4 = jax.random.split(key, 4)
    gamma = jax.random.uniform(k1, (c,), minval=0.8, maxval=1.2, dtype=jnp.float32)
    beta = 0.1 * jax.random.normal(k2, (c,), dtype=jnp.float32)
    mean = 0.1 * jax.random.normal(k3, (c,), dtype=jnp.float32)
    var = jax.random.uniform(k4, (c,), minval=0.5, maxval=1.5, dtype=jnp.float32)
    scale = gamma / jnp.sqrt(var + 1e-5)
    bias = beta - mean * scale
    return scale, bias


def init_raw_params(key):
    ks = iter(jax.random.split(key, 24))
    p = {"stem_w": _he_conv(next(ks), (3, 3, 3, 16))}
    p["stem_s"], p["stem_b"] = _bn_fold(next(ks), 16)

    def block(cin, cout, down):
        d = {"w1": _he_conv(next(ks), (3, 3, cin, cout))}
        d["s1"], d["b1"] = _bn_fold(next(ks), cout)
        d["w2"] = _he_conv(next(ks), (3, 3, cout, cout))
        d["s2"], d["b2"] = _bn_fold(next(ks), cout)
        if down:
            d["wd"] = _he_conv(next(ks), (cin, cout))
            d["sd"], d["bd"] = _bn_fold(next(ks), cout)
        return d

    p["b1"] = block(16, 16, False)
    p["b2"] = block(16, 32, True)
    p["b3"] = block(32, 64, True)
    return p


def _toeplitz_3x3(w_hwio, scale, win, stride):
    """Folded-BN 3x3 conv (pad=1) -> 3 row-Toeplitz taps of shape (win*cin, wo*cout)."""
    _, _, cin, cout = w_hwio.shape
    wf = (w_hwio * scale[None, None, None, :]).astype(jnp.float32)
    wo = (win - 1) // stride + 1
    j = jnp.arange(win)[:, None]
    wcol = jnp.arange(wo)[None, :]
    taps = []
    for ky in range(3):
        t = jnp.zeros((win, cin, wo, cout), jnp.float32)
        for kx in range(3):
            hit = (j == wcol * stride + kx - 1).astype(jnp.float32)   # (win, wo)
            t = t + hit[:, None, :, None] * wf[ky, kx][None, :, None, :]
        taps.append(t.reshape(win * cin, wo * cout))
    return jnp.stack(taps).astype(jnp.bfloat16)


def _toeplitz_1x1_s2(wd, scale, win):
    """Folded-BN conv1x1 stride-2 -> row-Toeplitz (win*cin, wo*cout)."""
    cin, cout = wd.shape
    wf = (wd * scale[None, :]).astype(jnp.float32)
    wo = (win - 1) // 2 + 1
    hit = (jnp.arange(win)[:, None] == 2 * jnp.arange(wo)[None, :]).astype(jnp.float32)
    t = hit[:, None, :, None] * wf[None, :, None, :]
    return t.reshape(win * cin, wo * cout).astype(jnp.bfloat16)


def _bias_row(bias, wo):
    return jnp.tile(bias, wo)          # row[w*cout + co] = bias[co]


def pack_params(raw):
    t_list = [
        _toeplitz_3x3(raw["b1"]["w1"], raw["b1"]["s1"], 16, 1),   # taps 0-2
        _toeplitz_3x3(raw["b1"]["w2"], raw["b1"]["s2"], 16, 1),   # taps 3-5
        _toeplitz_3x3(raw["b2"]["w1"], raw["b2"]["s1"], 16, 2),   # taps 6-8
        _toeplitz_3x3(raw["b2"]["w2"], raw["b2"]["s2"], 8, 1),    # taps 9-11
        _toeplitz_3x3(raw["b3"]["w1"], raw["b3"]["s1"], 8, 2),    # taps 12-14
        _toeplitz_3x3(raw["b3"]["w2"], raw["b3"]["s2"], 4, 1),    # taps 15-17
    ]
    t = jnp.concatenate(t_list, axis=0)                           # (18, 256, 256)
    t = jnp.concatenate(
        [t,
         _toeplitz_1x1_s2(raw["b2"]["wd"], raw["b2"]["sd"], 16)[None],   # tap 18
         _toeplitz_1x1_s2(raw["b3"]["wd"], raw["b3"]["sd"], 8)[None]],   # tap 19
        axis=0)                                                   # (20, 256, 256)

    stem_t = _toeplitz_3x3(raw["stem_w"], raw["stem_s"], 16, 1)   # (3, 48, 256)

    b = jnp.stack([
        _bias_row(raw["stem_b"], 16),
        _bias_row(raw["b1"]["b1"], 16),
        _bias_row(raw["b1"]["b2"], 16),
        _bias_row(raw["b2"]["b1"], 8),
        _bias_row(raw["b2"]["b2"], 8) + _bias_row(raw["b2"]["bd"], 8),   # bd folded
        _bias_row(raw["b3"]["b1"], 4),
        _bias_row(raw["b3"]["b2"], 4) + _bias_row(raw["b3"]["bd"], 4),   # bd folded
        jnp.zeros((256,), jnp.float32),
    ]).astype(jnp.float32)                                        # (8, 256)

    def sel(ho, rows):   # sel[ky, h, r] = 1 iff r == 2*h + ky  (stride-2 row gather)
        r = jnp.arange(rows)[None, None, :]
        hh = jnp.arange(ho)[None, :, None]
        kk = jnp.arange(3)[:, None, None]
        return (r == 2 * hh + kk).astype(jnp.bfloat16)

    return {"stem_t": stem_t, "t": t, "b": b,
            "sel2": sel(8, 18), "sel3": sel(4, 10)}


# --------------------------------------------------------------------------------------
# Pure-JAX f32 reference (same folded-BN inference math) for validation.
# --------------------------------------------------------------------------------------
def reference_forward(raw, x_nchw):
    x = jnp.transpose(x_nchw, (0, 2, 3, 1)).astype(jnp.float32)   # NHWC

    def conv3(x, w, stride):
        return jax.lax.conv_general_dilated(
            x, w, (stride, stride), ((1, 1), (1, 1)),
            dimension_numbers=("NHWC", "HWIO", "NHWC"))

    def bn(x, s, b):
        return x * s + b

    y = bn(conv3(x, raw["stem_w"], 1), raw["stem_s"], raw["stem_b"])
    y = jnp.where(y >= 0.0, y, 0.2 * y)                           # LeakyReLU(0.2)

    def block(x, p, stride):
        out = jnp.maximum(bn(conv3(x, p["w1"], stride), p["s1"], p["b1"]), 0.0)
        out = bn(conv3(out, p["w2"], 1), p["s2"], p["b2"])
        if "wd" in p:
            idn = jax.lax.conv_general_dilated(
                x, p["wd"][None, None], (stride, stride), "VALID",
                dimension_numbers=("NHWC", "HWIO", "NHWC"))
            idn = bn(idn, p["sd"], p["bd"])
        else:
            idn = x
        return jnp.maximum(out + idn, 0.0)

    y = block(y, raw["b1"], 1)
    y = block(y, raw["b2"], 2)
    y = block(y, raw["b3"], 2)
    return jnp.transpose(y, (0, 3, 1, 2))


if __name__ == "__main__":
    key = jax.random.PRNGKey(0)
    pkey, xkey = jax.random.split(key)
    raw = init_raw_params(pkey)
    packed = pack_params(raw)

    # Deterministic small input: batch=2, channels=3 (required by conv1), 16x16 spatial.
    x = jax.random.normal(xkey, (2, 3, 16, 16), dtype=jnp.float32)

    fwd = jax.jit(resnet_forward)
    out = fwd(packed, x)
    jax.block_until_ready(out)

    assert out.shape == (2, 64, 4, 4), out.shape
    assert bool(jnp.all(jnp.isfinite(out)))

    # bf16 MXU path vs f32 reference: loose tolerances expected (~1-2% relative).
    ref = reference_forward(raw, x)
    np.testing.assert_allclose(np.asarray(out), np.asarray(ref), rtol=0.1, atol=0.1)

    print("KERNEL_OK")
</pallas_src>

<mosaic_0001>
module attributes {stable_mosaic.version = 11 : i64} {
  func.func @_resnet_fused_kernel(%arg0: i32, %arg1: memref<1x18x48xbf16, #tpu.memory_space<vmem>>, %arg2: memref<3x48x256xbf16, #tpu.memory_space<vmem>>, %arg3: memref<20x256x256xbf16, #tpu.memory_space<vmem>>, %arg4: memref<8x256xf32, #tpu.memory_space<vmem>>, %arg5: memref<3x8x18xbf16, #tpu.memory_space<vmem>>, %arg6: memref<3x4x10xbf16, #tpu.memory_space<vmem>>, %arg7: memref<1x4x256xf32, #tpu.memory_space<vmem>>, %arg8: memref<18x256xbf16, #tpu.memory_space<vmem>>, %arg9: memref<18x256xbf16, #tpu.memory_space<vmem>>, %arg10: memref<18x256xbf16, #tpu.memory_space<vmem>>, %arg11: memref<10x256xbf16, #tpu.memory_space<vmem>>, %arg12: memref<10x256xbf16, #tpu.memory_space<vmem>>, %arg13: memref<6x256xbf16, #tpu.memory_space<vmem>>) attributes {dimension_semantics = [#tpu.dimension_semantics<parallel>], iteration_bounds = array<i64: 2>, scalar_prefetch = 0 : i64, scratch_operands = 6 : i64, tpu.core_type = #tpu.core_type<tc>, window_params = [{transform_indices = @transform_0, window_bounds = array<i64: 1, 18, 48>}, {pipeline_mode = #tpu.pipeline_mode<synchronous>, transform_indices = @transform_1, window_bounds = array<i64: 3, 48, 256>}, {pipeline_mode = #tpu.pipeline_mode<synchronous>, transform_indices = @transform_2, window_bounds = array<i64: 20, 256, 256>}, {pipeline_mode = #tpu.pipeline_mode<synchronous>, transform_indices = @transform_3, window_bounds = array<i64: 8, 256>}, {pipeline_mode = #tpu.pipeline_mode<synchronous>, transform_indices = @transform_4, window_bounds = array<i64: 3, 8, 18>}, {pipeline_mode = #tpu.pipeline_mode<synchronous>, transform_indices = @transform_5, window_bounds = array<i64: 3, 4, 10>}, {transform_indices = @transform_6, window_bounds = array<i64: 1, 4, 256>}]} {
    %cst = arith.constant 0.000000e+00 : bf16
    %0 = vector.broadcast %cst : bf16 to vector<18x256xbf16>
    %c0 = arith.constant 0 : index
    %c0_0 = arith.constant 0 : index
    %1 = vector.load %arg8[%c0, %c0_0] : memref<18x256xbf16, #tpu.memory_space<vmem>>, vector<18x256xbf16>
    tpu.vector_store %arg8[%c0, %c0_0], %0 {strides = array<i32>} : memref<18x256xbf16, #tpu.memory_space<vmem>>, vector<18x256xbf16>,
    %cst_1 = arith.constant 0.000000e+00 : bf16
    %2 = vector.broadcast %cst_1 : bf16 to vector<18x256xbf16>
    %c0_2 = arith.constant 0 : index
    %c0_3 = arith.constant 0 : index
    %3 = vector.load %arg9[%c0_2, %c0_3] : memref<18x256xbf16, #tpu.memory_space<vmem>>, vector<18x256xbf16>
    tpu.vector_store %arg9[%c0_2, %c0_3], %2 {strides = array<i32>} : memref<18x256xbf16, #tpu.memory_space<vmem>>, vector<18x256xbf16>,
    %cst_4 = arith.constant 0.000000e+00 : bf16
    %4 = vector.broadcast %cst_4 : bf16 to vector<18x256xbf16>
    %c0_5 = arith.constant 0 : index
    %c0_6 = arith.constant 0 : index
    %5 = vector.load %arg10[%c0_5, %c0_6] : memref<18x256xbf16, #tpu.memory_space<vmem>>, vector<18x256xbf16>
    tpu.vector_store %arg10[%c0_5, %c0_6], %4 {strides = array<i32>} : memref<18x256xbf16, #tpu.memory_space<vmem>>, vector<18x256xbf16>,
    %cst_7 = arith.constant 0.000000e+00 : bf16
    %6 = vector.broadcast %cst_7 : bf16 to vector<10x256xbf16>
    %c0_8 = arith.constant 0 : index
    %c0_9 = arith.constant 0 : index
    %7 = vector.load %arg11[%c0_8, %c0_9] : memref<10x256xbf16, #tpu.memory_space<vmem>>, vector<10x256xbf16>
    tpu.vector_store %arg11[%c0_8, %c0_9], %6 {strides = array<i32>} : memref<10x256xbf16, #tpu.memory_space<vmem>>, vector<10x256xbf16>,
    %cst_10 = arith.constant 0.000000e+00 : bf16
    %8 = vector.broadcast %cst_10 : bf16 to vector<10x256xbf16>
    %c0_11 = arith.constant 0 : index
    %c0_12 = arith.constant 0 : index
    %9 = vector.load %arg12[%c0_11, %c0_12] : memref<10x256xbf16, #tpu.memory_space<vmem>>, vector<10x256xbf16>
    tpu.vector_store %arg12[%c0_11, %c0_12], %8 {strides = array<i32>} : memref<10x256xbf16, #tpu.memory_space<vmem>>, vector<10x256xbf16>,
    %cst_13 = arith.constant 0.000000e+00 : bf16
    %10 = vector.broadcast %cst_13 : bf16 to vector<6x256xbf16>
    %c0_14 = arith.constant 0 : index
    %c0_15 = arith.constant 0 : index
    %11 = vector.load %arg13[%c0_14, %c0_15] : memref<6x256xbf16, #tpu.memory_space<vmem>>, vector<6x256xbf16>
    tpu.vector_store %arg13[%c0_14, %c0_15], %10 {strides = array<i32>} : memref<6x256xbf16, #tpu.memory_space<vmem>>, vector<6x256xbf16>,
    %cst_16 = arith.constant 0.000000e+00 : f32
    %12 = vector.broadcast %cst_16 : f32 to vector<16x256xf32>
    %c0_17 = arith.constant 0 : index
    %c0_18 = arith.constant 0 : index
    %c0_19 = arith.constant 0 : index
    %13 = vector.load %arg1[%c0_17, %c0_18, %c0_19] : memref<1x18x48xbf16, #tpu.memory_space<vmem>>, vector<1x16x48xbf16>
    %14 = vector.shape_cast %13 : vector<1x16x48xbf16> to vector<16x48xbf16>
    %c0_20 = arith.constant 0 : index
    %c0_21 = arith.constant 0 : index
    %c0_22 = arith.constant 0 : index
    %15 = vector.load %arg2[%c0_20, %c0_21, %c0_22] : memref<3x48x256xbf16, #tpu.memory_space<vmem>>, vector<1x48x256xbf16>
    %16 = vector.shape_cast %15 : vector<1x48x256xbf16> to vector<48x256xbf16>
    %cst_23 = arith.constant dense<0.000000e+00> : vector<16x256xf32>
    %17 = tpu.matmul %14, %16, %cst_23 {dimension_numbers = #tpu.dot_dimension_numbers<[1], [0], [0], [1], [0, 0, 1, 1], [], []>} : vector<16x48xbf16>, vector<48x256xbf16>, vector<16x256xf32> -> vector<16x256xf32>
    %18 = arith.addf %12, %17 : vector<16x256xf32>
    %c0_24 = arith.constant 0 : index
    %c1 = arith.constant 1 : index
    %c0_25 = arith.constant 0 : index
    %19 = vector.load %arg1[%c0_24, %c1, %c0_25] : memref<1x18x48xbf16, #tpu.memory_space<vmem>>, vector<1x16x48xbf16>
    %20 = vector.shape_cast %19 : vector<1x16x48xbf16> to vector<16x48xbf16>
    %c1_26 = arith.constant 1 : index
    %c0_27 = arith.constant 0 : index
    %c0_28 = arith.constant 0 : index
    %21 = vector.load %arg2[%c1_26, %c0_27, %c0_28] : memref<3x48x256xbf16, #tpu.memory_space<vmem>>, vector<1x48x256xbf16>
    %22 = vector.shape_cast %21 : vector<1x48x256xbf16> to vector<48x256xbf16>
    %cst_29 = arith.constant dense<0.000000e+00> : vector<16x256xf32>
    %23 = tpu.matmul %20, %22, %cst_29 {dimension_numbers = #tpu.dot_dimension_numbers<[1], [0], [0], [1], [0, 0, 1, 1], [], []>} : vector<16x48xbf16>, vector<48x256xbf16>, vector<16x256xf32> -> vector<16x256xf32>
    %24 = arith.addf %18, %23 : vector<16x256xf32>
    %c0_30 = arith.constant 0 : index
    %c2 = arith.constant 2 : index
    %c0_31 = arith.constant 0 : index
    %25 = vector.load %arg1[%c0_30, %c2, %c0_31] : memref<1x18x48xbf16, #tpu.memory_space<vmem>>, vector<1x16x48xbf16>
    %26 = vector.shape_cast %25 : vector<1x16x48xbf16> to vector<16x48xbf16>
    %c2_32 = arith.constant 2 : index
    %c0_33 = arith.constant 0 : index
    %c0_34 = arith.constant 0 : index
    %27 = vector.load %arg2[%c2_32, %c0_33, %c0_34] : memref<3x48x256xbf16, #tpu.memory_space<vmem>>, vector<1x48x256xbf16>
    %28 = vector.shape_cast %27 : vector<1x48x256xbf16> to vector<48x256xbf16>
    %cst_35 = arith.constant dense<0.000000e+00> : vector<16x256xf32>
    %29 = tpu.matmul %26, %28, %cst_35 {dimension_numbers = #tpu.dot_dimension_numbers<[1], [0], [0], [1], [0, 0, 1, 1], [], []>} : vector<16x48xbf16>, vector<48x256xbf16>, vector<16x256xf32> -> vector<16x256xf32>
    %30 = arith.addf %24, %29 : vector<16x256xf32>
    %c0_36 = arith.constant 0 : index
    %c0_37 = arith.constant 0 : index
    %31 = vector.load %arg4[%c0_36, %c0_37] : memref<8x256xf32, #tpu.memory_space<vmem>>, vector<1x256xf32>
    %32 = vector.broadcast %31 : vector<1x256xf32> to vector<16x256xf32>
    %33 = arith.addf %30, %32 : vector<16x256xf32>
    %cst_38 = arith.constant 0.000000e+00 : f32
    %34 = vector.broadcast %cst_38 : f32 to vector<16x256xf32>
    %35 = arith.cmpf oge, %33, %34 : vector<16x256xf32>
    %cst_39 = arith.constant 2.000000e-01 : f32
    %36 = vector.broadcast %cst_39 : f32 to vector<16x256xf32>
    %37 = arith.mulf %36, %33 : vector<16x256xf32>
    %38 = arith.select %35, %33, %37 : vector<16x256xi1>, vector<16x256xf32>
    %39 = arith.truncf %38 : vector<16x256xf32> to vector<16x256xbf16>
    %c1_40 = arith.constant 1 : index
    %c0_41 = arith.constant 0 : index
    %40 = vector.load %arg8[%c1_40, %c0_41] : memref<18x256xbf16, #tpu.memory_space<vmem>>, vector<16x256xbf16>
    tpu.vector_store %arg8[%c1_40, %c0_41], %39 {strides = array<i32>} : memref<18x256xbf16, #tpu.memory_space<vmem>>, vector<16x256xbf16>,
    %cst_42 = arith.constant 0.000000e+00 : f32
    %41 = vector.broadcast %cst_42 : f32 to vector<16x256xf32>
    %c0_43 = arith.constant 0 : index
    %c0_44 = arith.constant 0 : index
    %42 = vector.load %arg8[%c0_43, %c0_44] : memref<18x256xbf16, #tpu.memory_space<vmem>>, vector<16x256xbf16>
    %c0_45 = arith.constant 0 : index
    %c0_46 = arith.constant 0 : index
    %c0_47 = arith.constant 0 : index
    %43 = vector.load %arg3[%c0_45, %c0_46, %c0_47] : memref<20x256x256xbf16, #tpu.memory_space<vmem>>, vector<1x256x256xbf16>
    %44 = vector.shape_cast %43 : vector<1x256x256xbf16> to vector<256x256xbf16>
    %cst_48 = arith.constant dense<0.000000e+00> : vector<16x256xf32>
    %45 = tpu.matmul %42, %44, %cst_48 {dimension_numbers = #tpu.dot_dimension_numbers<[1], [0], [0], [1], [0, 0, 1, 1], [], []>} : vector<16x256xbf16>, vector<256x256xbf16>, vector<16x256xf32> -> vector<16x256xf32>
    %46 = arith.addf %41, %45 : vector<16x256xf32>
    %c1_49 = arith.constant 1 : index
    %c0_50 = arith.constant 0 : index
    %47 = vector.load %arg8[%c1_49, %c0_50] : memref<18x256xbf16, #tpu.memory_space<vmem>>, vector<16x256xbf16>
    %c1_51 = arith.constant 1 : index
    %c0_52 = arith.constant 0 : index
    %c0_53 = arith.constant 0 : index
    %48 = vector.load %arg3[%c1_51, %c0_52, %c0_53] : memref<20x256x256xbf16, #tpu.memory_space<vmem>>, vector<1x256x256xbf16>
    %49 = vector.shape_cast %48 : vector<1x256x256xbf16> to vector<256x256xbf16>
    %cst_54 = arith.constant dense<0.000000e+00> : vector<16x256xf32>
    %50 = tpu.matmul %47, %49, %cst_54 {dimension_numbers = #tpu.dot_dimension_numbers<[1], [0], [0], [1], [0, 0, 1, 1], [], []>} : vector<16x256xbf16>, vector<256x256xbf16>, vector<16x256xf32> -> vector<16x256xf32>
    %51 = arith.addf %46, %50 : vector<16x256xf32>
    %c2_55 = arith.constant 2 : index
    %c0_56 = arith.constant 0 : index
    %52 = vector.load %arg8[%c2_55, %c0_56] : memref<18x256xbf16, #tpu.memory_space<vmem>>, vector<16x256xbf16>
    %c2_57 = arith.constant 2 : index
    %c0_58 = arith.constant 0 : index
    %c0_59 = arith.constant 0 : index
    %53 = vector.load %arg3[%c2_57, %c0_58, %c0_59] : memref<20x256x256xbf16, #tpu.memory_space<vmem>>, vector<1x256x256xbf16>
    %54 = vector.shape_cast %53 : vector<1x256x256xbf16> to vector<256x256xbf16>
    %cst_60 = arith.constant dense<0.000000e+00> : vector<16x256xf32>
    %55 = tpu.matmul %52, %54, %cst_60 {dimension_numbers = #tpu.dot_dimension_numbers<[1], [0], [0], [1], [0, 0, 1, 1], [], []>} : vector<16x256xbf16>, vector<256x256xbf16>, vector<16x256xf32> -> vector<16x256xf32>
    %56 = arith.addf %51, %55 : vector<16x256xf32>
    %c1_61 = arith.constant 1 : index
    %c0_62 = arith.constant 0 : index
    %57 = vector.load %arg4[%c1_61, %c0_62] : memref<8x256xf32, #tpu.memory_space<vmem>>, vector<1x256xf32>
    %58 = vector.broadcast %57 : vector<1x256xf32> to vector<16x256xf32>
    %59 = arith.addf %56, %58 : vector<16x256xf32>
    %cst_63 = arith.constant 0.000000e+00 : f32
    %60 = vector.broadcast %cst_63 : f32 to vector<16x256xf32>
    %61 = arith.maximumf %59, %60 : vector<16x256xf32>
    %62 = arith.truncf %61 : vector<16x256xf32> to vector<16x256xbf16>
    %c1_64 = arith.constant 1 : index
    %c0_65 = arith.constant 0 : index
    %63 = vector.load %arg9[%c1_64, %c0_65] : memref<18x256xbf16, #tpu.memory_space<vmem>>, vector<16x256xbf16>
    tpu.vector_store %arg9[%c1_64, %c0_65], %62 {strides = array<i32>} : memref<18x256xbf16, #tpu.memory_space<vmem>>, vector<16x256xbf16>,
    %cst_66 = arith.constant 0.000000e+00 : f32
    %64 = vector.broadcast %cst_66 : f32 to vector<16x256xf32>
    %c0_67 = arith.constant 0 : index
    %c0_68 = arith.constant 0 : index
    %65 = vector.load %arg9[%c0_67, %c0_68] : memref<18x256xbf16, #tpu.memory_space<vmem>>, vector<16x256xbf16>
    %c3 = arith.constant 3 : index
    %c0_69 = arith.constant 0 : index
    %c0_70 = arith.constant 0 : index
    %66 = vector.load %arg3[%c3, %c0_69, %c0_70] : memref<20x256x256xbf16, #tpu.memory_space<vmem>>, vector<1x256x256xbf16>
    %67 = vector.shape_cast %66 : vector<1x256x256xbf16> to vector<256x256xbf16>
    %cst_71 = arith.constant dense<0.000000e+00> : vector<16x256xf32>
    %68 = tpu.matmul %65, %67, %cst_71 {dimension_numbers = #tpu.dot_dimension_numbers<[1], [0], [0], [1], [0, 0, 1, 1], [], []>} : vector<16x256xbf16>, vector<256x256xbf16>, vector<16x256xf32> -> vector<16x256xf32>
    %69 = arith.addf %64, %68 : vector<16x256xf32>
    %c1_72 = arith.constant 1 : index
    %c0_73 = arith.constant 0 : index
    %70 = vector.load %arg9[%c1_72, %c0_73] : memref<18x256xbf16, #tpu.memory_space<vmem>>, vector<16x256xbf16>
    %c4 = arith.constant 4 : index
    %c0_74 = arith.constant 0 : index
    %c0_75 = arith.constant 0 : index
    %71 = vector.load %arg3[%c4, %c0_74, %c0_75] : memref<20x256x256xbf16, #tpu.memory_space<vmem>>, vector<1x256x256xbf16>
    %72 = vector.shape_cast %71 : vector<1x256x256xbf16> to vector<256x256xbf16>
    %cst_76 = arith.constant dense<0.000000e+00> : vector<16x256xf32>
    %73 = tpu.matmul %70, %72, %cst_76 {dimension_numbers = #tpu.dot_dimension_numbers<[1], [0], [0], [1], [0, 0, 1, 1], [], []>} : vector<16x256xbf16>, vector<256x256xbf16>, vector<16x256xf32> -> vector<16x256xf32>
    %74 = arith.addf %69, %73 : vector<16x256xf32>
    %c2_77 = arith.constant 2 : index
    %c0_78 = arith.constant 0 : index
    %75 = vector.load %arg9[%c2_77, %c0_78] : memref<18x256xbf16, #tpu.memory_space<vmem>>, vector<16x256xbf16>
    %c5 = arith.constant 5 : index
    %c0_79 = arith.constant 0 : index
    %c0_80 = arith.constant 0 : index
    %76 = vector.load %arg3[%c5, %c0_79, %c0_80] : memref<20x256x256xbf16, #tpu.memory_space<vmem>>, vector<1x256x256xbf16>
    %77 = vector.shape_cast %76 : vector<1x256x256xbf16> to vector<256x256xbf16>
    %cst_81 = arith.constant dense<0.000000e+00> : vector<16x256xf32>
    %78 = tpu.matmul %75, %77, %cst_81 {dimension_numbers = #tpu.dot_dimension_numbers<[1], [0], [0], [1], [0, 0, 1, 1], [], []>} : vector<16x256xbf16>, vector<256x256xbf16>, vector<16x256xf32> -> vector<16x256xf32>
    %79 = arith.addf %74, %78 : vector<16x256xf32>
    %c2_82 = arith.constant 2 : index
    %c0_83 = arith.constant 0 : index
    %80 = vector.load %arg4[%c2_82, %c0_83] : memref<8x256xf32, #tpu.memory_space<vmem>>, vector<1x256xf32>
    %81 = vector.broadcast %80 : vector<1x256xf32> to vector<16x256xf32>
    %82 = arith.addf %79, %81 : vector<16x256xf32>
    %c1_84 = arith.constant 1 : index
    %c0_85 = arith.constant 0 : index
    %83 = vector.load %arg8[%c1_84, %c0_85] : memref<18x256xbf16, #tpu.memory_space<vmem>>, vector<16x256xbf16>
    %84 = arith.extf %83 : vector<16x256xbf16> to vector<16x256xf32>
    %85 = arith.addf %82, %84 : vector<16x256xf32>
    %cst_86 = arith.constant 0.000000e+00 : f32
    %86 = vector.broadcast %cst_86 : f32 to vector<16x256xf32>
    %87 = arith.maximumf %85, %86 : vector<16x256xf32>
    %88 = arith.truncf %87 : vector<16x256xf32> to vector<16x256xbf16>
    %c1_87 = arith.constant 1 : index
    %c0_88 = arith.constant 0 : index
    %89 = vector.load %arg10[%c1_87, %c0_88] : memref<18x256xbf16, #tpu.memory_space<vmem>>, vector<16x256xbf16>
    tpu.vector_store %arg10[%c1_87, %c0_88], %88 {strides = array<i32>} : memref<18x256xbf16, #tpu.memory_space<vmem>>, vector<16x256xbf16>,
    %c0_89 = arith.constant 0 : index
    %c0_90 = arith.constant 0 : index
    %90 = vector.load %arg10[%c0_89, %c0_90] : memref<18x256xbf16, #tpu.memory_space<vmem>>, vector<18x256xbf16>
    %cst_91 = arith.constant 0.000000e+00 : f32
    %91 = vector.broadcast %cst_91 : f32 to vector<8x256xf32>
    %c0_92 = arith.constant 0 : index
    %c0_93 = arith.constant 0 : index
    %c0_94 = arith.constant 0 : index
    %92 = vector.load %arg5[%c0_92, %c0_93, %c0_94] : memref<3x8x18xbf16, #tpu.memory_space<vmem>>, vector<1x8x18xbf16>
    %93 = vector.shape_cast %92 : vector<1x8x18xbf16> to vector<8x18xbf16>
    %cst_95 = arith.constant dense<0.000000e+00> : vector<8x256xf32>
    %94 = tpu.matmul %93, %90, %cst_95 {dimension_numbers = #tpu.dot_dimension_numbers<[1], [0], [0], [1], [0, 0, 1, 1], [], []>} : vector<8x18xbf16>, vector<18x256xbf16>, vector<8x256xf32> -> vector<8x256xf32>
    %95 = arith.truncf %94 : vector<8x256xf32> to vector<8x256xbf16>
    %c6 = arith.constant 6 : index
    %c0_96 = arith.constant 0 : index
    %c0_97 = arith.constant 0 : index
    %96 = vector.load %arg3[%c6, %c0_96, %c0_97] : memref<20x256x256xbf16, #tpu.memory_space<vmem>>, vector<1x256x256xbf16>
    %97 = vector.shape_cast %96 : vector<1x256x256xbf16> to vector<256x256xbf16>
    %cst_98 = arith.constant dense<0.000000e+00> : vector<8x256xf32>
    %98 = tpu.matmul %95, %97, %cst_98 {dimension_numbers = #tpu.dot_dimension_numbers<[1], [0], [0], [1], [0, 0, 1, 1], [], []>} : vector<8x256xbf16>, vector<256x256xbf16>, vector<8x256xf32> -> vector<8x256xf32>
    %99 = arith.addf %91, %98 : vector<8x256xf32>
    %c1_99 = arith.constant 1 : index
    %c0_100 = arith.constant 0 : index
    %c0_101 = arith.constant 0 : index
    %100 = vector.load %arg5[%c1_99, %c0_100, %c0_101] : memref<3x8x18xbf16, #tpu.memory_space<vmem>>, vector<1x8x18xbf16>
    %101 = vector.shape_cast %100 : vector<1x8x18xbf16> to vector<8x18xbf16>
    %cst_102 = arith.constant dense<0.000000e+00> : vector<8x256xf32>
    %102 = tpu.matmul %101, %90, %cst_102 {dimension_numbers = #tpu.dot_dimension_numbers<[1], [0], [0], [1], [0, 0, 1, 1], [], []>} : vector<8x18xbf16>, vector<18x256xbf16>, vector<8x256xf32> -> vector<8x256xf32>
    %103 = arith.truncf %102 : vector<8x256xf32> to vector<8x256xbf16>
    %c7 = arith.constant 7 : index
    %c0_103 = arith.constant 0 : index
    %c0_104 = arith.constant 0 : index
    %104 = vector.load %arg3[%c7, %c0_103, %c0_104] : memref<20x256x256xbf16, #tpu.memory_space<vmem>>, vector<1x256x256xbf16>
    %105 = vector.shape_cast %104 : vector<1x256x256xbf16> to vector<256x256xbf16>
    %cst_105 = arith.constant dense<0.000000e+00> : vector<8x256xf32>
    %106 = tpu.matmul %103, %105, %cst_105 {dimension_numbers = #tpu.dot_dimension_numbers<[1], [0], [0], [1], [0, 0, 1, 1], [], []>} : vector<8x256xbf16>, vector<256x256xbf16>, vector<8x256xf32> -> vector<8x256xf32>
    %107 = arith.addf %99, %106 : vector<8x256xf32>
    %c2_106 = arith.constant 2 : index
    %c0_107 = arith.constant 0 : index
    %c0_108 = arith.constant 0 : index
    %108 = vector.load %arg5[%c2_106, %c0_107, %c0_108] : memref<3x8x18xbf16, #tpu.memory_space<vmem>>, vector<1x8x18xbf16>
    %109 = vector.shape_cast %108 : vector<1x8x18xbf16> to vector<8x18xbf16>
    %cst_109 = arith.constant dense<0.000000e+00> : vector<8x256xf32>
    %110 = tpu.matmul %109, %90, %cst_109 {dimension_numbers = #tpu.dot_dimension_numbers<[1], [0], [0], [1], [0, 0, 1, 1], [], []>} : vector<8x18xbf16>, vector<18x256xbf16>, vector<8x256xf32> -> vector<8x256xf32>
    %111 = arith.truncf %110 : vector<8x256xf32> to vector<8x256xbf16>
    %c8 = arith.constant 8 : index
    %c0_110 = arith.constant 0 : index
    %c0_111 = arith.constant 0 : index
    %112 = vector.load %arg3[%c8, %c0_110, %c0_111] : memref<20x256x256xbf16, #tpu.memory_space<vmem>>, vector<1x256x256xbf16>
    %113 = vector.shape_cast %112 : vector<1x256x256xbf16> to vector<256x256xbf16>
    %cst_112 = arith.constant dense<0.000000e+00> : vector<8x256xf32>
    %114 = tpu.matmul %111, %113, %cst_112 {dimension_numbers = #tpu.dot_dimension_numbers<[1], [0], [0], [1], [0, 0, 1, 1], [], []>} : vector<8x256xbf16>, vector<256x256xbf16>, vector<8x256xf32> -> vector<8x256xf32>
    %115 = arith.addf %107, %114 : vector<8x256xf32>
    %c3_113 = arith.constant 3 : index
    %c0_114 = arith.constant 0 : index
    %116 = vector.load %arg4[%c3_113, %c0_114] : memref<8x256xf32, #tpu.memory_space<vmem>>, vector<1x256xf32>
    %117 = vector.broadcast %116 : vector<1x256xf32> to vector<8x256xf32>
    %118 = arith.addf %115, %117 : vector<8x256xf32>
    %cst_115 = arith.constant 0.000000e+00 : f32
    %119 = vector.broadcast %cst_115 : f32 to vector<8x256xf32>
    %120 = arith.maximumf %118, %119 : vector<8x256xf32>
    %121 = arith.truncf %120 : vector<8x256xf32> to vector<8x256xbf16>
    %c1_116 = arith.constant 1 : index
    %c0_117 = arith.constant 0 : index
    %122 = vector.load %arg11[%c1_116, %c0_117] : memref<10x256xbf16, #tpu.memory_space<vmem>>, vector<8x256xbf16>
    tpu.vector_store %arg11[%c1_116, %c0_117], %121 {strides = array<i32>} : memref<10x256xbf16, #tpu.memory_space<vmem>>, vector<8x256xbf16>,
    %c18 = arith.constant 18 : index
    %c0_118 = arith.constant 0 : index
    %c0_119 = arith.constant 0 : index
    %123 = vector.load %arg3[%c18, %c0_118, %c0_119] : memref<20x256x256xbf16, #tpu.memory_space<vmem>>, vector<1x256x256xbf16>
    %124 = vector.shape_cast %123 : vector<1x256x256xbf16> to vector<256x256xbf16>
    %cst_120 = arith.constant dense<0.000000e+00> : vector<8x256xf32>
    %125 = tpu.matmul %103, %124, %cst_120 {dimension_numbers = #tpu.dot_dimension_numbers<[1], [0], [0], [1], [0, 0, 1, 1], [], []>} : vector<8x256xbf16>, vector<256x256xbf16>, vector<8x256xf32> -> vector<8x256xf32>
    %cst_121 = arith.constant 0.000000e+00 : f32
    %126 = vector.broadcast %cst_121 : f32 to vector<8x256xf32>
    %c0_122 = arith.constant 0 : index
    %c0_123 = arith.constant 0 : index
    %127 = vector.load %arg11[%c0_122, %c0_123] : memref<10x256xbf16, #tpu.memory_space<vmem>>, vector<8x256xbf16>
    %c9 = arith.constant 9 : index
    %c0_124 = arith.constant 0 : index
    %c0_125 = arith.constant 0 : index
    %128 = vector.load %arg3[%c9, %c0_124, %c0_125] : memref<20x256x256xbf16, #tpu.memory_space<vmem>>, vector<1x256x256xbf16>
    %129 = vector.shape_cast %128 : vector<1x256x256xbf16> to vector<256x256xbf16>
    %cst_126 = arith.constant dense<0.000000e+00> : vector<8x256xf32>
    %130 = tpu.matmul %127, %129, %cst_126 {dimension_numbers = #tpu.dot_dimension_numbers<[1], [0], [0], [1], [0, 0, 1, 1], [], []>} : vector<8x256xbf16>, vector<256x256xbf16>, vector<8x256xf32> -> vector<8x256xf32>
    %131 = arith.addf %126, %130 : vector<8x256xf32>
    %c1_127 = arith.constant 1 : index
    %c0_128 = arith.constant 0 : index
    %132 = vector.load %arg11[%c1_127, %c0_128] : memref<10x256xbf16, #tpu.memory_space<vmem>>, vector<8x256xbf16>
    %c10 = arith.constant 10 : index
    %c0_129 = arith.constant 0 : index
    %c0_130 = arith.constant 0 : index
    %133 = vector.load %arg3[%c10, %c0_129, %c0_130] : memref<20x256x256xbf16, #tpu.memory_space<vmem>>, vector<1x256x256xbf16>
    %134 = vector.shape_cast %133 : vector<1x256x256xbf16> to vector<256x256xbf16>
    %cst_131 = arith.constant dense<0.000000e+00> : vector<8x256xf32>
    %135 = tpu.matmul %132, %134, %cst_131 {dimension_numbers = #tpu.dot_dimension_numbers<[1], [0], [0], [1], [0, 0, 1, 1], [], []>} : vector<8x256xbf16>, vector<256x256xbf16>, vector<8x256xf32> -> vector<8x256xf32>
    %136 = arith.addf %131, %135 : vector<8x256xf32>
    %c2_132 = arith.constant 2 : index
    %c0_133 = arith.constant 0 : index
    %137 = vector.load %arg11[%c2_132, %c0_133] : memref<10x256xbf16, #tpu.memory_space<vmem>>, vector<8x256xbf16>
    %c11 = arith.constant 11 : index
    %c0_134 = arith.constant 0 : index
    %c0_135 = arith.constant 0 : index
    %138 = vector.load %arg3[%c11, %c0_134, %c0_135] : memref<20x256x256xbf16, #tpu.memory_space<vmem>>, vector<1x256x256xbf16>
    %139 = vector.shape_cast %138 : vector<1x256x256xbf16> to vector<256x256xbf16>
    %cst_136 = arith.constant dense<0.000000e+00> : vector<8x256xf32>
    %140 = tpu.matmul %137, %139, %cst_136 {dimension_numbers = #tpu.dot_dimension_numbers<[1], [0], [0], [1], [0, 0, 1, 1], [], []>} : vector<8x256xbf16>, vector<256x256xbf16>, vector<8x256xf32> -> vector<8x256xf32>
    %141 = arith.addf %136, %140 : vector<8x256xf32>
    %c4_137 = arith.constant 4 : index
    %c0_138 = arith.constant 0 : index
    %142 = vector.load %arg4[%c4_137, %c0_138] : memref<8x256xf32, #tpu.memory_space<vmem>>, vector<1x256xf32>
    %143 = vector.broadcast %142 : vector<1x256xf32> to vector<8x256xf32>
    %144 = arith.addf %141, %143 : vector<8x256xf32>
    %145 = arith.addf %144, %125 : vector<8x256xf32>
    %cst_139 = arith.constant 0.000000e+00 : f32
    %146 = vector.broadcast %cst_139 : f32 to vector<8x256xf32>
    %147 = arith.maximumf %145, %146 : vector<8x256xf32>
    %148 = arith.truncf %147 : vector<8x256xf32> to vector<8x256xbf16>
    %c1_140 = arith.constant 1 : index
    %c0_141 = arith.constant 0 : index
    %149 = vector.load %arg12[%c1_140, %c0_141] : memref<10x256xbf16, #tpu.memory_space<vmem>>, vector<8x256xbf16>
    tpu.vector_store %arg12[%c1_140, %c0_141], %148 {strides = array<i32>} : memref<10x256xbf16, #tpu.memory_space<vmem>>, vector<8x256xbf16>,
    %c0_142 = arith.constant 0 : index
    %c0_143 = arith.constant 0 : index
    %150 = vector.load %arg12[%c0_142, %c0_143] : memref<10x256xbf16, #tpu.memory_space<vmem>>, vector<10x256xbf16>
    %cst_144 = arith.constant 0.000000e+00 : f32
    %151 = vector.broadcast %cst_144 : f32 to vector<4x256xf32>
    %c0_145 = arith.constant 0 : index
    %c0_146 = arith.constant 0 : index
    %c0_147 = arith.constant 0 : index
    %152 = vector.load %arg6[%c0_145, %c0_146, %c0_147] : memref<3x4x10xbf16, #tpu.memory_space<vmem>>, vector<1x4x10xbf16>
    %153 = vector.shape_cast %152 : vector<1x4x10xbf16> to vector<4x10xbf16>
    %cst_148 = arith.constant dense<0.000000e+00> : vector<4x256xf32>
    %154 = tpu.matmul %153, %150, %cst_148 {dimension_numbers = #tpu.dot_dimension_numbers<[1], [0], [0], [1], [0, 0, 1, 1], [], []>} : vector<4x10xbf16>, vector<10x256xbf16>, vector<4x256xf32> -> vector<4x256xf32>
    %155 = arith.truncf %154 : vector<4x256xf32> to vector<4x256xbf16>
    %c12 = arith.constant 12 : index
    %c0_149 = arith.constant 0 : index
    %c0_150 = arith.constant 0 : index
    %156 = vector.load %arg3[%c12, %c0_149, %c0_150] : memref<20x256x256xbf16, #tpu.memory_space<vmem>>, vector<1x256x256xbf16>
    %157 = vector.shape_cast %156 : vector<1x256x256xbf16> to vector<256x256xbf16>
    %cst_151 = arith.constant dense<0.000000e+00> : vector<4x256xf32>
    %158 = tpu.matmul %155, %157, %cst_151 {dimension_numbers = #tpu.dot_dimension_numbers<[1], [0], [0], [1], [0, 0, 1, 1], [], []>} : vector<4x256xbf16>, vector<256x256xbf16>, vector<4x256xf32> -> vector<4x256xf32>
    %159 = arith.addf %151, %158 : vector<4x256xf32>
    %c1_152 = arith.constant 1 : index
    %c0_153 = arith.constant 0 : index
    %c0_154 = arith.constant 0 : index
    %160 = vector.load %arg6[%c1_152, %c0_153, %c0_154] : memref<3x4x10xbf16, #tpu.memory_space<vmem>>, vector<1x4x10xbf16>
    %161 = vector.shape_cast %160 : vector<1x4x10xbf16> to vector<4x10xbf16>
    %cst_155 = arith.constant dense<0.000000e+00> : vector<4x256xf32>
    %162 = tpu.matmul %161, %150, %cst_155 {dimension_numbers = #tpu.dot_dimension_numbers<[1], [0], [0], [1], [0, 0, 1, 1], [], []>} : vector<4x10xbf16>, vector<10x256xbf16>, vector<4x256xf32> -> vector<4x256xf32>
    %163 = arith.truncf %162 : vector<4x256xf32> to vector<4x256xbf16>
    %c13 = arith.constant 13 : index
    %c0_156 = arith.constant 0 : index
    %c0_157 = arith.constant 0 : index
    %164 = vector.load %arg3[%c13, %c0_156, %c0_157] : memref<20x256x256xbf16, #tpu.memory_space<vmem>>, vector<1x256x256xbf16>
    %165 = vector.shape_cast %164 : vector<1x256x256xbf16> to vector<256x256xbf16>
    %cst_158 = arith.constant dense<0.000000e+00> : vector<4x256xf32>
    %166 = tpu.matmul %163, %165, %cst_158 {dimension_numbers = #tpu.dot_dimension_numbers<[1], [0], [0], [1], [0, 0, 1, 1], [], []>} : vector<4x256xbf16>, vector<256x256xbf16>, vector<4x256xf32> -> vector<4x256xf32>
    %167 = arith.addf %159, %166 : vector<4x256xf32>
    %c2_159 = arith.constant 2 : index
    %c0_160 = arith.constant 0 : index
    %c0_161 = arith.constant 0 : index
    %168 = vector.load %arg6[%c2_159, %c0_160, %c0_161] : memref<3x4x10xbf16, #tpu.memory_space<vmem>>, vector<1x4x10xbf16>
    %169 = vector.shape_cast %168 : vector<1x4x10xbf16> to vector<4x10xbf16>
    %cst_162 = arith.constant dense<0.000000e+00> : vector<4x256xf32>
    %170 = tpu.matmul %169, %150, %cst_162 {dimension_numbers = #tpu.dot_dimension_numbers<[1], [0], [0], [1], [0, 0, 1, 1], [], []>} : vector<4x10xbf16>, vector<10x256xbf16>, vector<4x256xf32> -> vector<4x256xf32>
    %171 = arith.truncf %170 : vector<4x256xf32> to vector<4x256xbf16>
    %c14 = arith.constant 14 : index
    %c0_163 = arith.constant 0 : index
    %c0_164 = arith.constant 0 : index
    %172 = vector.load %arg3[%c14, %c0_163, %c0_164] : memref<20x256x256xbf16, #tpu.memory_space<vmem>>, vector<1x256x256xbf16>
    %173 = vector.shape_cast %172 : vector<1x256x256xbf16> to vector<256x256xbf16>
    %cst_165 = arith.constant dense<0.000000e+00> : vector<4x256xf32>
    %174 = tpu.matmul %171, %173, %cst_165 {dimension_numbers = #tpu.dot_dimension_numbers<[1], [0], [0], [1], [0, 0, 1, 1], [], []>} : vector<4x256xbf16>, vector<256x256xbf16>, vector<4x256xf32> -> vector<4x256xf32>
    %175 = arith.addf %167, %174 : vector<4x256xf32>
    %c5_166 = arith.constant 5 : index
    %c0_167 = arith.constant 0 : index
    %176 = vector.load %arg4[%c5_166, %c0_167] : memref<8x256xf32, #tpu.memory_space<vmem>>, vector<1x256xf32>
    %177 = vector.broadcast %176 : vector<1x256xf32> to vector<4x256xf32>
    %178 = arith.addf %175, %177 : vector<4x256xf32>
    %cst_168 = arith.constant 0.000000e+00 : f32
    %179 = vector.broadcast %cst_168 : f32 to vector<4x256xf32>
    %180 = arith.maximumf %178, %179 : vector<4x256xf32>
    %181 = arith.truncf %180 : vector<4x256xf32> to vector<4x256xbf16>
    %c1_169 = arith.constant 1 : index
    %c0_170 = arith.constant 0 : index
    %182 = vector.load %arg13[%c1_169, %c0_170] : memref<6x256xbf16, #tpu.memory_space<vmem>>, vector<4x256xbf16>
    tpu.vector_store %arg13[%c1_169, %c0_170], %181 {strides = array<i32>} : memref<6x256xbf16, #tpu.memory_space<vmem>>, vector<4x256xbf16>,
    %c19 = arith.constant 19 : index
    %c0_171 = arith.constant 0 : index
    %c0_172 = arith.constant 0 : index
    %183 = vector.load %arg3[%c19, %c0_171, %c0_172] : memref<20x256x256xbf16, #tpu.memory_space<vmem>>, vector<1x256x256xbf16>
    %184 = vector.shape_cast %183 : vector<1x256x256xbf16> to vector<256x256xbf16>
    %cst_173 = arith.constant dense<0.000000e+00> : vector<4x256xf32>
    %185 = tpu.matmul %163, %184, %cst_173 {dimension_numbers = #tpu.dot_dimension_numbers<[1], [0], [0], [1], [0, 0, 1, 1], [], []>} : vector<4x256xbf16>, vector<256x256xbf16>, vector<4x256xf32> -> vector<4x256xf32>
    %cst_174 = arith.constant 0.000000e+00 : f32
    %186 = vector.broadcast %cst_174 : f32 to vector<4x256xf32>
    %c0_175 = arith.constant 0 : index
    %c0_176 = arith.constant 0 : index
    %187 = vector.load %arg13[%c0_175, %c0_176] : memref<6x256xbf16, #tpu.memory_space<vmem>>, vector<4x256xbf16>
    %c15 = arith.constant 15 : index
    %c0_177 = arith.constant 0 : index
    %c0_178 = arith.constant 0 : index
    %188 = vector.load %arg3[%c15, %c0_177, %c0_178] : memref<20x256x256xbf16, #tpu.memory_space<vmem>>, vector<1x256x256xbf16>
    %189 = vector.shape_cast %188 : vector<1x256x256xbf16> to vector<256x256xbf16>
    %cst_179 = arith.constant dense<0.000000e+00> : vector<4x256xf32>
    %190 = tpu.matmul %187, %189, %cst_179 {dimension_numbers = #tpu.dot_dimension_numbers<[1], [0], [0], [1], [0, 0, 1, 1], [], []>} : vector<4x256xbf16>, vector<256x256xbf16>, vector<4x256xf32> -> vector<4x256xf32>
    %191 = arith.addf %186, %190 : vector<4x256xf32>
    %c1_180 = arith.constant 1 : index
    %c0_181 = arith.constant 0 : index
    %192 = vector.load %arg13[%c1_180, %c0_181] : memref<6x256xbf16, #tpu.memory_space<vmem>>, vector<4x256xbf16>
    %c16 = arith.constant 16 : index
    %c0_182 = arith.constant 0 : index
    %c0_183 = arith.constant 0 : index
    %193 = vector.load %arg3[%c16, %c0_182, %c0_183] : memref<20x256x256xbf16, #tpu.memory_space<vmem>>, vector<1x256x256xbf16>
    %194 = vector.shape_cast %193 : vector<1x256x256xbf16> to vector<256x256xbf16>
    %cst_184 = arith.constant dense<0.000000e+00> : vector<4x256xf32>
    %195 = tpu.matmul %192, %194, %cst_184 {dimension_numbers = #tpu.dot_dimension_numbers<[1], [0], [0], [1], [0, 0, 1, 1], [], []>} : vector<4x256xbf16>, vector<256x256xbf16>, vector<4x256xf32> -> vector<4x256xf32>
    %196 = arith.addf %191, %195 : vector<4x256xf32>
    %c2_185 = arith.constant 2 : index
    %c0_186 = arith.constant 0 : index
    %197 = vector.load %arg13[%c2_185, %c0_186] : memref<6x256xbf16, #tpu.memory_space<vmem>>, vector<4x256xbf16>
    %c17 = arith.constant 17 : index
    %c0_187 = arith.constant 0 : index
    %c0_188 = arith.constant 0 : index
    %198 = vector.load %arg3[%c17, %c0_187, %c0_188] : memref<20x256x256xbf16, #tpu.memory_space<vmem>>, vector<1x256x256xbf16>
    %199 = vector.shape_cast %198 : vector<1x256x256xbf16> to vector<256x256xbf16>
    %cst_189 = arith.constant dense<0.000000e+00> : vector<4x256xf32>
    %200 = tpu.matmul %197, %199, %cst_189 {dimension_numbers = #tpu.dot_dimension_numbers<[1], [0], [0], [1], [0, 0, 1, 1], [], []>} : vector<4x256xbf16>, vector<256x256xbf16>, vector<4x256xf32> -> vector<4x256xf32>
    %201 = arith.addf %196, %200 : vector<4x256xf32>
    %c6_190 = arith.constant 6 : index
    %c0_191 = arith.constant 0 : index
    %202 = vector.load %arg4[%c6_190, %c0_191] : memref<8x256xf32, #tpu.memory_space<vmem>>, vector<1x256xf32>
    %203 = vector.broadcast %202 : vector<1x256xf32> to vector<4x256xf32>
    %204 = arith.addf %201, %203 : vector<4x256xf32>
    %205 = arith.addf %204, %185 : vector<4x256xf32>
    %cst_192 = arith.constant 0.000000e+00 : f32
    %206 = vector.broadcast %cst_192 : f32 to vector<4x256xf32>
    %207 = arith.maximumf %205, %206 : vector<4x256xf32>
    %c0_193 = arith.constant 0 : index
    %c0_194 = arith.constant 0 : index
    %c0_195 = arith.constant 0 : index
    %208 = vector.load %arg7[%c0_193, %c0_194, %c0_195] : memref<1x4x256xf32, #tpu.memory_space<vmem>>, vector<1x4x256xf32>
    %209 = vector.shape_cast %208 : vector<1x4x256xf32> to vector<4x256xf32>
    %210 = vector.shape_cast %207 : vector<4x256xf32> to vector<1x4x256xf32>
    tpu.vector_store %arg7[%c0_193, %c0_194, %c0_195], %210 {strides = array<i32>} : memref<1x4x256xf32, #tpu.memory_space<vmem>>, vector<1x4x256xf32>,
    return
  }
  func.func @transform_0(%arg0: i32) -> (i32, i32, i32) {
    %c0_i32 = arith.constant 0 : i32
    %c0_i32_0 = arith.constant 0 : i32
    %c0_i32_1 = arith.constant 0 : i32
    return %arg0, %c0_i32, %c0_i32_0 : i32, i32, i32
  }
  func.func @transform_1(%arg0: i32) -> (i32, i32, i32) {
    %c0_i32 = arith.constant 0 : i32
    %c0_i32_0 = arith.constant 0 : i32
    %c0_i32_1 = arith.constant 0 : i32
    %c0_i32_2 = arith.constant 0 : i32
    return %c0_i32, %c0_i32_0, %c0_i32_1 : i32, i32, i32
  }
  func.func @transform_2(%arg0: i32) -> (i32, i32, i32) {
    %c0_i32 = arith.constant 0 : i32
    %c0_i32_0 = arith.constant 0 : i32
    %c0_i32_1 = arith.constant 0 : i32
    %c0_i32_2 = arith.constant 0 : i32
    return %c0_i32, %c0_i32_0, %c0_i32_1 : i32, i32, i32
  }
  func.func @transform_3(%arg0: i32) -> (i32, i32) {
    %c0_i32 = arith.constant 0 : i32
    %c0_i32_0 = arith.constant 0 : i32
    %c0_i32_1 = arith.constant 0 : i32
    return %c0_i32, %c0_i32_0 : i32, i32
  }
  func.func @transform_4(%arg0: i32) -> (i32, i32, i32) {
    %c0_i32 = arith.constant 0 : i32
    %c0_i32_0 = arith.constant 0 : i32
    %c0_i32_1 = arith.constant 0 : i32
    %c0_i32_2 = arith.constant 0 : i32
    return %c0_i32, %c0_i32_0, %c0_i32_1 : i32, i32, i32
  }
  func.func @transform_5(%arg0: i32) -> (i32, i32, i32) {
    %c0_i32 = arith.constant 0 : i32
    %c0_i32_0 = arith.constant 0 : i32
    %c0_i32_1 = arith.constant 0 : i32
    %c0_i32_2 = arith.constant 0 : i32
    return %c0_i32, %c0_i32_0, %c0_i32_1 : i32, i32, i32
  }
  func.func @transform_6(%arg0: i32) -> (i32, i32, i32) {
    %c0_i32 = arith.constant 0 : i32
    %c0_i32_0 = arith.constant 0 : i32
    %c0_i32_1 = arith.constant 0 : i32
    return %arg0, %c0_i32, %c0_i32_0 : i32, i32, i32
  }
}

</mosaic_0001>

<llo_original>
// kernel: resnet_forward.1
$region0: #{resnet_forward.1}
  #allocation0 [shape = 'u32[]', space=smem, size = 0x4, offset = 0x4, fixed_abs, tag = 'smem constant byte address 0x4 - core index']
  #allocation1 [shape = 'u32[144,128]{1,0:T(1,128)}', space=vmem, size = 0x12000, scoped, tag = 'internal scratch']
  #allocation2 [shape = 'bf16[18,256]{1,0:T(8,128)(2,1)}', space=vmem, size = 0x3000, scoped, tag = 'scratch operand']
  #allocation3 [shape = 'bf16[18,256]{1,0:T(8,128)(2,1)}', space=vmem, size = 0x3000, scoped, tag = 'scratch operand']
  #allocation4 [shape = 'bf16[18,256]{1,0:T(8,128)(2,1)}', space=vmem, size = 0x3000, scoped, tag = 'scratch operand']
  #allocation5 [shape = 'bf16[10,256]{1,0:T(8,128)(2,1)}', space=vmem, size = 0x2000, scoped, tag = 'scratch operand']
  #allocation6 [shape = 'bf16[10,256]{1,0:T(8,128)(2,1)}', space=vmem, size = 0x2000, scoped, tag = 'scratch operand']
  #allocation7 [shape = 'bf16[6,256]{1,0:T(8,128)(2,1)}', space=vmem, size = 0x1000, scoped, tag = 'scratch operand']
  %s0 = inlined_call_operand.vmem [shape: bf16[2,18,48], index: 0, kind: input, shape index: {}]
  %s1 = inlined_call_operand.hbm [shape: bf16[3,48,256], index: 1, kind: input, shape index: {}]
  %s2 = inlined_call_operand.hbm [shape: bf16[20,256,256], index: 2, kind: input, shape index: {}]
  %s3 = inlined_call_operand.hbm [shape: f32[8,256], index: 3, kind: input, shape index: {}]
  %s4 = inlined_call_operand.hbm [shape: bf16[3,8,18], index: 4, kind: input, shape index: {}]
  %s5 = inlined_call_operand.hbm [shape: bf16[3,4,10], index: 5, kind: input, shape index: {}]
  %s6 = inlined_call_operand.vmem [shape: f32[2,4,256], index: 6, kind: output, shape index: {}]
  %s7 = sld [smem:[#allocation0]]
  $region77: #{resnet_forward.1} parent=0
    _
  %s9 = ssub.s32 1, %s7
  %s10 = scalar_select 0, %s9, %s7
  $region1: #{resnet_forward.1} parent=0
    #allocation8 [shape = 'u8[73728]{0}', space=vmem, size = 0x12000, scoped, tag = 'input window, operand 1, single buffered']
    #allocation9 [shape = 's32[2]{0}', space=sflag, size = 0x8, scoped, tag = 'scoped memory for resnet_forward.1']
    #allocation10 [shape = 'u8[2621440]{0}', space=vmem, size = 0x280000, scoped, tag = 'input window, operand 2, single buffered']
    #allocation11 [shape = 's32[1]{0}', space=sflag, size = 0x4, scoped, tag = 'scoped memory for resnet_forward.1']
    #allocation12 [shape = 'u8[8192]{0}', space=vmem, size = 0x2000, scoped, tag = 'input window, operand 3, single buffered']
    #allocation13 [shape = 'u8[6144]{0}', space=vmem, size = 0x1800, scoped, tag = 'input window, operand 4, single buffered']
    #allocation14 [shape = 's32[1]{0}', space=sflag, size = 0x4, scoped, tag = 'scoped memory for resnet_forward.1']
    #allocation15 [shape = 'u8[3072]{0}', space=vmem, size = 0xc00, scoped, tag = 'input window, operand 5, single buffered']
    %11 = vsyncpa [#allocation9], 0
    %12 = vsyncpa [#allocation11], 0
    %13 = vsyncpa [#allocation14], 0
    loop: start=0, step=1, limit=4
    $region2: #{resnet_forward.1} parent=1 // loop_pre_header
      _
    $region3: #{resnet_forward.1} parent=1 // loop_header
      %s15 = sphi 0, %s19
      %p16 = scmp.ge.s32.totalorder %s15, 4
      %s25 = sphi 0, %s27
      %s28 = sphi 0, %s25
      %s29 = sphi 0, %s28
      %s45 = sphi 0, %s29
      %s49 = sphi 0, %s49
      %s51 = sphi 0, %s49
      %s52 = sphi 0, %s51
      %s66 = sphi 0, %s52
      %s70 = sphi 0, %s70
      %s72 = sphi 0, %s70
      %s73 = sphi 0, %s72
      %s87 = sphi 0, %s73
      %s91 = sphi 0, %s91
      %s93 = sphi 0, %s91
      %s94 = sphi 0, %s93
      %s108 = sphi 0, %s94
      %s112 = sphi 0, %s112
      %s114 = sphi 0, %s112
      %s115 = sphi 0, %s114
      %s129 = sphi 0, %s115
      %s133 = sphi 0, %s133
      %s135 = sphi 0, %s133
      %s136 = sphi 0, %s135
      %s150 = sphi 0, %s136
      %s156 = sphi 0, %s158
      %s159 = sphi 0, %s156
      %s160 = sphi 0, %s159
      %s176 = sphi 0, %s160
    $region4: #{resnet_forward.1} parent=1 // loop_header_branch
      %18 = sbr.rel (%p16) target = $region8
    $region5: #{resnet_forward.1} parent=1 // loop_body
      %s20 = ssub.s32 %s15, 1
      %s21 = ssub.s32 %s15, 2
      %s22 = sadd.s32 %s15, 1
      %s23 = ssub.s32 %s15, %s22
      %p24 = scmp.eq.s32.totalorder %s23, 0
      %s26 = sadd.s32 %s25, 1
      %s27 = scalar_select %p24, %s25, %s26
      %p30 = pneg %p24
      %p31 = scmp.eq.s32.totalorder %s15, 1
      %p32 = por %p30, %p31
      %p33 = scmp.ne.s32.totalorder %s25, %s28
      %p34 = scmp.eq.s32.totalorder %s15, 0
      %p35 = por %p33, %p34
      %p36 = scmp.ne.s32.totalorder %s25, %s28
      %p37 = scmp.eq.s32.totalorder %s20, 1
      %p38 = por %p36, %p37
      %p39 = scmp.ne.s32.totalorder %s28, %s29
      %p40 = scmp.eq.s32.totalorder %s20, 0
      %p41 = por %p39, %p40
      %p42 = scmp.ne.s32.totalorder %s28, %s29
      %p43 = scmp.eq.s32.totalorder %s21, 1
      %p44 = por %p42, %p43
      %p46 = scmp.ne.s32.totalorder %s29, %s45
      %p47 = scmp.eq.s32.totalorder %s21, 0
      %p48 = por %p46, %p47
      %s50 = sadd.s32 %s49, 1
      %p53 = scmp.eq.s32.totalorder %s15, 1
      %p54 = scmp.ne.s32.totalorder %s49, %s51
      %p55 = scmp.eq.s32.totalorder %s15, 0
      %p56 = por %p54, %p55
      %p57 = scmp.ne.s32.totalorder %s49, %s51
      %p58 = scmp.eq.s32.totalorder %s20, 1
      %p59 = por %p57, %p58
      %p60 = scmp.ne.s32.totalorder %s51, %s52
      %p61 = scmp.eq.s32.totalorder %s20, 0
      %p62 = por %p60, %p61
      %p63 = scmp.ne.s32.totalorder %s51, %s52
      %p64 = scmp.eq.s32.totalorder %s21, 1
      %p65 = por %p63, %p64
      %p67 = scmp.ne.s32.totalorder %s52, %s66
      %p68 = scmp.eq.s32.totalorder %s21, 0
      %p69 = por %p67, %p68
      %s71 = sadd.s32 %s70, 1
      %p74 = scmp.eq.s32.totalorder %s15, 1
      %p75 = scmp.ne.s32.totalorder %s70, %s72
      %p76 = scmp.eq.s32.totalorder %s15, 0
      %p77 = por %p75, %p76
      %p78 = scmp.ne.s32.totalorder %s70, %s72
      %p79 = scmp.eq.s32.totalorder %s20, 1
      %p80 = por %p78, %p79
      %p81 = scmp.ne.s32.totalorder %s72, %s73
      %p82 = scmp.eq.s32.totalorder %s20, 0
      %p83 = por %p81, %p82
      %p84 = scmp.ne.s32.totalorder %s72, %s73
      %p85 = scmp.eq.s32.totalorder %s21, 1
      %p86 = por %p84, %p85
      %p88 = scmp.ne.s32.totalorder %s73, %s87
      %p89 = scmp.eq.s32.totalorder %s21, 0
      %p90 = por %p88, %p89
      %s92 = sadd.s32 %s91, 1
      %p95 = scmp.eq.s32.totalorder %s15, 1
      %p96 = scmp.ne.s32.totalorder %s91, %s93
      %p97 = scmp.eq.s32.totalorder %s15, 0
      %p98 = por %p96, %p97
      %p99 = scmp.ne.s32.totalorder %s91, %s93
      %p100 = scmp.eq.s32.totalorder %s20, 1
      %p101 = por %p99, %p100
      %p102 = scmp.ne.s32.totalorder %s93, %s94
      %p103 = scmp.eq.s32.totalorder %s20, 0
      %p104 = por %p102, %p103
      %p105 = scmp.ne.s32.totalorder %s93, %s94
      %p106 = scmp.eq.s32.totalorder %s21, 1
      %p107 = por %p105, %p106
      %p109 = scmp.ne.s32.totalorder %s94, %s108
      %p110 = scmp.eq.s32.totalorder %s21, 0
      %p111 = por %p109, %p110
      %s113 = sadd.s32 %s112, 1
      %p116 = scmp.eq.s32.totalorder %s15, 1
      %p117 = scmp.ne.s32.totalorder %s112, %s114
      %p118 = scmp.eq.s32.totalorder %s15, 0
      %p119 = por %p117, %p118
      %p120 = scmp.ne.s32.totalorder %s112, %s114
      %p121 = scmp.eq.s32.totalorder %s20, 1
      %p122 = por %p120, %p121
      %p123 = scmp.ne.s32.totalorder %s114, %s115
      %p124 = scmp.eq.s32.totalorder %s20, 0
      %p125 = por %p123, %p124
      %p126 = scmp.ne.s32.totalorder %s114, %s115
      %p127 = scmp.eq.s32.totalorder %s21, 1
      %p128 = por %p126, %p127
      %p130 = scmp.ne.s32.totalorder %s115, %s129
      %p131 = scmp.eq.s32.totalorder %s21, 0
      %p132 = por %p130, %p131
      %s134 = sadd.s32 %s133, 1
      %p137 = scmp.eq.s32.totalorder %s15, 1
      %p138 = scmp.ne.s32.totalorder %s133, %s135
      %p139 = scmp.eq.s32.totalorder %s15, 0
      %p140 = por %p138, %p139
      %p141 = scmp.ne.s32.totalorder %s133, %s135
      %p142 = scmp.eq.s32.totalorder %s20, 1
      %p143 = por %p141, %p142
      %p144 = scmp.ne.s32.totalorder %s135, %s136
      %p145 = scmp.eq.s32.totalorder %s20, 0
      %p146 = por %p144, %p145
      %p147 = scmp.ne.s32.totalorder %s135, %s136
      %p148 = scmp.eq.s32.totalorder %s21, 1
      %p149 = por %p147, %p148
      %p151 = scmp.ne.s32.totalorder %s136, %s150
      %p152 = scmp.eq.s32.totalorder %s21, 0
      %p153 = por %p151, %p152
      %s154 = ssub.s32 %s15, %s22
      %p155 = scmp.eq.s32.totalorder %s154, 0
      %s157 = sadd.s32 %s156, 1
      %s158 = scalar_select %p155, %s156, %s157
      %p161 = pneg %p155
      %p162 = scmp.eq.s32.totalorder %s15, 1
      %p163 = por %p161, %p162
      %p164 = scmp.ne.s32.totalorder %s156, %s159
      %p165 = scmp.eq.s32.totalorder %s15, 0
      %p166 = por %p164, %p165
      %p167 = scmp.ne.s32.totalorder %s156, %s159
      %p168 = scmp.eq.s32.totalorder %s20, 1
      %p169 = por %p167, %p168
      %p170 = scmp.ne.s32.totalorder %s159, %s160
      %p171 = scmp.eq.s32.totalorder %s20, 0
      %p172 = por %p170, %p171
      %p173 = scmp.ne.s32.totalorder %s159, %s160
      %p174 = scmp.eq.s32.totalorder %s21, 1
      %p175 = por %p173, %p174
      %p177 = scmp.ne.s32.totalorder %s160, %s176
      %p178 = scmp.eq.s32.totalorder %s21, 0
      %p179 = por %p177, %p178
      %p180 = scmp.le.s32.totalorder 1, %s15
      %p181 = scmp.lt.s32.totalorder %s15, 3
      %p182 = pnand %p180, %p181
      %p183 = pneg %p182
      // Predicated region
      $region9: #{resnet_forward.1} parent=5 // pred_check
        _
      $region10: #{resnet_forward.1} parent=5 // pred_check_branch
        %185 = sbr.rel (%p182) target = $region12
      $region11: #{resnet_forward.1} parent=5 // pred_region
        %s186 = ssub.s32 %s15, 1
        // Predicated region
        $region13: #{resnet_forward.1} parent=11 // pred_check
          %p187 = pneg %p62
        $region14: #{resnet_forward.1} parent=11 // pred_check_branch
          %189 = sbr.rel (%p187) target = $region16
        $region15: #{resnet_forward.1} parent=11 // pred_region
          %s191 = ssub.s32 2304, 2304
          %192 = vsyncadd [#allocation9], %s191
          %s193 = sshll.u32 [#allocation8], 4
          %s194 = int_to_ptr.vmem [resolvable:$true] %s193
          %199 = dma.hbm_to_vmem [thread:$0]  %s1, 2304, %s194, [#allocation9], 128, 128, 8
        $region16: #{resnet_forward.1} parent=11 // pred_fallthru
          _
        // Predicated region
        $region17: #{resnet_forward.1} parent=11 // pred_check
          %p200 = pneg %p83
        $region18: #{resnet_forward.1} parent=11 // pred_check_branch
          %202 = sbr.rel (%p200) target = $region20
        $region19: #{resnet_forward.1} parent=11 // pred_region
          %s204 = ssub.s32 81920, 81920
          %205 = vsyncadd [#allocation11], %s204
          %s206 = sshll.u32 [#allocation10], 4
          %s207 = int_to_ptr.vmem [resolvable:$true] %s206
          %212 = dma.hbm_to_vmem [thread:$0]  %s2, 81920, %s207, [#allocation11], 128, 128, 8
        $region20: #{resnet_forward.1} parent=11 // pred_fallthru
          _
        // Predicated region
        $region21: #{resnet_forward.1} parent=11 // pred_check
          %p213 = pneg %p104
        $region22: #{resnet_forward.1} parent=11 // pred_check_branch
          %215 = sbr.rel (%p213) target = $region24
        $region23: #{resnet_forward.1} parent=11 // pred_region
          %s217 = ssub.s32 256, 256
          %218 = vsyncadd [#allocation11], %s217
          %s220 = sshll.u32 [#allocation12], 4
          %s221 = int_to_ptr.vmem [resolvable:$true] %s220
          %223 = dma.hbm_to_vmem [thread:$0]  %s3, 256, %s221, [#allocation11]
        $region24: #{resnet_forward.1} parent=11 // pred_fallthru
          _
        // Predicated region
        $region25: #{resnet_forward.1} parent=11 // pred_check
          %p224 = pneg %p125
        $region26: #{resnet_forward.1} parent=11 // pred_check_branch
          %226 = sbr.rel (%p224) target = $region28
        $region27: #{resnet_forward.1} parent=11 // pred_region
          %s228 = ssub.s32 192, 192
          %229 = vsyncadd [#allocation14], %s228
          %s230 = sshll.u32 [#allocation13], 4
          %s231 = int_to_ptr.vmem [resolvable:$true] %s230
          %236 = dma.hbm_to_vmem [thread:$0]  %s4, 192, %s231, [#allocation14], 64, 64, 4
        $region28: #{resnet_forward.1} parent=11 // pred_fallthru
          _
        // Predicated region
        $region29: #{resnet_forward.1} parent=11 // pred_check
          %p237 = pneg %p146
        $region30: #{resnet_forward.1} parent=11 // pred_check_branch
          %239 = sbr.rel (%p237) target = $region32
        $region31: #{resnet_forward.1} parent=11 // pred_region
          %s241 = ssub.s32 96, 96
          %242 = vsyncadd [#allocation14], %s241
          %s243 = sshll.u32 [#allocation15], 4
          %s244 = int_to_ptr.vmem [resolvable:$true] %s243
          %249 = dma.hbm_to_vmem [thread:$0]  %s5, 96, %s244, [#allocation14], 32, 32, 2
        $region32: #{resnet_forward.1} parent=11 // pred_fallthru
          _
      $region12: #{resnet_forward.1} parent=5 // pred_fallthru
        _
      %p250 = scmp.lt.s32.totalorder %s15, 2
      // Predicated region
      $region33: #{resnet_forward.1} parent=5 // pred_check
        %p251 = pneg %p250
      $region34: #{resnet_forward.1} parent=5 // pred_check_branch
        %253 = sbr.rel (%p251) target = $region36
      $region35: #{resnet_forward.1} parent=5 // pred_region
        // Predicated region
        $region37: #{resnet_forward.1} parent=35 // pred_check
          %p254 = pneg %p35
        $region38: #{resnet_forward.1} parent=35 // pred_check_branch
          %256 = sbr.rel (%p254) target = $region40
        $region39: #{resnet_forward.1} parent=35 // pred_region
          %p257 = scmp.lt.s32.totalorder %s15, 1
          %s258 = scalar_select %p257, %s15, 1
          %s259 = smul.addr %s258, 3
          %s260 = smul.addr %s259, 4
          %s261 = scalar_lea.vmem %s0, %s260
        $region40: #{resnet_forward.1} parent=35 // pred_fallthru
          _
      $region36: #{resnet_forward.1} parent=5 // pred_fallthru
        _
      %p262 = scmp.le.s32.totalorder 1, %s15
      %p263 = scmp.lt.s32.totalorder %s15, 3
      %p264 = pnand %p262, %p263
      %p265 = pneg %p264
      // Predicated region
      $region41: #{resnet_forward.1} parent=5 // pred_check
        _
      $region42: #{resnet_forward.1} parent=5 // pred_check_branch
        %267 = sbr.rel (%p264) target = $region44
      $region43: #{resnet_forward.1} parent=5 // pred_region
        %s268 = ssub.s32 %s15, 1
        // Predicated region
        $region45: #{resnet_forward.1} parent=43 // pred_check
          %p269 = pneg %p62
        $region46: #{resnet_forward.1} parent=43 // pred_check_branch
          %271 = sbr.rel (%p269) target = $region48
        $region47: #{resnet_forward.1} parent=43 // pred_region
          %272 = dma.done [#allocation9], 2304
        $region48: #{resnet_forward.1} parent=43 // pred_fallthru
          _
        // Predicated region
        $region49: #{resnet_forward.1} parent=43 // pred_check
          %p273 = pneg %p83
        $region50: #{resnet_forward.1} parent=43 // pred_check_branch
          %275 = sbr.rel (%p273) target = $region52
        $region51: #{resnet_forward.1} parent=43 // pred_region
          %276 = dma.done [#allocation11], 81920
        $region52: #{resnet_forward.1} parent=43 // pred_fallthru
          _
        // Predicated region
        $region53: #{resnet_forward.1} parent=43 // pred_check
          %p277 = pneg %p104
        $region54: #{resnet_forward.1} parent=43 // pred_check_branch
          %279 = sbr.rel (%p277) target = $region56
        $region55: #{resnet_forward.1} parent=43 // pred_region
          %280 = dma.done [#allocation11], 256
        $region56: #{resnet_forward.1} parent=43 // pred_fallthru
          _
        // Predicated region
        $region57: #{resnet_forward.1} parent=43 // pred_check
          %p281 = pneg %p125
        $region58: #{resnet_forward.1} parent=43 // pred_check_branch
          %283 = sbr.rel (%p281) target = $region60
        $region59: #{resnet_forward.1} parent=43 // pred_region
          %284 = dma.done [#allocation14], 192
        $region60: #{resnet_forward.1} parent=43 // pred_fallthru
          _
        // Predicated region
        $region61: #{resnet_forward.1} parent=43 // pred_check
          %p285 = pneg %p146
        $region62: #{resnet_forward.1} parent=43 // pred_check_branch
          %287 = sbr.rel (%p285) target = $region64
        $region63: #{resnet_forward.1} parent=43 // pred_region
          %288 = dma.done [#allocation14], 96
        $region64: #{resnet_forward.1} parent=43 // pred_fallthru
          _
        %p289 = scmp.lt.s32.totalorder %s20, 1
        %s290 = scalar_select %p289, %s20, 1
        %s291 = smul.addr %s290, 3
        %s292 = smul.addr %s291, 4
        %s293 = scalar_lea.vmem %s0, %s292
        %p294 = pneg %p41
        %p295 = pneg %p38
        %p296 = pneg %p62
        %p297 = pneg %p59
        %p298 = pneg %p83
        %p299 = pneg %p80
        %p300 = pneg %p104
        %p301 = pneg %p101
        %p302 = pneg %p125
        %p303 = pneg %p122
        %p304 = pneg %p146
        %p305 = pneg %p143
        %p306 = pneg %p172
        %p307 = pneg %p169
        %p308 = scmp.lt.s32.totalorder %s20, 1
        %s309 = scalar_select %p308, %s20, 1
        %s310 = smul.addr %s309, 2
        %s311 = smul.addr %s310, 4
        %s312 = scalar_lea.vmem %s6, %s311
        %p313 = scmp.lt.s32.totalorder %s20, 1
        %s314 = scalar_select %p313, %s20, 1
        %s315 = smul.addr %s314, 3
        %s316 = smul.addr %s315, 4
        %s317 = scalar_lea.vmem %s0, %s316
        %p318 = scmp.lt.s32.totalorder %s20, 1
        %s319 = scalar_select %p318, %s20, 1
        %s320 = smul.addr %s319, 2
        %s321 = smul.addr %s320, 4
        %s322 = scalar_lea.vmem %s6, %s321
        %324 = vst [vmem:[#allocation2] sm:$0xff] 0
        %325 = vst [vmem:[#allocation2 + $0x8] sm:$0xff] 0
        %326 = vst [vmem:[#allocation2 + $0x10] sm:$0x11] 0
        %327 = vst [vmem:[#allocation3] sm:$0xff] 0
        %328 = vst [vmem:[#allocation3 + $0x8] sm:$0xff] 0
        %329 = vst [vmem:[#allocation3 + $0x10] sm:$0x11] 0
        %330 = vst [vmem:[#allocation4] sm:$0xff] 0
        %331 = vst [vmem:[#allocation4 + $0x8] sm:$0xff] 0
        %332 = vst [vmem:[#allocation4 + $0x10] sm:$0x11] 0
        %333 = vst [vmem:[#allocation5] sm:$0xff] 0
        %334 = vst [vmem:[#allocation5 + $0x8] sm:$0x11] 0
        %335 = vst [vmem:[#allocation6] sm:$0xff] 0
        %336 = vst [vmem:[#allocation6 + $0x8] sm:$0x11] 0
        %337 = vst [vmem:[#allocation7] sm:$0x77] 0
        %v338 = vld [vmem:[%s317] sm:$0xf]
        %v339 = vld [vmem:[%s317 + $0x4] sm:$0xf]
        %v340 = vld [vmem:[#allocation8] sm:$0xff]
        %v341 = vld [vmem:[#allocation8 + $0x8] sm:$0xff]
        %v342 = vld [vmem:[#allocation8 + $0x10] sm:$0xff]
        %v343 = vld [vmem:[#allocation8 + $0x18] sm:$0xff]
        %v344 = vld [vmem:[#allocation8 + $0x20] sm:$0xff]
        %v345 = vld [vmem:[#allocation8 + $0x28] sm:$0xff]
        %v346 = vld [vmem:[%s317 + $0x8] sm:$0x1]
        %s347 = scalar_lea.vmem [#allocation8], 48
        %v348 = vld [vmem:[%s347] sm:$0xff]
        %v349 = vld [vmem:[%s347 + $0x8] sm:$0xff]
        %v350 = vld [vmem:[%s347 + $0x10] sm:$0xff]
        %v351 = vld [vmem:[%s347 + $0x18] sm:$0xff]
        %v352 = vld [vmem:[%s347 + $0x20] sm:$0xff]
        %v353 = vld [vmem:[%s347 + $0x28] sm:$0xff]
        %v357 = vunpack.c.l.b16 %v338
        %v358 = vunpack.c.l.b16 %v339
        %v359 = vunpack.c.l.b16 %v346
        %v360 = vpack.c.b16 %v358, %v357
        %v361 = vpack.c.b16 %v359, %v359
        %vm362 = vsmask.f32 7424
        %v364 = vshrl.u32 %v360, 16
        %v366 = vshll.u32 %v360, 16
        %v368 = vrot.slane %v366, 1
        %v369 = vor.u32 %v364, %v368
        %v371 = vshll.u32 %v361, 16
        %v373 = vrot.slane %v371, 1
        %v374 = vsel %vm362, %v369, %v373
        %v381 = vunpack.c.l.b16 %v348
        %v382 = vunpack.c.h.b16 %v348
        %v383 = vunpack.c.l.b16 %v349
        %v384 = vunpack.c.h.b16 %v349
        %v385 = vunpack.c.l.b16 %v350
        %v386 = vunpack.c.h.b16 %v350
        %v387 = vunpack.c.l.b16 %v351
        %v388 = vunpack.c.h.b16 %v351
        %v389 = vunpack.c.l.b16 %v352
        %v390 = vunpack.c.h.b16 %v352
        %v391 = vunpack.c.l.b16 %v353
        %v392 = vunpack.c.h.b16 %v353
        %v393 = vpack.c.b16 %v383, %v381
        %v394 = vpack.c.b16 %v384, %v382
        %v395 = vpack.c.b16 %v387, %v385
        %v396 = vpack.c.b16 %v388, %v386
        %v397 = vpack.c.b16 %v391, %v389
        %v398 = vpack.c.b16 %v392, %v390
        %vm405 = vcmask 392192
        %v407 = vsel %vm405, %v374, 0
        %409 = vmatprep.subr.bf16.mxu0 %v394
        %410 = vmatpush1.bf16.msra.mxu0 %v393
        %411 = vmatprep.subr.bf16.mxu0 %v396
        %412 = vmatpush1.bf16.msra.mxu0 %v395
        %413 = vmatprep.subr.bf16.mxu0 %v398
        %414 = vmatpush1.bf16.msra.mxu0 %v397
        %415 = vmatprep.subr.bf16.mxu0 0
        %416 = vmatpush1.bf16.msra.mxu0 0
        %417 = vmatprep.subr.bf16.mxu0 0
        %418 = vmatpush1.bf16.msra.mxu0 0
        %419 = vmatprep.subr.bf16.mxu0 0
        %420 = vmatpush1.bf16.msra.mxu0 0
        %421 = vmatprep.subr.bf16.mxu0 0
        %422 = vmatpush1.bf16.msra.mxu0 0
        %423 = vmatprep.subr.bf16.mxu0 0
        %424 = vmatpush1.bf16.msra.mxu0 0
        %425 = vmatprep.subr.bf16.mxu0 0
        %426 = vmatpush1.bf16.msra.mxu0 0
        %427 = vmatprep.subr.bf16.mxu0 0
        %428 = vmatpush1.bf16.msra.mxu0 0
        %429 = vmatprep.subr.bf16.mxu0 0
        %430 = vmatpush1.bf16.msra.mxu0 0
        %431 = vmatprep.subr.bf16.mxu0 0
        %432 = vmatpush1.bf16.msra.mxu0 0
        %433 = vmatprep.subr.bf16.mxu0 0
        %434 = vmatpush1.bf16.msra.mxu0 0
        %435 = vmatprep.subr.bf16.mxu0 0
        %436 = vmatpush1.bf16.msra.mxu0 0
        %437 = vmatprep.subr.bf16.mxu0 0
        %438 = vmatpush1.bf16.msra.mxu0 0
        %439 = vmatprep.subr.bf16.mxu0 0
        %440 = vmatpush1.bf16.msra.mxu0 0
        %441 = vmatprep.mubr.bf16.mxu0 0
        %442 = vmatmul.mubr.bf16.gmra.mrb[0].mxu0 %v407
        %v443 = vpop.f32.mrb[0].mxu0
        %v444 = vadd.f32 0.0, %v443
        %v445 = vpop.f32.mrb[0].mxu0
        %v446 = vadd.f32 0.0, %v445
        %v447 = vpop.f32.mrb[0].mxu0
        %v448 = vadd.f32 0.0, %v447
        %v449 = vpop.f32.mrb[0].mxu0
        %v450 = vadd.f32 0.0, %v449
        %451 = vdwg.mxu0
        %v458 = vunpack.c.l.b16 %v340
        %v459 = vunpack.c.h.b16 %v340
        %v460 = vunpack.c.l.b16 %v341
        %v461 = vunpack.c.h.b16 %v341
        %v462 = vunpack.c.l.b16 %v342
        %v463 = vunpack.c.h.b16 %v342
        %v464 = vunpack.c.l.b16 %v343
        %v465 = vunpack.c.h.b16 %v343
        %v466 = vunpack.c.l.b16 %v344
        %v467 = vunpack.c.h.b16 %v344
        %v468 = vunpack.c.l.b16 %v345
        %v469 = vunpack.c.h.b16 %v345
        %v470 = vpack.c.b16 %v460, %v458
        %v471 = vpack.c.b16 %v461, %v459
        %v472 = vpack.c.b16 %v464, %v462
        %v473 = vpack.c.b16 %v465, %v463
        %v474 = vpack.c.b16 %v468, %v466
        %v475 = vpack.c.b16 %v469, %v467
        %v482 = vsel %vm405, %v360, 0
        %484 = vmatprep.subr.bf16.mxu0 %v471
        %485 = vmatpush1.bf16.msra.mxu0 %v470
        %486 = vmatprep.subr.bf16.mxu0 %v473
        %487 = vmatpush1.bf16.msra.mxu0 %v472
        %488 = vmatprep.subr.bf16.mxu0 %v475
        %489 = vmatpush1.bf16.msra.mxu0 %v474
        %490 = vmatprep.subr.bf16.mxu0 0
        %491 = vmatpush1.bf16.msra.mxu0 0
        %492 = vmatprep.subr.bf16.mxu0 0
        %493 = vmatpush1.bf16.msra.mxu0 0
        %494 = vmatprep.subr.bf16.mxu0 0
        %495 = vmatpush1.bf16.msra.mxu0 0
        %496 = vmatprep.subr.bf16.mxu0 0
        %497 = vmatpush1.bf16.msra.mxu0 0
        %498 = vmatprep.subr.bf16.mxu0 0
        %499 = vmatpush1.bf16.msra.mxu0 0
        %500 = vmatprep.subr.bf16.mxu0 0
        %501 = vmatpush1.bf16.msra.mxu0 0
        %502 = vmatprep.subr.bf16.mxu0 0
        %503 = vmatpush1.bf16.msra.mxu0 0
        %504 = vmatprep.subr.bf16.mxu0 0
        %505 = vmatpush1.bf16.msra.mxu0 0
        %506 = vmatprep.subr.bf16.mxu0 0
        %507 = vmatpush1.bf16.msra.mxu0 0
        %508 = vmatprep.subr.bf16.mxu0 0
        %509 = vmatpush1.bf16.msra.mxu0 0
        %510 = vmatprep.subr.bf16.mxu0 0
        %511 = vmatpush1.bf16.msra.mxu0 0
        %512 = vmatprep.subr.bf16.mxu0 0
        %513 = vmatpush1.bf16.msra.mxu0 0
        %514 = vmatprep.subr.bf16.mxu0 0
        %515 = vmatpush1.bf16.msra.mxu0 0
        %516 = vmatprep.mubr.bf16.mxu0 0
        %517 = vmatmul.mubr.bf16.gmra.mrb[0].mxu0 %v482
        %v518 = vpop.f32.mrb[0].mxu0
        %v519 = vadd.f32 %v444, %v518
        %v520 = vpop.f32.mrb[0].mxu0
        %v521 = vadd.f32 %v446, %v520
        %v522 = vpop.f32.mrb[0].mxu0
        %v523 = vadd.f32 %v448, %v522
        %v524 = vpop.f32.mrb[0].mxu0
        %v525 = vadd.f32 %v450, %v524
        %526 = vdwg.mxu0
        %v527 = vld [vmem:[%s317] sm:$0xe]
        %s528 = scalar_lea.vmem [#allocation8], 96
        %v529 = vld [vmem:[%s528] sm:$0xff]
        %v530 = vld [vmem:[%s528 + $0x8] sm:$0xff]
        %v531 = vld [vmem:[%s528 + $0x10] sm:$0xff]
        %v532 = vld [vmem:[%s528 + $0x18] sm:$0xff]
        %v533 = vld [vmem:[%s528 + $0x20] sm:$0xff]
        %v534 = vld [vmem:[%s528 + $0x28] sm:$0xff]
        %v536 = vunpack.c.l.b16 %v527
        %v537 = vpack.c.b16 %v358, %v536
        %vm538 = vcmask 1046528
        %v539 = vrot.slane %v537, 1
        %v540 = vrot.slane %v361, 1
        %v541 = vsel %vm538, %v539, %v540
        %v548 = vunpack.c.l.b16 %v529
        %v549 = vunpack.c.h.b16 %v529
        %v550 = vunpack.c.l.b16 %v530
        %v551 = vunpack.c.h.b16 %v530
        %v552 = vunpack.c.l.b16 %v531
        %v553 = vunpack.c.h.b16 %v531
        %v554 = vunpack.c.l.b16 %v532
        %v555 = vunpack.c.h.b16 %v532
        %v556 = vunpack.c.l.b16 %v533
        %v557 = vunpack.c.h.b16 %v533
        %v558 = vunpack.c.l.b16 %v534
        %v559 = vunpack.c.h.b16 %v534
        %v560 = vpack.c.b16 %v550, %v548
        %v561 = vpack.c.b16 %v551, %v549
        %v562 = vpack.c.b16 %v554, %v552
        %v563 = vpack.c.b16 %v555, %v553
        %v564 = vpack.c.b16 %v558, %v556
        %v565 = vpack.c.b16 %v559, %v557
        %v573 = vsel %vm405, %v541, 0
        %575 = vmatprep.subr.bf16.mxu0 %v561
        %576 = vmatpush1.bf16.msra.mxu0 %v560
        %577 = vmatprep.subr.bf16.mxu0 %v563
        %578 = vmatpush1.bf16.msra.mxu0 %v562
        %579 = vmatprep.subr.bf16.mxu0 %v565
        %580 = vmatpush1.bf16.msra.mxu0 %v564
        %581 = vmatprep.subr.bf16.mxu0 0
        %582 = vmatpush1.bf16.msra.mxu0 0
        %583 = vmatprep.subr.bf16.mxu0 0
        %584 = vmatpush1.bf16.msra.mxu0 0
        %585 = vmatprep.subr.bf16.mxu0 0
        %586 = vmatpush1.bf16.msra.mxu0 0
        %587 = vmatprep.subr.bf16.mxu0 0
        %588 = vmatpush1.bf16.msra.mxu0 0
        %589 = vmatprep.subr.bf16.mxu0 0
        %590 = vmatpush1.bf16.msra.mxu0 0
        %591 = vmatprep.subr.bf16.mxu0 0
        %592 = vmatpush1.bf16.msra.mxu0 0
        %593 = vmatprep.subr.bf16.mxu0 0
        %594 = vmatpush1.bf16.msra.mxu0 0
        %595 = vmatprep.subr.bf16.mxu0 0
        %596 = vmatpush1.bf16.msra.mxu0 0
        %597 = vmatprep.subr.bf16.mxu0 0
        %598 = vmatpush1.bf16.msra.mxu0 0
        %599 = vmatprep.subr.bf16.mxu0 0
        %600 = vmatpush1.bf16.msra.mxu0 0
        %601 = vmatprep.subr.bf16.mxu0 0
        %602 = vmatpush1.bf16.msra.mxu0 0
        %603 = vmatprep.subr.bf16.mxu0 0
        %604 = vmatpush1.bf16.msra.mxu0 0
        %605 = vmatprep.subr.bf16.mxu0 0
        %606 = vmatpush1.bf16.msra.mxu0 0
        %607 = vmatprep.mubr.bf16.mxu0 0
        %608 = vmatmul.mubr.bf16.gmra.mrb[0].mxu0 %v573
        %v609 = vpop.f32.mrb[0].mxu0
        %v610 = vadd.f32 0.0, %v609
        %v611 = vpop.f32.mrb[0].mxu0
        %v612 = vadd.f32 0.0, %v611
        %v613 = vpop.f32.mrb[0].mxu0
        %v614 = vadd.f32 0.0, %v613
        %v615 = vpop.f32.mrb[0].mxu0
        %v616 = vadd.f32 0.0, %v615
        %617 = vdwg.mxu0
        %v618 = vadd.f32 %v519, %v610
        %v619 = vadd.f32 %v521, %v612
        %v620 = vadd.f32 %v523, %v614
        %v621 = vadd.f32 %v525, %v616
        %v622 = vld [vmem:[#allocation12] ss:$8 sm:$0x3]
        %v624 = vlaneseq
        %v625 = vshrl.u32 %v624, 7
        %v626 = vsub.s32 0, %v625
        %v627 = vrot.slane %v622, %v626
        %v628 = vlaneseq
        %v629 = vshrl.u32 %v628, 7
        %v630 = vsub.s32 1, %v629
        %v631 = vrot.slane %v622, %v630
        %v634 = vadd.f32 %v618, %v627
        %v635 = vadd.f32 %v619, %v631
        %v636 = vadd.f32 %v620, %v627
        %v637 = vadd.f32 %v621, %v631
        %vm638 = vcmp.ge.f32.partialorder %v634, 0.0
        %vm639 = vcmp.ge.f32.partialorder %v635, 0.0
        %vm640 = vcmp.ge.f32.partialorder %v636, 0.0
        %vm641 = vcmp.ge.f32.partialorder %v637, 0.0
        %v642 = vmul.f32 %v634, 0.2
        %v643 = vmul.f32 %v635, 0.2
        %v644 = vmul.f32 %v636, 0.2
        %v645 = vmul.f32 %v637, 0.2
        %v646 = vsel %vm638, %v634, %v642
        %v647 = vsel %vm639, %v635, %v643
        %v648 = vsel %vm640, %v636, %v644
        %v649 = vsel %vm641, %v637, %v645
        %v650 = vpack.c.bf16 %v648, %v646
        %v651 = vpack.c.bf16 %v649, %v647
        %v654 = vunpack.c.l.b16 %v650
        %v655 = vunpack.c.l.b16 %v651
        %v656 = vunpack.c.h.b16 %v650
        %v657 = vunpack.c.h.b16 %v651
        %v658 = vpack.c.b16 %v655, %v654
        %v659 = vpack.c.b16 %v657, %v656
        %vm660 = vsmask.f32 256
        %vm661 = vsmask.f32 4368
        %vm662 = vmor %vm660, %vm661
        %v664 = vshrl.u32 %v658, 16
        %v666 = vrot.slane %v664, 7
        %v667 = vshll.u32 %v658, 16
        %v669 = vor.u32 %v666, %v667
        %v670 = vrot.slane %v666, 4
        %v672 = vshrl.u32 %v659, 16
        %v674 = vrot.slane %v672, 7
        %v675 = vshll.u32 %v659, 16
        %v677 = vor.u32 %v674, %v675
        %v678 = vsel %vm662, %v670, %v677
        %v679 = vrot.slane %v674, 4
        %vm683 = vcmask 1043456
        %vm684 = vsmask.f32 7938
        %vm685 = vmand %vm683, %vm684
        %vm686 = vcmask 1047556
        %vm687 = vsmask.f32 7954
        %vm688 = vmand %vm686, %vm687
        %vm689 = vmor %vm688, %vm685
        %v690 = vld [vmem:[#allocation2] sm:$0xff]
        %v691 = vsel %vm689, %v669, %v690
        %692 = vst [vmem:[#allocation2] sm:$0xff] %v691
        %693 = vst [vmem:[#allocation2 + $0x8] sm:$0xff] %v678
        %vm694 = vcmask 1040384
        %vm695 = vmand %vm694, %vm660
        %vm696 = vcmask 1044484
        %vm697 = vsmask.f32 4352
        %vm698 = vmand %vm696, %vm697
        %vm699 = vmor %vm698, %vm695
        %v700 = vld [vmem:[#allocation2 + $0x10] sm:$0x11]
        %v701 = vsel %vm699, %v679, %v700
        %702 = vst [vmem:[#allocation2 + $0x10] sm:$0x11] %v701
        %v703 = vld [vmem:[#allocation2] sm:$0xff]
        %v704 = vld [vmem:[#allocation2 + $0x8] sm:$0xff]
        %v705 = vld [vmem:[#allocation10] sm:$0xff]
        %v706 = vld [vmem:[#allocation10 + $0x8] sm:$0xff]
        %v707 = vld [vmem:[#allocation10 + $0x10] sm:$0xff]
        %v708 = vld [vmem:[#allocation10 + $0x18] sm:$0xff]
        %v709 = vld [vmem:[#allocation10 + $0x20] sm:$0xff]
        %v710 = vld [vmem:[#allocation10 + $0x28] sm:$0xff]
        %v711 = vld [vmem:[#allocation10 + $0x30] sm:$0xff]
        %v712 = vld [vmem:[#allocation10 + $0x38] sm:$0xff]
        %v713 = vld [vmem:[#allocation10 + $0x40] sm:$0xff]
        %v714 = vld [vmem:[#allocation10 + $0x48] sm:$0xff]
        %v715 = vld [vmem:[#allocation10 + $0x50] sm:$0xff]
        %v716 = vld [vmem:[#allocation10 + $0x58] sm:$0xff]
        %v717 = vld [vmem:[#allocation10 + $0x60] sm:$0xff]
        %v718 = vld [vmem:[#allocation10 + $0x68] sm:$0xff]
        %v719 = vld [vmem:[#allocation10 + $0x70] sm:$0xff]
        %v720 = vld [vmem:[#allocation10 + $0x78] sm:$0xff]
        %v721 = vld [vmem:[#allocation10 + $0x80] sm:$0xff]
        %v722 = vld [vmem:[#allocation10 + $0x88] sm:$0xff]
        %v723 = vld [vmem:[#allocation10 + $0x90] sm:$0xff]
        %v724 = vld [vmem:[#allocation10 + $0x98] sm:$0xff]
        %v725 = vld [vmem:[#allocation10 + $0xa0] sm:$0xff]
        %v726 = vld [vmem:[#allocation10 + $0xa8] sm:$0xff]
        %v727 = vld [vmem:[#allocation10 + $0xb0] sm:$0xff]
        %v728 = vld [vmem:[#allocation10 + $0xb8] sm:$0xff]
        %v729 = vld [vmem:[#allocation10 + $0xc0] sm:$0xff]
        %v730 = vld [vmem:[#allocation10 + $0xc8] sm:$0xff]
        %v731 = vld [vmem:[#allocation10 + $0xd0] sm:$0xff]
        %v732 = vld [vmem:[#allocation10 + $0xd8] sm:$0xff]
        %v733 = vld [vmem:[#allocation10 + $0xe0] sm:$0xff]
        %v734 = vld [vmem:[#allocation10 + $0xe8] sm:$0xff]
        %v735 = vld [vmem:[#allocation10 + $0xf0] sm:$0xff]
        %v736 = vld [vmem:[#allocation10 + $0xf8] sm:$0xff]
        %v737 = vld [vmem:[#allocation2 + $0x10] sm:$0x11]
        %s738 = scalar_lea.vmem [#allocation10], 256
        %v739 = vld [vmem:[%s738] sm:$0xff]
        %v740 = vld [vmem:[%s738 + $0x8] sm:$0xff]
        %v741 = vld [vmem:[%s738 + $0x10] sm:$0xff]
        %v742 = vld [vmem:[%s738 + $0x18] sm:$0xff]
        %v743 = vld [vmem:[%s738 + $0x20] sm:$0xff]
        %v744 = vld [vmem:[%s738 + $0x28] sm:$0xff]
        %v745 = vld [vmem:[%s738 + $0x30] sm:$0xff]
        %v746 = vld [vmem:[%s738 + $0x38] sm:$0xff]
        %v747 = vld [vmem:[%s738 + $0x40] sm:$0xff]
        %v748 = vld [vmem:[%s738 + $0x48] sm:$0xff]
        %v749 = vld [vmem:[%s738 + $0x50] sm:$0xff]
        %v750 = vld [vmem:[%s738 + $0x58] sm:$0xff]
        %v751 = vld [vmem:[%s738 + $0x60] sm:$0xff]
        %v752 = vld [vmem:[%s738 + $0x68] sm:$0xff]
        %v753 = vld [vmem:[%s738 + $0x70] sm:$0xff]
        %v754 = vld [vmem:[%s738 + $0x78] sm:$0xff]
        %v755 = vld [vmem:[%s738 + $0x80] sm:$0xff]
        %v756 = vld [vmem:[%s738 + $0x88] sm:$0xff]
        %v757 = vld [vmem:[%s738 + $0x90] sm:$0xff]
        %v758 = vld [vmem:[%s738 + $0x98] sm:$0xff]
        %v759 = vld [vmem:[%s738 + $0xa0] sm:$0xff]
        %v760 = vld [vmem:[%s738 + $0xa8] sm:$0xff]
        %v761 = vld [vmem:[%s738 + $0xb0] sm:$0xff]
        %v762 = vld [vmem:[%s738 + $0xb8] sm:$0xff]
        %v763 = vld [vmem:[%s738 + $0xc0] sm:$0xff]
        %v764 = vld [vmem:[%s738 + $0xc8] sm:$0xff]
        %v765 = vld [vmem:[%s738 + $0xd0] sm:$0xff]
        %v766 = vld [vmem:[%s738 + $0xd8] sm:$0xff]
        %v767 = vld [vmem:[%s738 + $0xe0] sm:$0xff]
        %v768 = vld [vmem:[%s738 + $0xe8] sm:$0xff]
        %v769 = vld [vmem:[%s738 + $0xf0] sm:$0xff]
        %v770 = vld [vmem:[%s738 + $0xf8] sm:$0xff]
        %v774 = vunpack.c.l.b16 %v703
        %v775 = vunpack.c.h.b16 %v703
        %v776 = vunpack.c.l.b16 %v704
        %v777 = vunpack.c.h.b16 %v704
        %v778 = vunpack.c.l.b16 %v737
        %v779 = vunpack.c.h.b16 %v737
        %v780 = vpack.c.b16 %v776, %v774
        %v781 = vpack.c.b16 %v777, %v775
        %v782 = vpack.c.b16 %v778, %v778
        %v783 = vpack.c.b16 %v779, %v779
        %v785 = vshrl.u32 %v780, 16
        %v787 = vshll.u32 %v780, 16
        %v789 = vrot.slane %v787, 1
        %v790 = vor.u32 %v785, %v789
        %v792 = vshll.u32 %v782, 16
        %v794 = vrot.slane %v792, 1
        %v795 = vsel %vm362, %v790, %v794
        %v797 = vshrl.u32 %v781, 16
        %v799 = vshll.u32 %v781, 16
        %v801 = vrot.slane %v799, 1
        %v802 = vor.u32 %v797, %v801
        %v804 = vshll.u32 %v783, 16
        %v806 = vrot.slane %v804, 1
        %v807 = vsel %vm362, %v802, %v806
        %v842 = vunpack.c.l.b16 %v739
        %v843 = vunpack.c.h.b16 %v739
        %v844 = vunpack.c.l.b16 %v740
        %v845 = vunpack.c.h.b16 %v740
        %v846 = vunpack.c.l.b16 %v741
        %v847 = vunpack.c.h.b16 %v741
        %v848 = vunpack.c.l.b16 %v742
        %v849 = vunpack.c.h.b16 %v742
        %v850 = vunpack.c.l.b16 %v743
        %v851 = vunpack.c.h.b16 %v743
        %v852 = vunpack.c.l.b16 %v744
        %v853 = vunpack.c.h.b16 %v744
        %v854 = vunpack.c.l.b16 %v745
        %v855 = vunpack.c.h.b16 %v745
        %v856 = vunpack.c.l.b16 %v746
        %v857 = vunpack.c.h.b16 %v746
        %v858 = vunpack.c.l.b16 %v747
        %v859 = vunpack.c.h.b16 %v747
        %v860 = vunpack.c.l.b16 %v748
        %v861 = vunpack.c.h.b16 %v748
        %v862 = vunpack.c.l.b16 %v749
        %v863 = vunpack.c.h.b16 %v749
        %v864 = vunpack.c.l.b16 %v750
        %v865 = vunpack.c.h.b16 %v750
        %v866 = vunpack.c.l.b16 %v751
        %v867 = vunpack.c.h.b16 %v751
        %v868 = vunpack.c.l.b16 %v752
        %v869 = vunpack.c.h.b16 %v752
        %v870 = vunpack.c.l.b16 %v753
        %v871 = vunpack.c.h.b16 %v753
        %v872 = vunpack.c.l.b16 %v754
        %v873 = vunpack.c.h.b16 %v754
        %v874 = vunpack.c.l.b16 %v755
        %v875 = vunpack.c.h.b16 %v755
        %v876 = vunpack.c.l.b16 %v756
        %v877 = vunpack.c.h.b16 %v756
        %v878 = vunpack.c.l.b16 %v757
        %v879 = vunpack.c.h.b16 %v757
        %v880 = vunpack.c.l.b16 %v758
        %v881 = vunpack.c.h.b16 %v758
        %v882 = vunpack.c.l.b16 %v759
        %v883 = vunpack.c.h.b16 %v759
        %v884 = vunpack.c.l.b16 %v760
        %v885 = vunpack.c.h.b16 %v760
        %v886 = vunpack.c.l.b16 %v761
        %v887 = vunpack.c.h.b16 %v761
        %v888 = vunpack.c.l.b16 %v762
        %v889 = vunpack.c.h.b16 %v762
        %v890 = vunpack.c.l.b16 %v763
        %v891 = vunpack.c.h.b16 %v763
        %v892 = vunpack.c.l.b16 %v764
        %v893 = vunpack.c.h.b16 %v764
        %v894 = vunpack.c.l.b16 %v765
        %v895 = vunpack.c.h.b16 %v765
        %v896 = vunpack.c.l.b16 %v766
        %v897 = vunpack.c.h.b16 %v766
        %v898 = vunpack.c.l.b16 %v767
        %v899 = vunpack.c.h.b16 %v767
        %v900 = vunpack.c.l.b16 %v768
        %v901 = vunpack.c.h.b16 %v768
        %v902 = vunpack.c.l.b16 %v769
        %v903 = vunpack.c.h.b16 %v769
        %v904 = vunpack.c.l.b16 %v770
        %v905 = vunpack.c.h.b16 %v770
        %v906 = vpack.c.b16 %v844, %v842
        %v907 = vpack.c.b16 %v845, %v843
        %v908 = vpack.c.b16 %v848, %v846
        %v909 = vpack.c.b16 %v849, %v847
        %v910 = vpack.c.b16 %v852, %v850
        %v911 = vpack.c.b16 %v853, %v851
        %v912 = vpack.c.b16 %v856, %v854
        %v913 = vpack.c.b16 %v857, %v855
        %v914 = vpack.c.b16 %v860, %v858
        %v915 = vpack.c.b16 %v861, %v859
        %v916 = vpack.c.b16 %v864, %v862
        %v917 = vpack.c.b16 %v865, %v863
        %v918 = vpack.c.b16 %v868, %v866
        %v919 = vpack.c.b16 %v869, %v867
        %v920 = vpack.c.b16 %v872, %v870
        %v921 = vpack.c.b16 %v873, %v871
        %v922 = vpack.c.b16 %v876, %v874
        %v923 = vpack.c.b16 %v877, %v875
        %v924 = vpack.c.b16 %v880, %v878
        %v925 = vpack.c.b16 %v881, %v879
        %v926 = vpack.c.b16 %v884, %v882
        %v927 = vpack.c.b16 %v885, %v883
        %v928 = vpack.c.b16 %v888, %v886
        %v929 = vpack.c.b16 %v889, %v887
        %v930 = vpack.c.b16 %v892, %v890
        %v931 = vpack.c.b16 %v893, %v891
        %v932 = vpack.c.b16 %v896, %v894
        %v933 = vpack.c.b16 %v897, %v895
        %v934 = vpack.c.b16 %v900, %v898
        %v935 = vpack.c.b16 %v901, %v899
        %v936 = vpack.c.b16 %v904, %v902
        %v937 = vpack.c.b16 %v905, %v903
        %970 = vmatprep.subr.bf16.mxu0 %v907
        %971 = vmatpush1.bf16.msra.mxu0 %v906
        %972 = vmatprep.subr.bf16.mxu0 %v909
        %973 = vmatpush1.bf16.msra.mxu0 %v908
        %974 = vmatprep.subr.bf16.mxu0 %v911
        %975 = vmatpush1.bf16.msra.mxu0 %v910
        %976 = vmatprep.subr.bf16.mxu0 %v913
        %977 = vmatpush1.bf16.msra.mxu0 %v912
        %978 = vmatprep.subr.bf16.mxu0 %v915
        %979 = vmatpush1.bf16.msra.mxu0 %v914
        %980 = vmatprep.subr.bf16.mxu0 %v917
        %981 = vmatpush1.bf16.msra.mxu0 %v916
        %982 = vmatprep.subr.bf16.mxu0 %v919
        %983 = vmatpush1.bf16.msra.mxu0 %v918
        %984 = vmatprep.subr.bf16.mxu0 %v921
        %985 = vmatpush1.bf16.msra.mxu0 %v920
        %986 = vmatprep.subr.bf16.mxu0 %v923
        %987 = vmatpush1.bf16.msra.mxu0 %v922
        %988 = vmatprep.subr.bf16.mxu0 %v925
        %989 = vmatpush1.bf16.msra.mxu0 %v924
        %990 = vmatprep.subr.bf16.mxu0 %v927
        %991 = vmatpush1.bf16.msra.mxu0 %v926
        %992 = vmatprep.subr.bf16.mxu0 %v929
        %993 = vmatpush1.bf16.msra.mxu0 %v928
        %994 = vmatprep.subr.bf16.mxu0 %v931
        %995 = vmatpush1.bf16.msra.mxu0 %v930
        %996 = vmatprep.subr.bf16.mxu0 %v933
        %997 = vmatpush1.bf16.msra.mxu0 %v932
        %998 = vmatprep.subr.bf16.mxu0 %v935
        %999 = vmatpush1.bf16.msra.mxu0 %v934
        %1000 = vmatprep.subr.bf16.mxu0 %v937
        %1001 = vmatpush1.bf16.msra.mxu0 %v936
        %1002 = vmatprep.mubr.bf16.mxu0 %v807
        %1003 = vmatmul.mubr.bf16.gmra.mrb[0].mxu0 %v795
        %v1004 = vpop.f32.mrb[0].mxu0
        %v1005 = vadd.f32 0.0, %v1004
        %v1006 = vpop.f32.mrb[0].mxu0
        %v1007 = vadd.f32 0.0, %v1006
        %v1008 = vpop.f32.mrb[0].mxu0
        %v1009 = vadd.f32 0.0, %v1008
        %v1010 = vpop.f32.mrb[0].mxu0
        %v1011 = vadd.f32 0.0, %v1010
        %1012 = vdwg.mxu0
        %v1047 = vunpack.c.l.b16 %v705
        %v1048 = vunpack.c.h.b16 %v705
        %v1049 = vunpack.c.l.b16 %v706
        %v1050 = vunpack.c.h.b16 %v706
        %v1051 = vunpack.c.l.b16 %v707
        %v1052 = vunpack.c.h.b16 %v707
        %v1053 = vunpack.c.l.b16 %v708
        %v1054 = vunpack.c.h.b16 %v708
        %v1055 = vunpack.c.l.b16 %v709
        %v1056 = vunpack.c.h.b16 %v709
        %v1057 = vunpack.c.l.b16 %v710
        %v1058 = vunpack.c.h.b16 %v710
        %v1059 = vunpack.c.l.b16 %v711
        %v1060 = vunpack.c.h.b16 %v711
        %v1061 = vunpack.c.l.b16 %v712
        %v1062 = vunpack.c.h.b16 %v712
        %v1063 = vunpack.c.l.b16 %v713
        %v1064 = vunpack.c.h.b16 %v713
        %v1065 = vunpack.c.l.b16 %v714
        %v1066 = vunpack.c.h.b16 %v714
        %v1067 = vunpack.c.l.b16 %v715
        %v1068 = vunpack.c.h.b16 %v715
        %v1069 = vunpack.c.l.b16 %v716
        %v1070 = vunpack.c.h.b16 %v716
        %v1071 = vunpack.c.l.b16 %v717
        %v1072 = vunpack.c.h.b16 %v717
        %v1073 = vunpack.c.l.b16 %v718
        %v1074 = vunpack.c.h.b16 %v718
        %v1075 = vunpack.c.l.b16 %v719
        %v1076 = vunpack.c.h.b16 %v719
        %v1077 = vunpack.c.l.b16 %v720
        %v1078 = vunpack.c.h.b16 %v720
        %v1079 = vunpack.c.l.b16 %v721
        %v1080 = vunpack.c.h.b16 %v721
        %v1081 = vunpack.c.l.b16 %v722
        %v1082 = vunpack.c.h.b16 %v722
        %v1083 = vunpack.c.l.b16 %v723
        %v1084 = vunpack.c.h.b16 %v723
        %v1085 = vunpack.c.l.b16 %v724
        %v1086 = vunpack.c.h.b16 %v724
        %v1087 = vunpack.c.l.b16 %v725
        %v1088 = vunpack.c.h.b16 %v725
        %v1089 = vunpack.c.l.b16 %v726
        %v1090 = vunpack.c.h.b16 %v726
        %v1091 = vunpack.c.l.b16 %v727
        %v1092 = vunpack.c.h.b16 %v727
        %v1093 = vunpack.c.l.b16 %v728
        %v1094 = vunpack.c.h.b16 %v728
        %v1095 = vunpack.c.l.b16 %v729
        %v1096 = vunpack.c.h.b16 %v729
        %v1097 = vunpack.c.l.b16 %v730
        %v1098 = vunpack.c.h.b16 %v730
        %v1099 = vunpack.c.l.b16 %v731
        %v1100 = vunpack.c.h.b16 %v731
        %v1101 = vunpack.c.l.b16 %v732
        %v1102 = vunpack.c.h.b16 %v732
        %v1103 = vunpack.c.l.b16 %v733
        %v1104 = vunpack.c.h.b16 %v733
        %v1105 = vunpack.c.l.b16 %v734
        %v1106 = vunpack.c.h.b16 %v734
        %v1107 = vunpack.c.l.b16 %v735
        %v1108 = vunpack.c.h.b16 %v735
        %v1109 = vunpack.c.l.b16 %v736
        %v1110 = vunpack.c.h.b16 %v736
        %v1111 = vpack.c.b16 %v1049, %v1047
        %v1112 = vpack.c.b16 %v1050, %v1048
        %v1113 = vpack.c.b16 %v1053, %v1051
        %v1114 = vpack.c.b16 %v1054, %v1052
        %v1115 = vpack.c.b16 %v1057, %v1055
        %v1116 = vpack.c.b16 %v1058, %v1056
        %v1117 = vpack.c.b16 %v1061, %v1059
        %v1118 = vpack.c.b16 %v1062, %v1060
        %v1119 = vpack.c.b16 %v1065, %v1063
        %v1120 = vpack.c.b16 %v1066, %v1064
        %v1121 = vpack.c.b16 %v1069, %v1067
        %v1122 = vpack.c.b16 %v1070, %v1068
        %v1123 = vpack.c.b16 %v1073, %v1071
        %v1124 = vpack.c.b16 %v1074, %v1072
        %v1125 = vpack.c.b16 %v1077, %v1075
        %v1126 = vpack.c.b16 %v1078, %v1076
        %v1127 = vpack.c.b16 %v1081, %v1079
        %v1128 = vpack.c.b16 %v1082, %v1080
        %v1129 = vpack.c.b16 %v1085, %v1083
        %v1130 = vpack.c.b16 %v1086, %v1084
        %v1131 = vpack.c.b16 %v1089, %v1087
        %v1132 = vpack.c.b16 %v1090, %v1088
        %v1133 = vpack.c.b16 %v1093, %v1091
        %v1134 = vpack.c.b16 %v1094, %v1092
        %v1135 = vpack.c.b16 %v1097, %v1095
        %v1136 = vpack.c.b16 %v1098, %v1096
        %v1137 = vpack.c.b16 %v1101, %v1099
        %v1138 = vpack.c.b16 %v1102, %v1100
        %v1139 = vpack.c.b16 %v1105, %v1103
        %v1140 = vpack.c.b16 %v1106, %v1104
        %v1141 = vpack.c.b16 %v1109, %v1107
        %v1142 = vpack.c.b16 %v1110, %v1108
        %1175 = vmatprep.subr.bf16.mxu0 %v1112
        %1176 = vmatpush1.bf16.msra.mxu0 %v1111
        %1177 = vmatprep.subr.bf16.mxu0 %v1114
        %1178 = vmatpush1.bf16.msra.mxu0 %v1113
        %1179 = vmatprep.subr.bf16.mxu0 %v1116
        %1180 = vmatpush1.bf16.msra.mxu0 %v1115
        %1181 = vmatprep.subr.bf16.mxu0 %v1118
        %1182 = vmatpush1.bf16.msra.mxu0 %v1117
        %1183 = vmatprep.subr.bf16.mxu0 %v1120
        %1184 = vmatpush1.bf16.msra.mxu0 %v1119
        %1185 = vmatprep.subr.bf16.mxu0 %v1122
        %1186 = vmatpush1.bf16.msra.mxu0 %v1121
        %1187 = vmatprep.subr.bf16.mxu0 %v1124
        %1188 = vmatpush1.bf16.msra.mxu0 %v1123
        %1189 = vmatprep.subr.bf16.mxu0 %v1126
        %1190 = vmatpush1.bf16.msra.mxu0 %v1125
        %1191 = vmatprep.subr.bf16.mxu0 %v1128
        %1192 = vmatpush1.bf16.msra.mxu0 %v1127
        %1193 = vmatprep.subr.bf16.mxu0 %v1130
        %1194 = vmatpush1.bf16.msra.mxu0 %v1129
        %1195 = vmatprep.subr.bf16.mxu0 %v1132
        %1196 = vmatpush1.bf16.msra.mxu0 %v1131
        %1197 = vmatprep.subr.bf16.mxu0 %v1134
        %1198 = vmatpush1.bf16.msra.mxu0 %v1133
        %1199 = vmatprep.subr.bf16.mxu0 %v1136
        %1200 = vmatpush1.bf16.msra.mxu0 %v1135
        %1201 = vmatprep.subr.bf16.mxu0 %v1138
        %1202 = vmatpush1.bf16.msra.mxu0 %v1137
        %1203 = vmatprep.subr.bf16.mxu0 %v1140
        %1204 = vmatpush1.bf16.msra.mxu0 %v1139
        %1205 = vmatprep.subr.bf16.mxu0 %v1142
        %1206 = vmatpush1.bf16.msra.mxu0 %v1141
        %1207 = vmatprep.mubr.bf16.mxu0 %v781
        %1208 = vmatmul.mubr.bf16.gmra.mrb[0].mxu0 %v780
        %v1209 = vpop.f32.mrb[0].mxu0
        %v1210 = vadd.f32 %v1005, %v1209
        %v1211 = vpop.f32.mrb[0].mxu0
        %v1212 = vadd.f32 %v1007, %v1211
        %v1213 = vpop.f32.mrb[0].mxu0
        %v1214 = vadd.f32 %v1009, %v1213
        %v1215 = vpop.f32.mrb[0].mxu0
        %v1216 = vadd.f32 %v1011, %v1215
        %1217 = vdwg.mxu0
        %v1218 = vld [vmem:[#allocation2] sm:$0xee]
        %s1219 = scalar_lea.vmem [#allocation10], 512
        %v1220 = vld [vmem:[%s1219] sm:$0xff]
        %v1221 = vld [vmem:[%s1219 + $0x8] sm:$0xff]
        %v1222 = vld [vmem:[%s1219 + $0x10] sm:$0xff]
        %v1223 = vld [vmem:[%s1219 + $0x18] sm:$0xff]
        %v1224 = vld [vmem:[%s1219 + $0x20] sm:$0xff]
        %v1225 = vld [vmem:[%s1219 + $0x28] sm:$0xff]
        %v1226 = vld [vmem:[%s1219 + $0x30] sm:$0xff]
        %v1227 = vld [vmem:[%s1219 + $0x38] sm:$0xff]
        %v1228 = vld [vmem:[%s1219 + $0x40] sm:$0xff]
        %v1229 = vld [vmem:[%s1219 + $0x48] sm:$0xff]
        %v1230 = vld [vmem:[%s1219 + $0x50] sm:$0xff]
        %v1231 = vld [vmem:[%s1219 + $0x58] sm:$0xff]
        %v1232 = vld [vmem:[%s1219 + $0x60] sm:$0xff]
        %v1233 = vld [vmem:[%s1219 + $0x68] sm:$0xff]
        %v1234 = vld [vmem:[%s1219 + $0x70] sm:$0xff]
        %v1235 = vld [vmem:[%s1219 + $0x78] sm:$0xff]
        %v1236 = vld [vmem:[%s1219 + $0x80] sm:$0xff]
        %v1237 = vld [vmem:[%s1219 + $0x88] sm:$0xff]
        %v1238 = vld [vmem:[%s1219 + $0x90] sm:$0xff]
        %v1239 = vld [vmem:[%s1219 + $0x98] sm:$0xff]
        %v1240 = vld [vmem:[%s1219 + $0xa0] sm:$0xff]
        %v1241 = vld [vmem:[%s1219 + $0xa8] sm:$0xff]
        %v1242 = vld [vmem:[%s1219 + $0xb0] sm:$0xff]
        %v1243 = vld [vmem:[%s1219 + $0xb8] sm:$0xff]
        %v1244 = vld [vmem:[%s1219 + $0xc0] sm:$0xff]
        %v1245 = vld [vmem:[%s1219 + $0xc8] sm:$0xff]
        %v1246 = vld [vmem:[%s1219 + $0xd0] sm:$0xff]
        %v1247 = vld [vmem:[%s1219 + $0xd8] sm:$0xff]
        %v1248 = vld [vmem:[%s1219 + $0xe0] sm:$0xff]
        %v1249 = vld [vmem:[%s1219 + $0xe8] sm:$0xff]
        %v1250 = vld [vmem:[%s1219 + $0xf0] sm:$0xff]
        %v1251 = vld [vmem:[%s1219 + $0xf8] sm:$0xff]
        %v1253 = vunpack.c.l.b16 %v1218
        %v1254 = vunpack.c.h.b16 %v1218
        %v1255 = vpack.c.b16 %v776, %v1253
        %v1256 = vpack.c.b16 %v777, %v1254
        %v1257 = vrot.slane %v1255, 1
        %v1258 = vrot.slane %v782, 1
        %v1259 = vsel %vm538, %v1257, %v1258
        %v1260 = vrot.slane %v1256, 1
        %v1261 = vrot.slane %v783, 1
        %v1262 = vsel %vm538, %v1260, %v1261
        %v1297 = vunpack.c.l.b16 %v1220
        %v1298 = vunpack.c.h.b16 %v1220
        %v1299 = vunpack.c.l.b16 %v1221
        %v1300 = vunpack.c.h.b16 %v1221
        %v1301 = vunpack.c.l.b16 %v1222
        %v1302 = vunpack.c.h.b16 %v1222
        %v1303 = vunpack.c.l.b16 %v1223
        %v1304 = vunpack.c.h.b16 %v1223
        %v1305 = vunpack.c.l.b16 %v1224
        %v1306 = vunpack.c.h.b16 %v1224
        %v1307 = vunpack.c.l.b16 %v1225
        %v1308 = vunpack.c.h.b16 %v1225
        %v1309 = vunpack.c.l.b16 %v1226
        %v1310 = vunpack.c.h.b16 %v1226
        %v1311 = vunpack.c.l.b16 %v1227
        %v1312 = vunpack.c.h.b16 %v1227
        %v1313 = vunpack.c.l.b16 %v1228
        %v1314 = vunpack.c.h.b16 %v1228
        %v1315 = vunpack.c.l.b16 %v1229
        %v1316 = vunpack.c.h.b16 %v1229
        %v1317 = vunpack.c.l.b16 %v1230
        %v1318 = vunpack.c.h.b16 %v1230
        %v1319 = vunpack.c.l.b16 %v1231
        %v1320 = vunpack.c.h.b16 %v1231
        %v1321 = vunpack.c.l.b16 %v1232
        %v1322 = vunpack.c.h.b16 %v1232
        %v1323 = vunpack.c.l.b16 %v1233
        %v1324 = vunpack.c.h.b16 %v1233
        %v1325 = vunpack.c.l.b16 %v1234
        %v1326 = vunpack.c.h.b16 %v1234
        %v1327 = vunpack.c.l.b16 %v1235
        %v1328 = vunpack.c.h.b16 %v1235
        %v1329 = vunpack.c.l.b16 %v1236
        %v1330 = vunpack.c.h.b16 %v1236
        %v1331 = vunpack.c.l.b16 %v1237
        %v1332 = vunpack.c.h.b16 %v1237
        %v1333 = vunpack.c.l.b16 %v1238
        %v1334 = vunpack.c.h.b16 %v1238
        %v1335 = vunpack.c.l.b16 %v1239
        %v1336 = vunpack.c.h.b16 %v1239
        %v1337 = vunpack.c.l.b16 %v1240
        %v1338 = vunpack.c.h.b16 %v1240
        %v1339 = vunpack.c.l.b16 %v1241
        %v1340 = vunpack.c.h.b16 %v1241
        %v1341 = vunpack.c.l.b16 %v1242
        %v1342 = vunpack.c.h.b16 %v1242
        %v1343 = vunpack.c.l.b16 %v1243
        %v1344 = vunpack.c.h.b16 %v1243
        %v1345 = vunpack.c.l.b16 %v1244
        %v1346 = vunpack.c.h.b16 %v1244
        %v1347 = vunpack.c.l.b16 %v1245
        %v1348 = vunpack.c.h.b16 %v1245
        %v1349 = vunpack.c.l.b16 %v1246
        %v1350 = vunpack.c.h.b16 %v1246
        %v1351 = vunpack.c.l.b16 %v1247
        %v1352 = vunpack.c.h.b16 %v1247
        %v1353 = vunpack.c.l.b16 %v1248
        %v1354 = vunpack.c.h.b16 %v1248
        %v1355 = vunpack.c.l.b16 %v1249
        %v1356 = vunpack.c.h.b16 %v1249
        %v1357 = vunpack.c.l.b16 %v1250
        %v1358 = vunpack.c.h.b16 %v1250
        %v1359 = vunpack.c.l.b16 %v1251
        %v1360 = vunpack.c.h.b16 %v1251
        %v1361 = vpack.c.b16 %v1299, %v1297
        %v1362 = vpack.c.b16 %v1300, %v1298
        %v1363 = vpack.c.b16 %v1303, %v1301
        %v1364 = vpack.c.b16 %v1304, %v1302
        %v1365 = vpack.c.b16 %v1307, %v1305
        %v1366 = vpack.c.b16 %v1308, %v1306
        %v1367 = vpack.c.b16 %v1311, %v1309
        %v1368 = vpack.c.b16 %v1312, %v1310
        %v1369 = vpack.c.b16 %v1315, %v1313
        %v1370 = vpack.c.b16 %v1316, %v1314
        %v1371 = vpack.c.b16 %v1319, %v1317
        %v1372 = vpack.c.b16 %v1320, %v1318
        %v1373 = vpack.c.b16 %v1323, %v1321
        %v1374 = vpack.c.b16 %v1324, %v1322
        %v1375 = vpack.c.b16 %v1327, %v1325
        %v1376 = vpack.c.b16 %v1328, %v1326
        %v1377 = vpack.c.b16 %v1331, %v1329
        %v1378 = vpack.c.b16 %v1332, %v1330
        %v1379 = vpack.c.b16 %v1335, %v1333
        %v1380 = vpack.c.b16 %v1336, %v1334
        %v1381 = vpack.c.b16 %v1339, %v1337
        %v1382 = vpack.c.b16 %v1340, %v1338
        %v1383 = vpack.c.b16 %v1343, %v1341
        %v1384 = vpack.c.b16 %v1344, %v1342
        %v1385 = vpack.c.b16 %v1347, %v1345
        %v1386 = vpack.c.b16 %v1348, %v1346
        %v1387 = vpack.c.b16 %v1351, %v1349
        %v1388 = vpack.c.b16 %v1352, %v1350
        %v1389 = vpack.c.b16 %v1355, %v1353
        %v1390 = vpack.c.b16 %v1356, %v1354
        %v1391 = vpack.c.b16 %v1359, %v1357
        %v1392 = vpack.c.b16 %v1360, %v1358
        %1425 = vmatprep.subr.bf16.mxu0 %v1362
        %1426 = vmatpush1.bf16.msra.mxu0 %v1361
        %1427 = vmatprep.subr.bf16.mxu0 %v1364
        %1428 = vmatpush1.bf16.msra.mxu0 %v1363
        %1429 = vmatprep.subr.bf16.mxu0 %v1366
        %1430 = vmatpush1.bf16.msra.mxu0 %v1365
        %1431 = vmatprep.subr.bf16.mxu0 %v1368
        %1432 = vmatpush1.bf16.msra.mxu0 %v1367
        %1433 = vmatprep.subr.bf16.mxu0 %v1370
        %1434 = vmatpush1.bf16.msra.mxu0 %v1369
        %1435 = vmatprep.subr.bf16.mxu0 %v1372
        %1436 = vmatpush1.bf16.msra.mxu0 %v1371
        %1437 = vmatprep.subr.bf16.mxu0 %v1374
        %1438 = vmatpush1.bf16.msra.mxu0 %v1373
        %1439 = vmatprep.subr.bf16.mxu0 %v1376
        %1440 = vmatpush1.bf16.msra.mxu0 %v1375
        %1441 = vmatprep.subr.bf16.mxu0 %v1378
        %1442 = vmatpush1.bf16.msra.mxu0 %v1377
        %1443 = vmatprep.subr.bf16.mxu0 %v1380
        %1444 = vmatpush1.bf16.msra.mxu0 %v1379
        %1445 = vmatprep.subr.bf16.mxu0 %v1382
        %1446 = vmatpush1.bf16.msra.mxu0 %v1381
        %1447 = vmatprep.subr.bf16.mxu0 %v1384
        %1448 = vmatpush1.bf16.msra.mxu0 %v1383
        %1449 = vmatprep.subr.bf16.mxu0 %v1386
        %1450 = vmatpush1.bf16.msra.mxu0 %v1385
        %1451 = vmatprep.subr.bf16.mxu0 %v1388
        %1452 = vmatpush1.bf16.msra.mxu0 %v1387
        %1453 = vmatprep.subr.bf16.mxu0 %v1390
        %1454 = vmatpush1.bf16.msra.mxu0 %v1389
        %1455 = vmatprep.subr.bf16.mxu0 %v1392
        %1456 = vmatpush1.bf16.msra.mxu0 %v1391
        %1457 = vmatprep.mubr.bf16.mxu0 %v1262
        %1458 = vmatmul.mubr.bf16.gmra.mrb[0].mxu0 %v1259
        %v1459 = vpop.f32.mrb[0].mxu0
        %v1460 = vadd.f32 0.0, %v1459
        %v1461 = vpop.f32.mrb[0].mxu0
        %v1462 = vadd.f32 0.0, %v1461
        %v1463 = vpop.f32.mrb[0].mxu0
        %v1464 = vadd.f32 0.0, %v1463
        %v1465 = vpop.f32.mrb[0].mxu0
        %v1466 = vadd.f32 0.0, %v1465
        %1467 = vdwg.mxu0
        %v1468 = vadd.f32 %v1210, %v1460
        %v1469 = vadd.f32 %v1212, %v1462
        %v1470 = vadd.f32 %v1214, %v1464
        %v1471 = vadd.f32 %v1216, %v1466
        %s1472 = scalar_lea.vmem [#allocation12], 1
        %v1473 = vld [vmem:[%s1472] ss:$8 sm:$0x3]
        %v1475 = vlaneseq
        %v1476 = vshrl.u32 %v1475, 7
        %v1477 = vsub.s32 0, %v1476
        %v1478 = vrot.slane %v1473, %v1477
        %v1479 = vlaneseq
        %v1480 = vshrl.u32 %v1479, 7
        %v1481 = vsub.s32 1, %v1480
        %v1482 = vrot.slane %v1473, %v1481
        %v1485 = vadd.f32 %v1468, %v1478
        %v1486 = vadd.f32 %v1469, %v1482
        %v1487 = vadd.f32 %v1470, %v1478
        %v1488 = vadd.f32 %v1471, %v1482
        %v1489 = vmax.f32 %v1485, 0.0
        %v1490 = vmax.f32 %v1486, 0.0
        %v1491 = vmax.f32 %v1487, 0.0
        %v1492 = vmax.f32 %v1488, 0.0
        %v1493 = vpack.c.bf16 %v1491, %v1489
        %v1494 = vpack.c.bf16 %v1492, %v1490
        %v1497 = vunpack.c.l.b16 %v1493
        %v1498 = vunpack.c.l.b16 %v1494
        %v1499 = vunpack.c.h.b16 %v1493
        %v1500 = vunpack.c.h.b16 %v1494
        %v1501 = vpack.c.b16 %v1498, %v1497
        %v1502 = vpack.c.b16 %v1500, %v1499
        %v1504 = vshrl.u32 %v1501, 16
        %v1506 = vrot.slane %v1504, 7
        %v1507 = vshll.u32 %v1501, 16
        %v1509 = vor.u32 %v1506, %v1507
        %v1510 = vrot.slane %v1506, 4
        %v1512 = vshrl.u32 %v1502, 16
        %v1514 = vrot.slane %v1512, 7
        %v1515 = vshll.u32 %v1502, 16
        %v1517 = vor.u32 %v1514, %v1515
        %v1518 = vsel %vm662, %v1510, %v1517
        %v1519 = vrot.slane %v1514, 4
        %v1523 = vld [vmem:[#allocation3] sm:$0xff]
        %v1524 = vsel %vm689, %v1509, %v1523
        %1525 = vst [vmem:[#allocation3] sm:$0xff] %v1524
        %1526 = vst [vmem:[#allocation3 + $0x8] sm:$0xff] %v1518
        %v1527 = vld [vmem:[#allocation3 + $0x10] sm:$0x11]
        %v1528 = vsel %vm699, %v1519, %v1527
        %1529 = vst [vmem:[#allocation3 + $0x10] sm:$0x11] %v1528
        %v1530 = vld [vmem:[#allocation3] sm:$0xff]
        %v1531 = vld [vmem:[#allocation3 + $0x8] sm:$0xff]
        %s1532 = scalar_lea.vmem [#allocation10], 768
        %v1533 = vld [vmem:[%s1532] sm:$0xff]
        %v1534 = vld [vmem:[%s1532 + $0x8] sm:$0xff]
        %v1535 = vld [vmem:[%s1532 + $0x10] sm:$0xff]
        %v1536 = vld [vmem:[%s1532 + $0x18] sm:$0xff]
        %v1537 = vld [vmem:[%s1532 + $0x20] sm:$0xff]
        %v1538 = vld [vmem:[%s1532 + $0x28] sm:$0xff]
        %v1539 = vld [vmem:[%s1532 + $0x30] sm:$0xff]
        %v1540 = vld [vmem:[%s1532 + $0x38] sm:$0xff]
        %v1541 = vld [vmem:[%s1532 + $0x40] sm:$0xff]
        %v1542 = vld [vmem:[%s1532 + $0x48] sm:$0xff]
        %v1543 = vld [vmem:[%s1532 + $0x50] sm:$0xff]
        %v1544 = vld [vmem:[%s1532 + $0x58] sm:$0xff]
        %v1545 = vld [vmem:[%s1532 + $0x60] sm:$0xff]
        %v1546 = vld [vmem:[%s1532 + $0x68] sm:$0xff]
        %v1547 = vld [vmem:[%s1532 + $0x70] sm:$0xff]
        %v1548 = vld [vmem:[%s1532 + $0x78] sm:$0xff]
        %v1549 = vld [vmem:[%s1532 + $0x80] sm:$0xff]
        %v1550 = vld [vmem:[%s1532 + $0x88] sm:$0xff]
        %v1551 = vld [vmem:[%s1532 + $0x90] sm:$0xff]
        %v1552 = vld [vmem:[%s1532 + $0x98] sm:$0xff]
        %v1553 = vld [vmem:[%s1532 + $0xa0] sm:$0xff]
        %v1554 = vld [vmem:[%s1532 + $0xa8] sm:$0xff]
        %v1555 = vld [vmem:[%s1532 + $0xb0] sm:$0xff]
        %v1556 = vld [vmem:[%s1532 + $0xb8] sm:$0xff]
        %v1557 = vld [vmem:[%s1532 + $0xc0] sm:$0xff]
        %v1558 = vld [vmem:[%s1532 + $0xc8] sm:$0xff]
        %v1559 = vld [vmem:[%s1532 + $0xd0] sm:$0xff]
        %v1560 = vld [vmem:[%s1532 + $0xd8] sm:$0xff]
        %v1561 = vld [vmem:[%s1532 + $0xe0] sm:$0xff]
        %v1562 = vld [vmem:[%s1532 + $0xe8] sm:$0xff]
        %v1563 = vld [vmem:[%s1532 + $0xf0] sm:$0xff]
        %v1564 = vld [vmem:[%s1532 + $0xf8] sm:$0xff]
        %v1565 = vld [vmem:[#allocation3 + $0x10] sm:$0x11]
        %s1566 = scalar_lea.vmem [#allocation10], 1024
        %v1567 = vld [vmem:[%s1566] sm:$0xff]
        %v1568 = vld [vmem:[%s1566 + $0x8] sm:$0xff]
        %v1569 = vld [vmem:[%s1566 + $0x10] sm:$0xff]
        %v1570 = vld [vmem:[%s1566 + $0x18] sm:$0xff]
        %v1571 = vld [vmem:[%s1566 + $0x20] sm:$0xff]
        %v1572 = vld [vmem:[%s1566 + $0x28] sm:$0xff]
        %v1573 = vld [vmem:[%s1566 + $0x30] sm:$0xff]
        %v1574 = vld [vmem:[%s1566 + $0x38] sm:$0xff]
        %v1575 = vld [vmem:[%s1566 + $0x40] sm:$0xff]
        %v1576 = vld [vmem:[%s1566 + $0x48] sm:$0xff]
        %v1577 = vld [vmem:[%s1566 + $0x50] sm:$0xff]
        %v1578 = vld [vmem:[%s1566 + $0x58] sm:$0xff]
        %v1579 = vld [vmem:[%s1566 + $0x60] sm:$0xff]
        %v1580 = vld [vmem:[%s1566 + $0x68] sm:$0xff]
        %v1581 = vld [vmem:[%s1566 + $0x70] sm:$0xff]
        %v1582 = vld [vmem:[%s1566 + $0x78] sm:$0xff]
        %v1583 = vld [vmem:[%s1566 + $0x80] sm:$0xff]
        %v1584 = vld [vmem:[%s1566 + $0x88] sm:$0xff]
        %v1585 = vld [vmem:[%s1566 + $0x90] sm:$0xff]
        %v1586 = vld [vmem:[%s1566 + $0x98] sm:$0xff]
        %v1587 = vld [vmem:[%s1566 + $0xa0] sm:$0xff]
        %v1588 = vld [vmem:[%s1566 + $0xa8] sm:$0xff]
        %v1589 = vld [vmem:[%s1566 + $0xb0] sm:$0xff]
        %v1590 = vld [vmem:[%s1566 + $0xb8] sm:$0xff]
        %v1591 = vld [vmem:[%s1566 + $0xc0] sm:$0xff]
        %v1592 = vld [vmem:[%s1566 + $0xc8] sm:$0xff]
        %v1593 = vld [vmem:[%s1566 + $0xd0] sm:$0xff]
        %v1594 = vld [vmem:[%s1566 + $0xd8] sm:$0xff]
        %v1595 = vld [vmem:[%s1566 + $0xe0] sm:$0xff]
        %v1596 = vld [vmem:[%s1566 + $0xe8] sm:$0xff]
        %v1597 = vld [vmem:[%s1566 + $0xf0] sm:$0xff]
        %v1598 = vld [vmem:[%s1566 + $0xf8] sm:$0xff]
        %v1602 = vunpack.c.l.b16 %v1530
        %v1603 = vunpack.c.h.b16 %v1530
        %v1604 = vunpack.c.l.b16 %v1531
        %v1605 = vunpack.c.h.b16 %v1531
        %v1606 = vunpack.c.l.b16 %v1565
        %v1607 = vunpack.c.h.b16 %v1565
        %v1608 = vpack.c.b16 %v1604, %v1602
        %v1609 = vpack.c.b16 %v1605, %v1603
        %v1610 = vpack.c.b16 %v1606, %v1606
        %v1611 = vpack.c.b16 %v1607, %v1607
        %v1613 = vshrl.u32 %v1608, 16
        %v1615 = vshll.u32 %v1608, 16
        %v1617 = vrot.slane %v1615, 1
        %v1618 = vor.u32 %v1613, %v1617
        %v1620 = vshll.u32 %v1610, 16
        %v1622 = vrot.slane %v1620, 1
        %v1623 = vsel %vm362, %v1618, %v1622
        %v1625 = vshrl.u32 %v1609, 16
        %v1627 = vshll.u32 %v1609, 16
        %v1629 = vrot.slane %v1627, 1
        %v1630 = vor.u32 %v1625, %v1629
        %v1632 = vshll.u32 %v1611, 16
        %v1634 = vrot.slane %v1632, 1
        %v1635 = vsel %vm362, %v1630, %v1634
        %v1670 = vunpack.c.l.b16 %v1567
        %v1671 = vunpack.c.h.b16 %v1567
        %v1672 = vunpack.c.l.b16 %v1568
        %v1673 = vunpack.c.h.b16 %v1568
        %v1674 = vunpack.c.l.b16 %v1569
        %v1675 = vunpack.c.h.b16 %v1569
        %v1676 = vunpack.c.l.b16 %v1570
        %v1677 = vunpack.c.h.b16 %v1570
        %v1678 = vunpack.c.l.b16 %v1571
        %v1679 = vunpack.c.h.b16 %v1571
        %v1680 = vunpack.c.l.b16 %v1572
        %v1681 = vunpack.c.h.b16 %v1572
        %v1682 = vunpack.c.l.b16 %v1573
        %v1683 = vunpack.c.h.b16 %v1573
        %v1684 = vunpack.c.l.b16 %v1574
        %v1685 = vunpack.c.h.b16 %v1574
        %v1686 = vunpack.c.l.b16 %v1575
        %v1687 = vunpack.c.h.b16 %v1575
        %v1688 = vunpack.c.l.b16 %v1576
        %v1689 = vunpack.c.h.b16 %v1576
        %v1690 = vunpack.c.l.b16 %v1577
        %v1691 = vunpack.c.h.b16 %v1577
        %v1692 = vunpack.c.l.b16 %v1578
        %v1693 = vunpack.c.h.b16 %v1578
        %v1694 = vunpack.c.l.b16 %v1579
        %v1695 = vunpack.c.h.b16 %v1579
        %v1696 = vunpack.c.l.b16 %v1580
        %v1697 = vunpack.c.h.b16 %v1580
        %v1698 = vunpack.c.l.b16 %v1581
        %v1699 = vunpack.c.h.b16 %v1581
        %v1700 = vunpack.c.l.b16 %v1582
        %v1701 = vunpack.c.h.b16 %v1582
        %v1702 = vunpack.c.l.b16 %v1583
        %v1703 = vunpack.c.h.b16 %v1583
        %v1704 = vunpack.c.l.b16 %v1584
        %v1705 = vunpack.c.h.b16 %v1584
        %v1706 = vunpack.c.l.b16 %v1585
        %v1707 = vunpack.c.h.b16 %v1585
        %v1708 = vunpack.c.l.b16 %v1586
        %v1709 = vunpack.c.h.b16 %v1586
        %v1710 = vunpack.c.l.b16 %v1587
        %v1711 = vunpack.c.h.b16 %v1587
        %v1712 = vunpack.c.l.b16 %v1588
        %v1713 = vunpack.c.h.b16 %v1588
        %v1714 = vunpack.c.l.b16 %v1589
        %v1715 = vunpack.c.h.b16 %v1589
        %v1716 = vunpack.c.l.b16 %v1590
        %v1717 = vunpack.c.h.b16 %v1590
        %v1718 = vunpack.c.l.b16 %v1591
        %v1719 = vunpack.c.h.b16 %v1591
        %v1720 = vunpack.c.l.b16 %v1592
        %v1721 = vunpack.c.h.b16 %v1592
        %v1722 = vunpack.c.l.b16 %v1593
        %v1723 = vunpack.c.h.b16 %v1593
        %v1724 = vunpack.c.l.b16 %v1594
        %v1725 = vunpack.c.h.b16 %v1594
        %v1726 = vunpack.c.l.b16 %v1595
        %v1727 = vunpack.c.h.b16 %v1595
        %v1728 = vunpack.c.l.b16 %v1596
        %v1729 = vunpack.c.h.b16 %v1596
        %v1730 = vunpack.c.l.b16 %v1597
        %v1731 = vunpack.c.h.b16 %v1597
        %v1732 = vunpack.c.l.b16 %v1598
        %v1733 = vunpack.c.h.b16 %v1598
        %v1734 = vpack.c.b16 %v1672, %v1670
        %v1735 = vpack.c.b16 %v1673, %v1671
        %v1736 = vpack.c.b16 %v1676, %v1674
        %v1737 = vpack.c.b16 %v1677, %v1675
        %v1738 = vpack.c.b16 %v1680, %v1678
        %v1739 = vpack.c.b16 %v1681, %v1679
        %v1740 = vpack.c.b16 %v1684, %v1682
        %v1741 = vpack.c.b16 %v1685, %v1683
        %v1742 = vpack.c.b16 %v1688, %v1686
        %v1743 = vpack.c.b16 %v1689, %v1687
        %v1744 = vpack.c.b16 %v1692, %v1690
        %v1745 = vpack.c.b16 %v1693, %v1691
        %v1746 = vpack.c.b16 %v1696, %v1694
        %v1747 = vpack.c.b16 %v1697, %v1695
        %v1748 = vpack.c.b16 %v1700, %v1698
        %v1749 = vpack.c.b16 %v1701, %v1699
        %v1750 = vpack.c.b16 %v1704, %v1702
        %v1751 = vpack.c.b16 %v1705, %v1703
        %v1752 = vpack.c.b16 %v1708, %v1706
        %v1753 = vpack.c.b16 %v1709, %v1707
        %v1754 = vpack.c.b16 %v1712, %v1710
        %v1755 = vpack.c.b16 %v1713, %v1711
        %v1756 = vpack.c.b16 %v1716, %v1714
        %v1757 = vpack.c.b16 %v1717, %v1715
        %v1758 = vpack.c.b16 %v1720, %v1718
        %v1759 = vpack.c.b16 %v1721, %v1719
        %v1760 = vpack.c.b16 %v1724, %v1722
        %v1761 = vpack.c.b16 %v1725, %v1723
        %v1762 = vpack.c.b16 %v1728, %v1726
        %v1763 = vpack.c.b16 %v1729, %v1727
        %v1764 = vpack.c.b16 %v1732, %v1730
        %v1765 = vpack.c.b16 %v1733, %v1731
        %1798 = vmatprep.subr.bf16.mxu0 %v1735
        %1799 = vmatpush1.bf16.msra.mxu0 %v1734
        %1800 = vmatprep.subr.bf16.mxu0 %v1737
        %1801 = vmatpush1.bf16.msra.mxu0 %v1736
        %1802 = vmatprep.subr.bf16.mxu0 %v1739
        %1803 = vmatpush1.bf16.msra.mxu0 %v1738
        %1804 = vmatprep.subr.bf16.mxu0 %v1741
        %1805 = vmatpush1.bf16.msra.mxu0 %v1740
        %1806 = vmatprep.subr.bf16.mxu0 %v1743
        %1807 = vmatpush1.bf16.msra.mxu0 %v1742
        %1808 = vmatprep.subr.bf16.mxu0 %v1745
        %1809 = vmatpush1.bf16.msra.mxu0 %v1744
        %1810 = vmatprep.subr.bf16.mxu0 %v1747
        %1811 = vmatpush1.bf16.msra.mxu0 %v1746
        %1812 = vmatprep.subr.bf16.mxu0 %v1749
        %1813 = vmatpush1.bf16.msra.mxu0 %v1748
        %1814 = vmatprep.subr.bf16.mxu0 %v1751
        %1815 = vmatpush1.bf16.msra.mxu0 %v1750
        %1816 = vmatprep.subr.bf16.mxu0 %v1753
        %1817 = vmatpush1.bf16.msra.mxu0 %v1752
        %1818 = vmatprep.subr.bf16.mxu0 %v1755
        %1819 = vmatpush1.bf16.msra.mxu0 %v1754
        %1820 = vmatprep.subr.bf16.mxu0 %v1757
        %1821 = vmatpush1.bf16.msra.mxu0 %v1756
        %1822 = vmatprep.subr.bf16.mxu0 %v1759
        %1823 = vmatpush1.bf16.msra.mxu0 %v1758
        %1824 = vmatprep.subr.bf16.mxu0 %v1761
        %1825 = vmatpush1.bf16.msra.mxu0 %v1760
        %1826 = vmatprep.subr.bf16.mxu0 %v1763
        %1827 = vmatpush1.bf16.msra.mxu0 %v1762
        %1828 = vmatprep.subr.bf16.mxu0 %v1765
        %1829 = vmatpush1.bf16.msra.mxu0 %v1764
        %1830 = vmatprep.mubr.bf16.mxu0 %v1635
        %1831 = vmatmul.mubr.bf16.gmra.mrb[0].mxu0 %v1623
        %v1832 = vpop.f32.mrb[0].mxu0
        %v1833 = vadd.f32 0.0, %v1832
        %v1834 = vpop.f32.mrb[0].mxu0
        %v1835 = vadd.f32 0.0, %v1834
        %v1836 = vpop.f32.mrb[0].mxu0
        %v1837 = vadd.f32 0.0, %v1836
        %v1838 = vpop.f32.mrb[0].mxu0
        %v1839 = vadd.f32 0.0, %v1838
        %1840 = vdwg.mxu0
        %v1875 = vunpack.c.l.b16 %v1533
        %v1876 = vunpack.c.h.b16 %v1533
        %v1877 = vunpack.c.l.b16 %v1534
        %v1878 = vunpack.c.h.b16 %v1534
        %v1879 = vunpack.c.l.b16 %v1535
        %v1880 = vunpack.c.h.b16 %v1535
        %v1881 = vunpack.c.l.b16 %v1536
        %v1882 = vunpack.c.h.b16 %v1536
        %v1883 = vunpack.c.l.b16 %v1537
        %v1884 = vunpack.c.h.b16 %v1537
        %v1885 = vunpack.c.l.b16 %v1538
        %v1886 = vunpack.c.h.b16 %v1538
        %v1887 = vunpack.c.l.b16 %v1539
        %v1888 = vunpack.c.h.b16 %v1539
        %v1889 = vunpack.c.l.b16 %v1540
        %v1890 = vunpack.c.h.b16 %v1540
        %v1891 = vunpack.c.l.b16 %v1541
        %v1892 = vunpack.c.h.b16 %v1541
        %v1893 = vunpack.c.l.b16 %v1542
        %v1894 = vunpack.c.h.b16 %v1542
        %v1895 = vunpack.c.l.b16 %v1543
        %v1896 = vunpack.c.h.b16 %v1543
        %v1897 = vunpack.c.l.b16 %v1544
        %v1898 = vunpack.c.h.b16 %v1544
        %v1899 = vunpack.c.l.b16 %v1545
        %v1900 = vunpack.c.h.b16 %v1545
        %v1901 = vunpack.c.l.b16 %v1546
        %v1902 = vunpack.c.h.b16 %v1546
        %v1903 = vunpack.c.l.b16 %v1547
        %v1904 = vunpack.c.h.b16 %v1547
        %v1905 = vunpack.c.l.b16 %v1548
        %v1906 = vunpack.c.h.b16 %v1548
        %v1907 = vunpack.c.l.b16 %v1549
        %v1908 = vunpack.c.h.b16 %v1549
        %v1909 = vunpack.c.l.b16 %v1550
        %v1910 = vunpack.c.h.b16 %v1550
        %v1911 = vunpack.c.l.b16 %v1551
        %v1912 = vunpack.c.h.b16 %v1551
        %v1913 = vunpack.c.l.b16 %v1552
        %v1914 = vunpack.c.h.b16 %v1552
        %v1915 = vunpack.c.l.b16 %v1553
        %v1916 = vunpack.c.h.b16 %v1553
        %v1917 = vunpack.c.l.b16 %v1554
        %v1918 = vunpack.c.h.b16 %v1554
        %v1919 = vunpack.c.l.b16 %v1555
        %v1920 = vunpack.c.h.b16 %v1555
        %v1921 = vunpack.c.l.b16 %v1556
        %v1922 = vunpack.c.h.b16 %v1556
        %v1923 = vunpack.c.l.b16 %v1557
        %v1924 = vunpack.c.h.b16 %v1557
        %v1925 = vunpack.c.l.b16 %v1558
        %v1926 = vunpack.c.h.b16 %v1558
        %v1927 = vunpack.c.l.b16 %v1559
        %v1928 = vunpack.c.h.b16 %v1559
        %v1929 = vunpack.c.l.b16 %v1560
        %v1930 = vunpack.c.h.b16 %v1560
        %v1931 = vunpack.c.l.b16 %v1561
        %v1932 = vunpack.c.h.b16 %v1561
        %v1933 = vunpack.c.l.b16 %v1562
        %v1934 = vunpack.c.h.b16 %v1562
        %v1935 = vunpack.c.l.b16 %v1563
        %v1936 = vunpack.c.h.b16 %v1563
        %v1937 = vunpack.c.l.b16 %v1564
        %v1938 = vunpack.c.h.b16 %v1564
        %v1939 = vpack.c.b16 %v1877, %v1875
        %v1940 = vpack.c.b16 %v1878, %v1876
        %v1941 = vpack.c.b16 %v1881, %v1879
        %v1942 = vpack.c.b16 %v1882, %v1880
        %v1943 = vpack.c.b16 %v1885, %v1883
        %v1944 = vpack.c.b16 %v1886, %v1884
        %v1945 = vpack.c.b16 %v1889, %v1887
        %v1946 = vpack.c.b16 %v1890, %v1888
        %v1947 = vpack.c.b16 %v1893, %v1891
        %v1948 = vpack.c.b16 %v1894, %v1892
        %v1949 = vpack.c.b16 %v1897, %v1895
        %v1950 = vpack.c.b16 %v1898, %v1896
        %v1951 = vpack.c.b16 %v1901, %v1899
        %v1952 = vpack.c.b16 %v1902, %v1900
        %v1953 = vpack.c.b16 %v1905, %v1903
        %v1954 = vpack.c.b16 %v1906, %v1904
        %v1955 = vpack.c.b16 %v1909, %v1907
        %v1956 = vpack.c.b16 %v1910, %v1908
        %v1957 = vpack.c.b16 %v1913, %v1911
        %v1958 = vpack.c.b16 %v1914, %v1912
        %v1959 = vpack.c.b16 %v1917, %v1915
        %v1960 = vpack.c.b16 %v1918, %v1916
        %v1961 = vpack.c.b16 %v1921, %v1919
        %v1962 = vpack.c.b16 %v1922, %v1920
        %v1963 = vpack.c.b16 %v1925, %v1923
        %v1964 = vpack.c.b16 %v1926, %v1924
        %v1965 = vpack.c.b16 %v1929, %v1927
        %v1966 = vpack.c.b16 %v1930, %v1928
        %v1967 = vpack.c.b16 %v1933, %v1931
        %v1968 = vpack.c.b16 %v1934, %v1932
        %v1969 = vpack.c.b16 %v1937, %v1935
        %v1970 = vpack.c.b16 %v1938, %v1936
        %2003 = vmatprep.subr.bf16.mxu0 %v1940
        %2004 = vmatpush1.bf16.msra.mxu0 %v1939
        %2005 = vmatprep.subr.bf16.mxu0 %v1942
        %2006 = vmatpush1.bf16.msra.mxu0 %v1941
        %2007 = vmatprep.subr.bf16.mxu0 %v1944
        %2008 = vmatpush1.bf16.msra.mxu0 %v1943
        %2009 = vmatprep.subr.bf16.mxu0 %v1946
        %2010 = vmatpush1.bf16.msra.mxu0 %v1945
        %2011 = vmatprep.subr.bf16.mxu0 %v1948
        %2012 = vmatpush1.bf16.msra.mxu0 %v1947
        %2013 = vmatprep.subr.bf16.mxu0 %v1950
        %2014 = vmatpush1.bf16.msra.mxu0 %v1949
        %2015 = vmatprep.subr.bf16.mxu0 %v1952
        %2016 = vmatpush1.bf16.msra.mxu0 %v1951
        %2017 = vmatprep.subr.bf16.mxu0 %v1954
        %2018 = vmatpush1.bf16.msra.mxu0 %v1953
        %2019 = vmatprep.subr.bf16.mxu0 %v1956
        %2020 = vmatpush1.bf16.msra.mxu0 %v1955
        %2021 = vmatprep.subr.bf16.mxu0 %v1958
        %2022 = vmatpush1.bf16.msra.mxu0 %v1957
        %2023 = vmatprep.subr.bf16.mxu0 %v1960
        %2024 = vmatpush1.bf16.msra.mxu0 %v1959
        %2025 = vmatprep.subr.bf16.mxu0 %v1962
        %2026 = vmatpush1.bf16.msra.mxu0 %v1961
        %2027 = vmatprep.subr.bf16.mxu0 %v1964
        %2028 = vmatpush1.bf16.msra.mxu0 %v1963
        %2029 = vmatprep.subr.bf16.mxu0 %v1966
        %2030 = vmatpush1.bf16.msra.mxu0 %v1965
        %2031 = vmatprep.subr.bf16.mxu0 %v1968
        %2032 = vmatpush1.bf16.msra.mxu0 %v1967
        %2033 = vmatprep.subr.bf16.mxu0 %v1970
        %2034 = vmatpush1.bf16.msra.mxu0 %v1969
        %2035 = vmatprep.mubr.bf16.mxu0 %v1609
        %2036 = vmatmul.mubr.bf16.gmra.mrb[0].mxu0 %v1608
        %v2037 = vpop.f32.mrb[0].mxu0
        %v2038 = vadd.f32 %v1833, %v2037
        %v2039 = vpop.f32.mrb[0].mxu0
        %v2040 = vadd.f32 %v1835, %v2039
        %v2041 = vpop.f32.mrb[0].mxu0
        %v2042 = vadd.f32 %v1837, %v2041
        %v2043 = vpop.f32.mrb[0].mxu0
        %v2044 = vadd.f32 %v1839, %v2043
        %2045 = vdwg.mxu0
        %v2046 = vld [vmem:[#allocation3] sm:$0xee]
        %s2047 = scalar_lea.vmem [#allocation10], 1280
        %v2048 = vld [vmem:[%s2047] sm:$0xff]
        %v2049 = vld [vmem:[%s2047 + $0x8] sm:$0xff]
        %v2050 = vld [vmem:[%s2047 + $0x10] sm:$0xff]
        %v2051 = vld [vmem:[%s2047 + $0x18] sm:$0xff]
        %v2052 = vld [vmem:[%s2047 + $0x20] sm:$0xff]
        %v2053 = vld [vmem:[%s2047 + $0x28] sm:$0xff]
        %v2054 = vld [vmem:[%s2047 + $0x30] sm:$0xff]
        %v2055 = vld [vmem:[%s2047 + $0x38] sm:$0xff]
        %v2056 = vld [vmem:[%s2047 + $0x40] sm:$0xff]
        %v2057 = vld [vmem:[%s2047 + $0x48] sm:$0xff]
        %v2058 = vld [vmem:[%s2047 + $0x50] sm:$0xff]
        %v2059 = vld [vmem:[%s2047 + $0x58] sm:$0xff]
        %v2060 = vld [vmem:[%s2047 + $0x60] sm:$0xff]
        %v2061 = vld [vmem:[%s2047 + $0x68] sm:$0xff]
        %v2062 = vld [vmem:[%s2047 + $0x70] sm:$0xff]
        %v2063 = vld [vmem:[%s2047 + $0x78] sm:$0xff]
        %v2064 = vld [vmem:[%s2047 + $0x80] sm:$0xff]
        %v2065 = vld [vmem:[%s2047 + $0x88] sm:$0xff]
        %v2066 = vld [vmem:[%s2047 + $0x90] sm:$0xff]
        %v2067 = vld [vmem:[%s2047 + $0x98] sm:$0xff]
        %v2068 = vld [vmem:[%s2047 + $0xa0] sm:$0xff]
        %v2069 = vld [vmem:[%s2047 + $0xa8] sm:$0xff]
        %v2070 = vld [vmem:[%s2047 + $0xb0] sm:$0xff]
        %v2071 = vld [vmem:[%s2047 + $0xb8] sm:$0xff]
        %v2072 = vld [vmem:[%s2047 + $0xc0] sm:$0xff]
        %v2073 = vld [vmem:[%s2047 + $0xc8] sm:$0xff]
        %v2074 = vld [vmem:[%s2047 + $0xd0] sm:$0xff]
        %v2075 = vld [vmem:[%s2047 + $0xd8] sm:$0xff]
        %v2076 = vld [vmem:[%s2047 + $0xe0] sm:$0xff]
        %v2077 = vld [vmem:[%s2047 + $0xe8] sm:$0xff]
        %v2078 = vld [vmem:[%s2047 + $0xf0] sm:$0xff]
        %v2079 = vld [vmem:[%s2047 + $0xf8] sm:$0xff]
        %v2081 = vunpack.c.l.b16 %v2046
        %v2082 = vunpack.c.h.b16 %v2046
        %v2083 = vpack.c.b16 %v1604, %v2081
        %v2084 = vpack.c.b16 %v1605, %v2082
        %v2085 = vrot.slane %v2083, 1
        %v2086 = vrot.slane %v1610, 1
        %v2087 = vsel %vm538, %v2085, %v2086
        %v2088 = vrot.slane %v2084, 1
        %v2089 = vrot.slane %v1611, 1
        %v2090 = vsel %vm538, %v2088, %v2089
        %v2125 = vunpack.c.l.b16 %v2048
        %v2126 = vunpack.c.h.b16 %v2048
        %v2127 = vunpack.c.l.b16 %v2049
        %v2128 = vunpack.c.h.b16 %v2049
        %v2129 = vunpack.c.l.b16 %v2050
        %v2130 = vunpack.c.h.b16 %v2050
        %v2131 = vunpack.c.l.b16 %v2051
        %v2132 = vunpack.c.h.b16 %v2051
        %v2133 = vunpack.c.l.b16 %v2052
        %v2134 = vunpack.c.h.b16 %v2052
        %v2135 = vunpack.c.l.b16 %v2053
        %v2136 = vunpack.c.h.b16 %v2053
        %v2137 = vunpack.c.l.b16 %v2054
        %v2138 = vunpack.c.h.b16 %v2054
        %v2139 = vunpack.c.l.b16 %v2055
        %v2140 = vunpack.c.h.b16 %v2055
        %v2141 = vunpack.c.l.b16 %v2056
        %v2142 = vunpack.c.h.b16 %v2056
        %v2143 = vunpack.c.l.b16 %v2057
        %v2144 = vunpack.c.h.b16 %v2057
        %v2145 = vunpack.c.l.b16 %v2058
        %v2146 = vunpack.c.h.b16 %v2058
        %v2147 = vunpack.c.l.b16 %v2059
        %v2148 = vunpack.c.h.b16 %v2059
        %v2149 = vunpack.c.l.b16 %v2060
        %v2150 = vunpack.c.h.b16 %v2060
        %v2151 = vunpack.c.l.b16 %v2061
        %v2152 = vunpack.c.h.b16 %v2061
        %v2153 = vunpack.c.l.b16 %v2062
        %v2154 = vunpack.c.h.b16 %v2062
        %v2155 = vunpack.c.l.b16 %v2063
        %v2156 = vunpack.c.h.b16 %v2063
        %v2157 = vunpack.c.l.b16 %v2064
        %v2158 = vunpack.c.h.b16 %v2064
        %v2159 = vunpack.c.l.b16 %v2065
        %v2160 = vunpack.c.h.b16 %v2065
        %v2161 = vunpack.c.l.b16 %v2066
        %v2162 = vunpack.c.h.b16 %v2066
        %v2163 = vunpack.c.l.b16 %v2067
        %v2164 = vunpack.c.h.b16 %v2067
        %v2165 = vunpack.c.l.b16 %v2068
        %v2166 = vunpack.c.h.b16 %v2068
        %v2167 = vunpack.c.l.b16 %v2069
        %v2168 = vunpack.c.h.b16 %v2069
        %v2169 = vunpack.c.l.b16 %v2070
        %v2170 = vunpack.c.h.b16 %v2070
        %v2171 = vunpack.c.l.b16 %v2071
        %v2172 = vunpack.c.h.b16 %v2071
        %v2173 = vunpack.c.l.b16 %v2072
        %v2174 = vunpack.c.h.b16 %v2072
        %v2175 = vunpack.c.l.b16 %v2073
        %v2176 = vunpack.c.h.b16 %v2073
        %v2177 = vunpack.c.l.b16 %v2074
        %v2178 = vunpack.c.h.b16 %v2074
        %v2179 = vunpack.c.l.b16 %v2075
        %v2180 = vunpack.c.h.b16 %v2075
        %v2181 = vunpack.c.l.b16 %v2076
        %v2182 = vunpack.c.h.b16 %v2076
        %v2183 = vunpack.c.l.b16 %v2077
        %v2184 = vunpack.c.h.b16 %v2077
        %v2185 = vunpack.c.l.b16 %v2078
        %v2186 = vunpack.c.h.b16 %v2078
        %v2187 = vunpack.c.l.b16 %v2079
        %v2188 = vunpack.c.h.b16 %v2079
        %v2189 = vpack.c.b16 %v2127, %v2125
        %v2190 = vpack.c.b16 %v2128, %v2126
        %v2191 = vpack.c.b16 %v2131, %v2129
        %v2192 = vpack.c.b16 %v2132, %v2130
        %v2193 = vpack.c.b16 %v2135, %v2133
        %v2194 = vpack.c.b16 %v2136, %v2134
        %v2195 = vpack.c.b16 %v2139, %v2137
        %v2196 = vpack.c.b16 %v2140, %v2138
        %v2197 = vpack.c.b16 %v2143, %v2141
        %v2198 = vpack.c.b16 %v2144, %v2142
        %v2199 = vpack.c.b16 %v2147, %v2145
        %v2200 = vpack.c.b16 %v2148, %v2146
        %v2201 = vpack.c.b16 %v2151, %v2149
        %v2202 = vpack.c.b16 %v2152, %v2150
        %v2203 = vpack.c.b16 %v2155, %v2153
        %v2204 = vpack.c.b16 %v2156, %v2154
        %v2205 = vpack.c.b16 %v2159, %v2157
        %v2206 = vpack.c.b16 %v2160, %v2158
        %v2207 = vpack.c.b16 %v2163, %v2161
        %v2208 = vpack.c.b16 %v2164, %v2162
        %v2209 = vpack.c.b16 %v2167, %v2165
        %v2210 = vpack.c.b16 %v2168, %v2166
        %v2211 = vpack.c.b16 %v2171, %v2169
        %v2212 = vpack.c.b16 %v2172, %v2170
        %v2213 = vpack.c.b16 %v2175, %v2173
        %v2214 = vpack.c.b16 %v2176, %v2174
        %v2215 = vpack.c.b16 %v2179, %v2177
        %v2216 = vpack.c.b16 %v2180, %v2178
        %v2217 = vpack.c.b16 %v2183, %v2181
        %v2218 = vpack.c.b16 %v2184, %v2182
        %v2219 = vpack.c.b16 %v2187, %v2185
        %v2220 = vpack.c.b16 %v2188, %v2186
        %2253 = vmatprep.subr.bf16.mxu0 %v2190
        %2254 = vmatpush1.bf16.msra.mxu0 %v2189
        %2255 = vmatprep.subr.bf16.mxu0 %v2192
        %2256 = vmatpush1.bf16.msra.mxu0 %v2191
        %2257 = vmatprep.subr.bf16.mxu0 %v2194
        %2258 = vmatpush1.bf16.msra.mxu0 %v2193
        %2259 = vmatprep.subr.bf16.mxu0 %v2196
        %2260 = vmatpush1.bf16.msra.mxu0 %v2195
        %2261 = vmatprep.subr.bf16.mxu0 %v2198
        %2262 = vmatpush1.bf16.msra.mxu0 %v2197
        %2263 = vmatprep.subr.bf16.mxu0 %v2200
        %2264 = vmatpush1.bf16.msra.mxu0 %v2199
        %2265 = vmatprep.subr.bf16.mxu0 %v2202
        %2266 = vmatpush1.bf16.msra.mxu0 %v2201
        %2267 = vmatprep.subr.bf16.mxu0 %v2204
        %2268 = vmatpush1.bf16.msra.mxu0 %v2203
        %2269 = vmatprep.subr.bf16.mxu0 %v2206
        %2270 = vmatpush1.bf16.msra.mxu0 %v2205
        %2271 = vmatprep.subr.bf16.mxu0 %v2208
        %2272 = vmatpush1.bf16.msra.mxu0 %v2207
        %2273 = vmatprep.subr.bf16.mxu0 %v2210
        %2274 = vmatpush1.bf16.msra.mxu0 %v2209
        %2275 = vmatprep.subr.bf16.mxu0 %v2212
        %2276 = vmatpush1.bf16.msra.mxu0 %v2211
        %2277 = vmatprep.subr.bf16.mxu0 %v2214
        %2278 = vmatpush1.bf16.msra.mxu0 %v2213
        %2279 = vmatprep.subr.bf16.mxu0 %v2216
        %2280 = vmatpush1.bf16.msra.mxu0 %v2215
        %2281 = vmatprep.subr.bf16.mxu0 %v2218
        %2282 = vmatpush1.bf16.msra.mxu0 %v2217
        %2283 = vmatprep.subr.bf16.mxu0 %v2220
        %2284 = vmatpush1.bf16.msra.mxu0 %v2219
        %2285 = vmatprep.mubr.bf16.mxu0 %v2090
        %2286 = vmatmul.mubr.bf16.gmra.mrb[0].mxu0 %v2087
        %v2287 = vpop.f32.mrb[0].mxu0
        %v2288 = vadd.f32 0.0, %v2287
        %v2289 = vpop.f32.mrb[0].mxu0
        %v2290 = vadd.f32 0.0, %v2289
        %v2291 = vpop.f32.mrb[0].mxu0
        %v2292 = vadd.f32 0.0, %v2291
        %v2293 = vpop.f32.mrb[0].mxu0
        %v2294 = vadd.f32 0.0, %v2293
        %2295 = vdwg.mxu0
        %v2296 = vadd.f32 %v2038, %v2288
        %v2297 = vadd.f32 %v2040, %v2290
        %v2298 = vadd.f32 %v2042, %v2292
        %v2299 = vadd.f32 %v2044, %v2294
        %s2300 = scalar_lea.vmem [#allocation12], 2
        %v2301 = vld [vmem:[%s2300] ss:$8 sm:$0x3]
        %v2303 = vlaneseq
        %v2304 = vshrl.u32 %v2303, 7
        %v2305 = vsub.s32 0, %v2304
        %v2306 = vrot.slane %v2301, %v2305
        %v2307 = vlaneseq
        %v2308 = vshrl.u32 %v2307, 7
        %v2309 = vsub.s32 1, %v2308
        %v2310 = vrot.slane %v2301, %v2309
        %v2313 = vadd.f32 %v2296, %v2306
        %v2314 = vadd.f32 %v2297, %v2310
        %v2315 = vadd.f32 %v2298, %v2306
        %v2316 = vadd.f32 %v2299, %v2310
        %v2317 = vld [vmem:[#allocation2] sm:$0xff]
        %v2318 = vld [vmem:[#allocation2 + $0x8] sm:$0xff]
        %v2319 = vld [vmem:[#allocation2 + $0x10] sm:$0x11]
        %v2320 = vunpack.c.l.bf16 %v2317
        %v2321 = vunpack.c.h.bf16 %v2317
        %v2322 = vunpack.c.l.bf16 %v2318
        %v2323 = vunpack.c.h.bf16 %v2318
        %v2324 = vunpack.c.l.bf16 %v2319
        %v2325 = vunpack.c.h.bf16 %v2319
        %vm2332 = vcmask 1046528
        %v2333 = vrot.slane %v2320, 1
        %v2334 = vrot.slane %v2322, 1
        %v2335 = vsel %vm2332, %v2333, %v2334
        %v2336 = vrot.slane %v2321, 1
        %v2337 = vrot.slane %v2323, 1
        %v2338 = vsel %vm2332, %v2336, %v2337
        %v2339 = vrot.slane %v2324, 1
        %v2340 = vsel %vm2332, %v2334, %v2339
        %v2341 = vrot.slane %v2325, 1
        %v2342 = vsel %vm2332, %v2337, %v2341
        %v2347 = vadd.f32 %v2313, %v2335
        %v2348 = vadd.f32 %v2314, %v2338
        %v2349 = vadd.f32 %v2315, %v2340
        %v2350 = vadd.f32 %v2316, %v2342
        %v2351 = vmax.f32 %v2347, 0.0
        %v2352 = vmax.f32 %v2348, 0.0
        %v2353 = vmax.f32 %v2349, 0.0
        %v2354 = vmax.f32 %v2350, 0.0
        %v2355 = vpack.c.bf16 %v2353, %v2351
        %v2356 = vpack.c.bf16 %v2354, %v2352
        %v2359 = vunpack.c.l.b16 %v2355
        %v2360 = vunpack.c.l.b16 %v2356
        %v2361 = vunpack.c.h.b16 %v2355
        %v2362 = vunpack.c.h.b16 %v2356
        %v2363 = vpack.c.b16 %v2360, %v2359
        %v2364 = vpack.c.b16 %v2362, %v2361
        %v2366 = vshrl.u32 %v2363, 16
        %v2368 = vrot.slane %v2366, 7
        %v2369 = vshll.u32 %v2363, 16
        %v2371 = vor.u32 %v2368, %v2369
        %v2372 = vrot.slane %v2368, 4
        %v2374 = vshrl.u32 %v2364, 16
        %v2376 = vrot.slane %v2374, 7
        %v2377 = vshll.u32 %v2364, 16
        %v2379 = vor.u32 %v2376, %v2377
        %v2380 = vsel %vm662, %v2372, %v2379
        %v2381 = vrot.slane %v2376, 4
        %v2385 = vld [vmem:[#allocation4] sm:$0xff]
        %v2386 = vsel %vm689, %v2371, %v2385
        %2387 = vst [vmem:[#allocation4] sm:$0xff] %v2386
        %2388 = vst [vmem:[#allocation4 + $0x8] sm:$0xff] %v2380
        %v2389 = vld [vmem:[#allocation4 + $0x10] sm:$0x11]
        %v2390 = vsel %vm699, %v2381, %v2389
        %2391 = vst [vmem:[#allocation4 + $0x10] sm:$0x11] %v2390
        %v2392 = vld [vmem:[#allocation4] sm:$0xff]
        %v2393 = vld [vmem:[#allocation4 + $0x8] sm:$0xff]
        %v2394 = vld [vmem:[#allocation4 + $0x10] sm:$0x11]
        %v2395 = vld [vmem:[#allocation13] sm:$0xf]
        %v2399 = vunpack.c.l.b16 %v2392
        %v2400 = vunpack.c.h.b16 %v2392
        %v2401 = vunpack.c.l.b16 %v2393
        %v2402 = vunpack.c.h.b16 %v2393
        %v2403 = vunpack.c.l.b16 %v2394
        %v2404 = vunpack.c.h.b16 %v2394
        %v2405 = vpack.c.b16 %v2401, %v2399
        %v2406 = vpack.c.b16 %v2402, %v2400
        %v2407 = vpack.c.b16 %v2403, %v2403
        %v2408 = vpack.c.b16 %v2404, %v2404
        %vm2411 = vcmask 146432
        %v2413 = vsel %vm2411, %v2395, 0
        %vm2415 = vcmask 1040384
        %v2417 = vsel %vm2415, %v2407, 0
        %v2420 = vsel %vm2415, %v2408, 0
        %2422 = vmatprep.subr.bf16.mxu0 %v2406
        %2423 = vmatpush1.bf16.msra.mxu0 %v2405
        %2424 = vmatprep.subr.bf16.mxu0 %v2420
        %2425 = vmatpush1.bf16.msra.mxu0 %v2417
        %2426 = vmatprep.subr.bf16.mxu0 0
        %2427 = vmatpush1.bf16.msra.mxu0 0
        %2428 = vmatprep.subr.bf16.mxu0 0
        %2429 = vmatpush1.bf16.msra.mxu0 0
        %2430 = vmatprep.subr.bf16.mxu0 0
        %2431 = vmatpush1.bf16.msra.mxu0 0
        %2432 = vmatprep.subr.bf16.mxu0 0
        %2433 = vmatpush1.bf16.msra.mxu0 0
        %2434 = vmatprep.subr.bf16.mxu0 0
        %2435 = vmatpush1.bf16.msra.mxu0 0
        %2436 = vmatprep.subr.bf16.mxu0 0
        %2437 = vmatpush1.bf16.msra.mxu0 0
        %2438 = vmatprep.subr.bf16.mxu0 0
        %2439 = vmatpush1.bf16.msra.mxu0 0
        %2440 = vmatprep.subr.bf16.mxu0 0
        %2441 = vmatpush1.bf16.msra.mxu0 0
        %2442 = vmatprep.subr.bf16.mxu0 0
        %2443 = vmatpush1.bf16.msra.mxu0 0
        %2444 = vmatprep.subr.bf16.mxu0 0
        %2445 = vmatpush1.bf16.msra.mxu0 0
        %2446 = vmatprep.subr.bf16.mxu0 0
        %2447 = vmatpush1.bf16.msra.mxu0 0
        %2448 = vmatprep.subr.bf16.mxu0 0
        %2449 = vmatpush1.bf16.msra.mxu0 0
        %2450 = vmatprep.subr.bf16.mxu0 0
        %2451 = vmatpush1.bf16.msra.mxu0 0
        %2452 = vmatprep.subr.bf16.mxu0 0
        %2453 = vmatpush1.bf16.msra.mxu0 0
        %2454 = vmatprep.mubr.bf16.mxu0 0
        %2455 = vmatmul.mubr.bf16.gmra.mrb[0].mxu0 %v2413
        %v2456 = vpop.f32.mrb[0].mxu0
        %v2457 = vadd.f32 0.0, %v2456
        %v2458 = vpop.f32.mrb[0].mxu0
        %v2459 = vadd.f32 0.0, %v2458
        %v2460 = vpop.f32.mrb[0].mxu0
        %v2461 = vpop.f32.mrb[0].mxu0
        %2462 = vdwg.mxu0
        %v2463 = vpack.c.bf16 %v2457, %v2457
        %v2464 = vpack.c.bf16 %v2459, %v2459
        %s2465 = scalar_lea.vmem [#allocation10], 1536
        %v2466 = vld [vmem:[%s2465] sm:$0xff]
        %v2467 = vld [vmem:[%s2465 + $0x8] sm:$0xff]
        %v2468 = vld [vmem:[%s2465 + $0x10] sm:$0xff]
        %v2469 = vld [vmem:[%s2465 + $0x18] sm:$0xff]
        %v2470 = vld [vmem:[%s2465 + $0x20] sm:$0xff]
        %v2471 = vld [vmem:[%s2465 + $0x28] sm:$0xff]
        %v2472 = vld [vmem:[%s2465 + $0x30] sm:$0xff]
        %v2473 = vld [vmem:[%s2465 + $0x38] sm:$0xff]
        %v2474 = vld [vmem:[%s2465 + $0x40] sm:$0xff]
        %v2475 = vld [vmem:[%s2465 + $0x48] sm:$0xff]
        %v2476 = vld [vmem:[%s2465 + $0x50] sm:$0xff]
        %v2477 = vld [vmem:[%s2465 + $0x58] sm:$0xff]
        %v2478 = vld [vmem:[%s2465 + $0x60] sm:$0xff]
        %v2479 = vld [vmem:[%s2465 + $0x68] sm:$0xff]
        %v2480 = vld [vmem:[%s2465 + $0x70] sm:$0xff]
        %v2481 = vld [vmem:[%s2465 + $0x78] sm:$0xff]
        %v2482 = vld [vmem:[%s2465 + $0x80] sm:$0xff]
        %v2483 = vld [vmem:[%s2465 + $0x88] sm:$0xff]
        %v2484 = vld [vmem:[%s2465 + $0x90] sm:$0xff]
        %v2485 = vld [vmem:[%s2465 + $0x98] sm:$0xff]
        %v2486 = vld [vmem:[%s2465 + $0xa0] sm:$0xff]
        %v2487 = vld [vmem:[%s2465 + $0xa8] sm:$0xff]
        %v2488 = vld [vmem:[%s2465 + $0xb0] sm:$0xff]
        %v2489 = vld [vmem:[%s2465 + $0xb8] sm:$0xff]
        %v2490 = vld [vmem:[%s2465 + $0xc0] sm:$0xff]
        %v2491 = vld [vmem:[%s2465 + $0xc8] sm:$0xff]
        %v2492 = vld [vmem:[%s2465 + $0xd0] sm:$0xff]
        %v2493 = vld [vmem:[%s2465 + $0xd8] sm:$0xff]
        %v2494 = vld [vmem:[%s2465 + $0xe0] sm:$0xff]
        %v2495 = vld [vmem:[%s2465 + $0xe8] sm:$0xff]
        %v2496 = vld [vmem:[%s2465 + $0xf0] sm:$0xff]
        %v2497 = vld [vmem:[%s2465 + $0xf8] sm:$0xff]
        %s2498 = scalar_lea.vmem [#allocation13], 4
        %v2499 = vld [vmem:[%s2498] sm:$0xf]
        %v2501 = vsel %vm2411, %v2499, 0
        %2503 = vmatprep.subr.bf16.mxu0 %v2406
        %2504 = vmatpush1.bf16.msra.mxu0 %v2405
        %2505 = vmatprep.subr.bf16.mxu0 %v2420
        %2506 = vmatpush1.bf16.msra.mxu0 %v2417
        %2507 = vmatprep.subr.bf16.mxu0 0
        %2508 = vmatpush1.bf16.msra.mxu0 0
        %2509 = vmatprep.subr.bf16.mxu0 0
        %2510 = vmatpush1.bf16.msra.mxu0 0
        %2511 = vmatprep.subr.bf16.mxu0 0
        %2512 = vmatpush1.bf16.msra.mxu0 0
        %2513 = vmatprep.subr.bf16.mxu0 0
        %2514 = vmatpush1.bf16.msra.mxu0 0
        %2515 = vmatprep.subr.bf16.mxu0 0
        %2516 = vmatpush1.bf16.msra.mxu0 0
        %2517 = vmatprep.subr.bf16.mxu0 0
        %2518 = vmatpush1.bf16.msra.mxu0 0
        %2519 = vmatprep.subr.bf16.mxu0 0
        %2520 = vmatpush1.bf16.msra.mxu0 0
        %2521 = vmatprep.subr.bf16.mxu0 0
        %2522 = vmatpush1.bf16.msra.mxu0 0
        %2523 = vmatprep.subr.bf16.mxu0 0
        %2524 = vmatpush1.bf16.msra.mxu0 0
        %2525 = vmatprep.subr.bf16.mxu0 0
        %2526 = vmatpush1.bf16.msra.mxu0 0
        %2527 = vmatprep.subr.bf16.mxu0 0
        %2528 = vmatpush1.bf16.msra.mxu0 0
        %2529 = vmatprep.subr.bf16.mxu0 0
        %2530 = vmatpush1.bf16.msra.mxu0 0
        %2531 = vmatprep.subr.bf16.mxu0 0
        %2532 = vmatpush1.bf16.msra.mxu0 0
        %2533 = vmatprep.subr.bf16.mxu0 0
        %2534 = vmatpush1.bf16.msra.mxu0 0
        %2535 = vmatprep.mubr.bf16.mxu0 0
        %2536 = vmatmul.mubr.bf16.gmra.mrb[0].mxu0 %v2501
        %v2537 = vpop.f32.mrb[0].mxu0
        %v2538 = vadd.f32 0.0, %v2537
        %v2539 = vpop.f32.mrb[0].mxu0
        %v2540 = vadd.f32 0.0, %v2539
        %v2541 = vpop.f32.mrb[0].mxu0
        %v2542 = vpop.f32.mrb[0].mxu0
        %2543 = vdwg.mxu0
        %v2544 = vpack.c.bf16 %v2538, %v2538
        %v2545 = vpack.c.bf16 %v2540, %v2540
        %s2546 = scalar_lea.vmem [#allocation10], 1792
        %v2547 = vld [vmem:[%s2546] sm:$0xff]
        %v2548 = vld [vmem:[%s2546 + $0x8] sm:$0xff]
        %v2549 = vld [vmem:[%s2546 + $0x10] sm:$0xff]
        %v2550 = vld [vmem:[%s2546 + $0x18] sm:$0xff]
        %v2551 = vld [vmem:[%s2546 + $0x20] sm:$0xff]
        %v2552 = vld [vmem:[%s2546 + $0x28] sm:$0xff]
        %v2553 = vld [vmem:[%s2546 + $0x30] sm:$0xff]
        %v2554 = vld [vmem:[%s2546 + $0x38] sm:$0xff]
        %v2555 = vld [vmem:[%s2546 + $0x40] sm:$0xff]
        %v2556 = vld [vmem:[%s2546 + $0x48] sm:$0xff]
        %v2557 = vld [vmem:[%s2546 + $0x50] sm:$0xff]
        %v2558 = vld [vmem:[%s2546 + $0x58] sm:$0xff]
        %v2559 = vld [vmem:[%s2546 + $0x60] sm:$0xff]
        %v2560 = vld [vmem:[%s2546 + $0x68] sm:$0xff]
        %v2561 = vld [vmem:[%s2546 + $0x70] sm:$0xff]
        %v2562 = vld [vmem:[%s2546 + $0x78] sm:$0xff]
        %v2563 = vld [vmem:[%s2546 + $0x80] sm:$0xff]
        %v2564 = vld [vmem:[%s2546 + $0x88] sm:$0xff]
        %v2565 = vld [vmem:[%s2546 + $0x90] sm:$0xff]
        %v2566 = vld [vmem:[%s2546 + $0x98] sm:$0xff]
        %v2567 = vld [vmem:[%s2546 + $0xa0] sm:$0xff]
        %v2568 = vld [vmem:[%s2546 + $0xa8] sm:$0xff]
        %v2569 = vld [vmem:[%s2546 + $0xb0] sm:$0xff]
        %v2570 = vld [vmem:[%s2546 + $0xb8] sm:$0xff]
        %v2571 = vld [vmem:[%s2546 + $0xc0] sm:$0xff]
        %v2572 = vld [vmem:[%s2546 + $0xc8] sm:$0xff]
        %v2573 = vld [vmem:[%s2546 + $0xd0] sm:$0xff]
        %v2574 = vld [vmem:[%s2546 + $0xd8] sm:$0xff]
        %v2575 = vld [vmem:[%s2546 + $0xe0] sm:$0xff]
        %v2576 = vld [vmem:[%s2546 + $0xe8] sm:$0xff]
        %v2577 = vld [vmem:[%s2546 + $0xf0] sm:$0xff]
        %v2578 = vld [vmem:[%s2546 + $0xf8] sm:$0xff]
        %v2611 = vunpack.c.l.b16 %v2547
        %v2612 = vunpack.c.h.b16 %v2547
        %v2613 = vunpack.c.l.b16 %v2548
        %v2614 = vunpack.c.h.b16 %v2548
        %v2615 = vunpack.c.l.b16 %v2549
        %v2616 = vunpack.c.h.b16 %v2549
        %v2617 = vunpack.c.l.b16 %v2550
        %v2618 = vunpack.c.h.b16 %v2550
        %v2619 = vunpack.c.l.b16 %v2551
        %v2620 = vunpack.c.h.b16 %v2551
        %v2621 = vunpack.c.l.b16 %v2552
        %v2622 = vunpack.c.h.b16 %v2552
        %v2623 = vunpack.c.l.b16 %v2553
        %v2624 = vunpack.c.h.b16 %v2553
        %v2625 = vunpack.c.l.b16 %v2554
        %v2626 = vunpack.c.h.b16 %v2554
        %v2627 = vunpack.c.l.b16 %v2555
        %v2628 = vunpack.c.h.b16 %v2555
        %v2629 = vunpack.c.l.b16 %v2556
        %v2630 = vunpack.c.h.b16 %v2556
        %v2631 = vunpack.c.l.b16 %v2557
        %v2632 = vunpack.c.h.b16 %v2557
        %v2633 = vunpack.c.l.b16 %v2558
        %v2634 = vunpack.c.h.b16 %v2558
        %v2635 = vunpack.c.l.b16 %v2559
        %v2636 = vunpack.c.h.b16 %v2559
        %v2637 = vunpack.c.l.b16 %v2560
        %v2638 = vunpack.c.h.b16 %v2560
        %v2639 = vunpack.c.l.b16 %v2561
        %v2640 = vunpack.c.h.b16 %v2561
        %v2641 = vunpack.c.l.b16 %v2562
        %v2642 = vunpack.c.h.b16 %v2562
        %v2643 = vunpack.c.l.b16 %v2563
        %v2644 = vunpack.c.h.b16 %v2563
        %v2645 = vunpack.c.l.b16 %v2564
        %v2646 = vunpack.c.h.b16 %v2564
        %v2647 = vunpack.c.l.b16 %v2565
        %v2648 = vunpack.c.h.b16 %v2565
        %v2649 = vunpack.c.l.b16 %v2566
        %v2650 = vunpack.c.h.b16 %v2566
        %v2651 = vunpack.c.l.b16 %v2567
        %v2652 = vunpack.c.h.b16 %v2567
        %v2653 = vunpack.c.l.b16 %v2568
        %v2654 = vunpack.c.h.b16 %v2568
        %v2655 = vunpack.c.l.b16 %v2569
        %v2656 = vunpack.c.h.b16 %v2569
        %v2657 = vunpack.c.l.b16 %v2570
        %v2658 = vunpack.c.h.b16 %v2570
        %v2659 = vunpack.c.l.b16 %v2571
        %v2660 = vunpack.c.h.b16 %v2571
        %v2661 = vunpack.c.l.b16 %v2572
        %v2662 = vunpack.c.h.b16 %v2572
        %v2663 = vunpack.c.l.b16 %v2573
        %v2664 = vunpack.c.h.b16 %v2573
        %v2665 = vunpack.c.l.b16 %v2574
        %v2666 = vunpack.c.h.b16 %v2574
        %v2667 = vunpack.c.l.b16 %v2575
        %v2668 = vunpack.c.h.b16 %v2575
        %v2669 = vunpack.c.l.b16 %v2576
        %v2670 = vunpack.c.h.b16 %v2576
        %v2671 = vunpack.c.l.b16 %v2577
        %v2672 = vunpack.c.h.b16 %v2577
        %v2673 = vunpack.c.l.b16 %v2578
        %v2674 = vunpack.c.h.b16 %v2578
        %v2675 = vpack.c.b16 %v2613, %v2611
        %v2676 = vpack.c.b16 %v2614, %v2612
        %v2677 = vpack.c.b16 %v2617, %v2615
        %v2678 = vpack.c.b16 %v2618, %v2616
        %v2679 = vpack.c.b16 %v2621, %v2619
        %v2680 = vpack.c.b16 %v2622, %v2620
        %v2681 = vpack.c.b16 %v2625, %v2623
        %v2682 = vpack.c.b16 %v2626, %v2624
        %v2683 = vpack.c.b16 %v2629, %v2627
        %v2684 = vpack.c.b16 %v2630, %v2628
        %v2685 = vpack.c.b16 %v2633, %v2631
        %v2686 = vpack.c.b16 %v2634, %v2632
        %v2687 = vpack.c.b16 %v2637, %v2635
        %v2688 = vpack.c.b16 %v2638, %v2636
        %v2689 = vpack.c.b16 %v2641, %v2639
        %v2690 = vpack.c.b16 %v2642, %v2640
        %v2691 = vpack.c.b16 %v2645, %v2643
        %v2692 = vpack.c.b16 %v2646, %v2644
        %v2693 = vpack.c.b16 %v2649, %v2647
        %v2694 = vpack.c.b16 %v2650, %v2648
        %v2695 = vpack.c.b16 %v2653, %v2651
        %v2696 = vpack.c.b16 %v2654, %v2652
        %v2697 = vpack.c.b16 %v2657, %v2655
        %v2698 = vpack.c.b16 %v2658, %v2656
        %v2699 = vpack.c.b16 %v2661, %v2659
        %v2700 = vpack.c.b16 %v2662, %v2660
        %v2701 = vpack.c.b16 %v2665, %v2663
        %v2702 = vpack.c.b16 %v2666, %v2664
        %v2703 = vpack.c.b16 %v2669, %v2667
        %v2704 = vpack.c.b16 %v2670, %v2668
        %v2705 = vpack.c.b16 %v2673, %v2671
        %v2706 = vpack.c.b16 %v2674, %v2672
        %2739 = vmatprep.subr.bf16.mxu0 %v2676
        %2740 = vmatpush1.bf16.msra.mxu0 %v2675
        %2741 = vmatprep.subr.bf16.mxu0 %v2678
        %2742 = vmatpush1.bf16.msra.mxu0 %v2677
        %2743 = vmatprep.subr.bf16.mxu0 %v2680
        %2744 = vmatpush1.bf16.msra.mxu0 %v2679
        %2745 = vmatprep.subr.bf16.mxu0 %v2682
        %2746 = vmatpush1.bf16.msra.mxu0 %v2681
        %2747 = vmatprep.subr.bf16.mxu0 %v2684
        %2748 = vmatpush1.bf16.msra.mxu0 %v2683
        %2749 = vmatprep.subr.bf16.mxu0 %v2686
        %2750 = vmatpush1.bf16.msra.mxu0 %v2685
        %2751 = vmatprep.subr.bf16.mxu0 %v2688
        %2752 = vmatpush1.bf16.msra.mxu0 %v2687
        %2753 = vmatprep.subr.bf16.mxu0 %v2690
        %2754 = vmatpush1.bf16.msra.mxu0 %v2689
        %2755 = vmatprep.subr.bf16.mxu0 %v2692
        %2756 = vmatpush1.bf16.msra.mxu0 %v2691
        %2757 = vmatprep.subr.bf16.mxu0 %v2694
        %2758 = vmatpush1.bf16.msra.mxu0 %v2693
        %2759 = vmatprep.subr.bf16.mxu0 %v2696
        %2760 = vmatpush1.bf16.msra.mxu0 %v2695
        %2761 = vmatprep.subr.bf16.mxu0 %v2698
        %2762 = vmatpush1.bf16.msra.mxu0 %v2697
        %2763 = vmatprep.subr.bf16.mxu0 %v2700
        %2764 = vmatpush1.bf16.msra.mxu0 %v2699
        %2765 = vmatprep.subr.bf16.mxu0 %v2702
        %2766 = vmatpush1.bf16.msra.mxu0 %v2701
        %2767 = vmatprep.subr.bf16.mxu0 %v2704
        %2768 = vmatpush1.bf16.msra.mxu0 %v2703
        %2769 = vmatprep.subr.bf16.mxu0 %v2706
        %2770 = vmatpush1.bf16.msra.mxu0 %v2705
        %2771 = vmatprep.mubr.bf16.mxu0 %v2545
        %2772 = vmatmul.mubr.bf16.gmra.mrb[0].mxu0 %v2544
        %v2773 = vpop.f32.mrb[0].mxu0
        %v2774 = vadd.f32 0.0, %v2773
        %v2775 = vpop.f32.mrb[0].mxu0
        %v2776 = vadd.f32 0.0, %v2775
        %v2777 = vpop.f32.mrb[0].mxu0
        %v2778 = vpop.f32.mrb[0].mxu0
        %2779 = vdwg.mxu0
        %v2812 = vunpack.c.l.b16 %v2466
        %v2813 = vunpack.c.h.b16 %v2466
        %v2814 = vunpack.c.l.b16 %v2467
        %v2815 = vunpack.c.h.b16 %v2467
        %v2816 = vunpack.c.l.b16 %v2468
        %v2817 = vunpack.c.h.b16 %v2468
        %v2818 = vunpack.c.l.b16 %v2469
        %v2819 = vunpack.c.h.b16 %v2469
        %v2820 = vunpack.c.l.b16 %v2470
        %v2821 = vunpack.c.h.b16 %v2470
        %v2822 = vunpack.c.l.b16 %v2471
        %v2823 = vunpack.c.h.b16 %v2471
        %v2824 = vunpack.c.l.b16 %v2472
        %v2825 = vunpack.c.h.b16 %v2472
        %v2826 = vunpack.c.l.b16 %v2473
        %v2827 = vunpack.c.h.b16 %v2473
        %v2828 = vunpack.c.l.b16 %v2474
        %v2829 = vunpack.c.h.b16 %v2474
        %v2830 = vunpack.c.l.b16 %v2475
        %v2831 = vunpack.c.h.b16 %v2475
        %v2832 = vunpack.c.l.b16 %v2476
        %v2833 = vunpack.c.h.b16 %v2476
        %v2834 = vunpack.c.l.b16 %v2477
        %v2835 = vunpack.c.h.b16 %v2477
        %v2836 = vunpack.c.l.b16 %v2478
        %v2837 = vunpack.c.h.b16 %v2478
        %v2838 = vunpack.c.l.b16 %v2479
        %v2839 = vunpack.c.h.b16 %v2479
        %v2840 = vunpack.c.l.b16 %v2480
        %v2841 = vunpack.c.h.b16 %v2480
        %v2842 = vunpack.c.l.b16 %v2481
        %v2843 = vunpack.c.h.b16 %v2481
        %v2844 = vunpack.c.l.b16 %v2482
        %v2845 = vunpack.c.h.b16 %v2482
        %v2846 = vunpack.c.l.b16 %v2483
        %v2847 = vunpack.c.h.b16 %v2483
        %v2848 = vunpack.c.l.b16 %v2484
        %v2849 = vunpack.c.h.b16 %v2484
        %v2850 = vunpack.c.l.b16 %v2485
        %v2851 = vunpack.c.h.b16 %v2485
        %v2852 = vunpack.c.l.b16 %v2486
        %v2853 = vunpack.c.h.b16 %v2486
        %v2854 = vunpack.c.l.b16 %v2487
        %v2855 = vunpack.c.h.b16 %v2487
        %v2856 = vunpack.c.l.b16 %v2488
        %v2857 = vunpack.c.h.b16 %v2488
        %v2858 = vunpack.c.l.b16 %v2489
        %v2859 = vunpack.c.h.b16 %v2489
        %v2860 = vunpack.c.l.b16 %v2490
        %v2861 = vunpack.c.h.b16 %v2490
        %v2862 = vunpack.c.l.b16 %v2491
        %v2863 = vunpack.c.h.b16 %v2491
        %v2864 = vunpack.c.l.b16 %v2492
        %v2865 = vunpack.c.h.b16 %v2492
        %v2866 = vunpack.c.l.b16 %v2493
        %v2867 = vunpack.c.h.b16 %v2493
        %v2868 = vunpack.c.l.b16 %v2494
        %v2869 = vunpack.c.h.b16 %v2494
        %v2870 = vunpack.c.l.b16 %v2495
        %v2871 = vunpack.c.h.b16 %v2495
        %v2872 = vunpack.c.l.b16 %v2496
        %v2873 = vunpack.c.h.b16 %v2496
        %v2874 = vunpack.c.l.b16 %v2497
        %v2875 = vunpack.c.h.b16 %v2497
        %v2876 = vpack.c.b16 %v2814, %v2812
        %v2877 = vpack.c.b16 %v2815, %v2813
        %v2878 = vpack.c.b16 %v2818, %v2816
        %v2879 = vpack.c.b16 %v2819, %v2817
        %v2880 = vpack.c.b16 %v2822, %v2820
        %v2881 = vpack.c.b16 %v2823, %v2821
        %v2882 = vpack.c.b16 %v2826, %v2824
        %v2883 = vpack.c.b16 %v2827, %v2825
        %v2884 = vpack.c.b16 %v2830, %v2828
        %v2885 = vpack.c.b16 %v2831, %v2829
        %v2886 = vpack.c.b16 %v2834, %v2832
        %v2887 = vpack.c.b16 %v2835, %v2833
        %v2888 = vpack.c.b16 %v2838, %v2836
        %v2889 = vpack.c.b16 %v2839, %v2837
        %v2890 = vpack.c.b16 %v2842, %v2840
        %v2891 = vpack.c.b16 %v2843, %v2841
        %v2892 = vpack.c.b16 %v2846, %v2844
        %v2893 = vpack.c.b16 %v2847, %v2845
        %v2894 = vpack.c.b16 %v2850, %v2848
        %v2895 = vpack.c.b16 %v2851, %v2849
        %v2896 = vpack.c.b16 %v2854, %v2852
        %v2897 = vpack.c.b16 %v2855, %v2853
        %v2898 = vpack.c.b16 %v2858, %v2856
        %v2899 = vpack.c.b16 %v2859, %v2857
        %v2900 = vpack.c.b16 %v2862, %v2860
        %v2901 = vpack.c.b16 %v2863, %v2861
        %v2902 = vpack.c.b16 %v2866, %v2864
        %v2903 = vpack.c.b16 %v2867, %v2865
        %v2904 = vpack.c.b16 %v2870, %v2868
        %v2905 = vpack.c.b16 %v2871, %v2869
        %v2906 = vpack.c.b16 %v2874, %v2872
        %v2907 = vpack.c.b16 %v2875, %v2873
        %2940 = vmatprep.subr.bf16.mxu0 %v2877
        %2941 = vmatpush1.bf16.msra.mxu0 %v2876
        %2942 = vmatprep.subr.bf16.mxu0 %v2879
        %2943 = vmatpush1.bf16.msra.mxu0 %v2878
        %2944 = vmatprep.subr.bf16.mxu0 %v2881
        %2945 = vmatpush1.bf16.msra.mxu0 %v2880
        %2946 = vmatprep.subr.bf16.mxu0 %v2883
        %2947 = vmatpush1.bf16.msra.mxu0 %v2882
        %2948 = vmatprep.subr.bf16.mxu0 %v2885
        %2949 = vmatpush1.bf16.msra.mxu0 %v2884
        %2950 = vmatprep.subr.bf16.mxu0 %v2887
        %2951 = vmatpush1.bf16.msra.mxu0 %v2886
        %2952 = vmatprep.subr.bf16.mxu0 %v2889
        %2953 = vmatpush1.bf16.msra.mxu0 %v2888
        %2954 = vmatprep.subr.bf16.mxu0 %v2891
        %2955 = vmatpush1.bf16.msra.mxu0 %v2890
        %2956 = vmatprep.subr.bf16.mxu0 %v2893
        %2957 = vmatpush1.bf16.msra.mxu0 %v2892
        %2958 = vmatprep.subr.bf16.mxu0 %v2895
        %2959 = vmatpush1.bf16.msra.mxu0 %v2894
        %2960 = vmatprep.subr.bf16.mxu0 %v2897
        %2961 = vmatpush1.bf16.msra.mxu0 %v2896
        %2962 = vmatprep.subr.bf16.mxu0 %v2899
        %2963 = vmatpush1.bf16.msra.mxu0 %v2898
        %2964 = vmatprep.subr.bf16.mxu0 %v2901
        %2965 = vmatpush1.bf16.msra.mxu0 %v2900
        %2966 = vmatprep.subr.bf16.mxu0 %v2903
        %2967 = vmatpush1.bf16.msra.mxu0 %v2902
        %2968 = vmatprep.subr.bf16.mxu0 %v2905
        %2969 = vmatpush1.bf16.msra.mxu0 %v2904
        %2970 = vmatprep.subr.bf16.mxu0 %v2907
        %2971 = vmatpush1.bf16.msra.mxu0 %v2906
        %2972 = vmatprep.mubr.bf16.mxu0 %v2464
        %2973 = vmatmul.mubr.bf16.gmra.mrb[0].mxu0 %v2463
        %v2974 = vpop.f32.mrb[0].mxu0
        %v2975 = vadd.f32 %v2774, %v2974
        %v2976 = vpop.f32.mrb[0].mxu0
        %v2977 = vadd.f32 %v2776, %v2976
        %v2978 = vpop.f32.mrb[0].mxu0
        %v2979 = vpop.f32.mrb[0].mxu0
        %2980 = vdwg.mxu0
        %s2981 = scalar_lea.vmem [#allocation13], 8
        %v2982 = vld [vmem:[%s2981] sm:$0xf]
        %v2984 = vsel %vm2411, %v2982, 0
        %2986 = vmatprep.subr.bf16.mxu0 %v2406
        %2987 = vmatpush1.bf16.msra.mxu0 %v2405
        %2988 = vmatprep.subr.bf16.mxu0 %v2420
        %2989 = vmatpush1.bf16.msra.mxu0 %v2417
        %2990 = vmatprep.subr.bf16.mxu0 0
        %2991 = vmatpush1.bf16.msra.mxu0 0
        %2992 = vmatprep.subr.bf16.mxu0 0
        %2993 = vmatpush1.bf16.msra.mxu0 0
        %2994 = vmatprep.subr.bf16.mxu0 0
        %2995 = vmatpush1.bf16.msra.mxu0 0
        %2996 = vmatprep.subr.bf16.mxu0 0
        %2997 = vmatpush1.bf16.msra.mxu0 0
        %2998 = vmatprep.subr.bf16.mxu0 0
        %2999 = vmatpush1.bf16.msra.mxu0 0
        %3000 = vmatprep.subr.bf16.mxu0 0
        %3001 = vmatpush1.bf16.msra.mxu0 0
        %3002 = vmatprep.subr.bf16.mxu0 0
        %3003 = vmatpush1.bf16.msra.mxu0 0
        %3004 = vmatprep.subr.bf16.mxu0 0
        %3005 = vmatpush1.bf16.msra.mxu0 0
        %3006 = vmatprep.subr.bf16.mxu0 0
        %3007 = vmatpush1.bf16.msra.mxu0 0
        %3008 = vmatprep.subr.bf16.mxu0 0
        %3009 = vmatpush1.bf16.msra.mxu0 0
        %3010 = vmatprep.subr.bf16.mxu0 0
        %3011 = vmatpush1.bf16.msra.mxu0 0
        %3012 = vmatprep.subr.bf16.mxu0 0
        %3013 = vmatpush1.bf16.msra.mxu0 0
        %3014 = vmatprep.subr.bf16.mxu0 0
        %3015 = vmatpush1.bf16.msra.mxu0 0
        %3016 = vmatprep.subr.bf16.mxu0 0
        %3017 = vmatpush1.bf16.msra.mxu0 0
        %3018 = vmatprep.mubr.bf16.mxu0 0
        %3019 = vmatmul.mubr.bf16.gmra.mrb[0].mxu0 %v2984
        %v3020 = vpop.f32.mrb[0].mxu0
        %v3021 = vadd.f32 0.0, %v3020
        %v3022 = vpop.f32.mrb[0].mxu0
        %v3023 = vadd.f32 0.0, %v3022
        %v3024 = vpop.f32.mrb[0].mxu0
        %v3025 = vpop.f32.mrb[0].mxu0
        %3026 = vdwg.mxu0
        %v3027 = vpack.c.bf16 %v3021, %v3021
        %v3028 = vpack.c.bf16 %v3023, %v3023
        %s3029 = scalar_lea.vmem [#allocation10], 2048
        %v3030 = vld [vmem:[%s3029] sm:$0xff]
        %v3031 = vld [vmem:[%s3029 + $0x8] sm:$0xff]
        %v3032 = vld [vmem:[%s3029 + $0x10] sm:$0xff]
        %v3033 = vld [vmem:[%s3029 + $0x18] sm:$0xff]
        %v3034 = vld [vmem:[%s3029 + $0x20] sm:$0xff]
        %v3035 = vld [vmem:[%s3029 + $0x28] sm:$0xff]
        %v3036 = vld [vmem:[%s3029 + $0x30] sm:$0xff]
        %v3037 = vld [vmem:[%s3029 + $0x38] sm:$0xff]
        %v3038 = vld [vmem:[%s3029 + $0x40] sm:$0xff]
        %v3039 = vld [vmem:[%s3029 + $0x48] sm:$0xff]
        %v3040 = vld [vmem:[%s3029 + $0x50] sm:$0xff]
        %v3041 = vld [vmem:[%s3029 + $0x58] sm:$0xff]
        %v3042 = vld [vmem:[%s3029 + $0x60] sm:$0xff]
        %v3043 = vld [vmem:[%s3029 + $0x68] sm:$0xff]
        %v3044 = vld [vmem:[%s3029 + $0x70] sm:$0xff]
        %v3045 = vld [vmem:[%s3029 + $0x78] sm:$0xff]
        %v3046 = vld [vmem:[%s3029 + $0x80] sm:$0xff]
        %v3047 = vld [vmem:[%s3029 + $0x88] sm:$0xff]
        %v3048 = vld [vmem:[%s3029 + $0x90] sm:$0xff]
        %v3049 = vld [vmem:[%s3029 + $0x98] sm:$0xff]
        %v3050 = vld [vmem:[%s3029 + $0xa0] sm:$0xff]
        %v3051 = vld [vmem:[%s3029 + $0xa8] sm:$0xff]
        %v3052 = vld [vmem:[%s3029 + $0xb0] sm:$0xff]
        %v3053 = vld [vmem:[%s3029 + $0xb8] sm:$0xff]
        %v3054 = vld [vmem:[%s3029 + $0xc0] sm:$0xff]
        %v3055 = vld [vmem:[%s3029 + $0xc8] sm:$0xff]
        %v3056 = vld [vmem:[%s3029 + $0xd0] sm:$0xff]
        %v3057 = vld [vmem:[%s3029 + $0xd8] sm:$0xff]
        %v3058 = vld [vmem:[%s3029 + $0xe0] sm:$0xff]
        %v3059 = vld [vmem:[%s3029 + $0xe8] sm:$0xff]
        %v3060 = vld [vmem:[%s3029 + $0xf0] sm:$0xff]
        %v3061 = vld [vmem:[%s3029 + $0xf8] sm:$0xff]
        %v3094 = vunpack.c.l.b16 %v3030
        %v3095 = vunpack.c.h.b16 %v3030
        %v3096 = vunpack.c.l.b16 %v3031
        %v3097 = vunpack.c.h.b16 %v3031
        %v3098 = vunpack.c.l.b16 %v3032
        %v3099 = vunpack.c.h.b16 %v3032
        %v3100 = vunpack.c.l.b16 %v3033
        %v3101 = vunpack.c.h.b16 %v3033
        %v3102 = vunpack.c.l.b16 %v3034
        %v3103 = vunpack.c.h.b16 %v3034
        %v3104 = vunpack.c.l.b16 %v3035
        %v3105 = vunpack.c.h.b16 %v3035
        %v3106 = vunpack.c.l.b16 %v3036
        %v3107 = vunpack.c.h.b16 %v3036
        %v3108 = vunpack.c.l.b16 %v3037
        %v3109 = vunpack.c.h.b16 %v3037
        %v3110 = vunpack.c.l.b16 %v3038
        %v3111 = vunpack.c.h.b16 %v3038
        %v3112 = vunpack.c.l.b16 %v3039
        %v3113 = vunpack.c.h.b16 %v3039
        %v3114 = vunpack.c.l.b16 %v3040
        %v3115 = vunpack.c.h.b16 %v3040
        %v3116 = vunpack.c.l.b16 %v3041
        %v3117 = vunpack.c.h.b16 %v3041
        %v3118 = vunpack.c.l.b16 %v3042
        %v3119 = vunpack.c.h.b16 %v3042
        %v3120 = vunpack.c.l.b16 %v3043
        %v3121 = vunpack.c.h.b16 %v3043
        %v3122 = vunpack.c.l.b16 %v3044
        %v3123 = vunpack.c.h.b16 %v3044
        %v3124 = vunpack.c.l.b16 %v3045
        %v3125 = vunpack.c.h.b16 %v3045
        %v3126 = vunpack.c.l.b16 %v3046
        %v3127 = vunpack.c.h.b16 %v3046
        %v3128 = vunpack.c.l.b16 %v3047
        %v3129 = vunpack.c.h.b16 %v3047
        %v3130 = vunpack.c.l.b16 %v3048
        %v3131 = vunpack.c.h.b16 %v3048
        %v3132 = vunpack.c.l.b16 %v3049
        %v3133 = vunpack.c.h.b16 %v3049
        %v3134 = vunpack.c.l.b16 %v3050
        %v3135 = vunpack.c.h.b16 %v3050
        %v3136 = vunpack.c.l.b16 %v3051
        %v3137 = vunpack.c.h.b16 %v3051
        %v3138 = vunpack.c.l.b16 %v3052
        %v3139 = vunpack.c.h.b16 %v3052
        %v3140 = vunpack.c.l.b16 %v3053
        %v3141 = vunpack.c.h.b16 %v3053
        %v3142 = vunpack.c.l.b16 %v3054
        %v3143 = vunpack.c.h.b16 %v3054
        %v3144 = vunpack.c.l.b16 %v3055
        %v3145 = vunpack.c.h.b16 %v3055
        %v3146 = vunpack.c.l.b16 %v3056
        %v3147 = vunpack.c.h.b16 %v3056
        %v3148 = vunpack.c.l.b16 %v3057
        %v3149 = vunpack.c.h.b16 %v3057
        %v3150 = vunpack.c.l.b16 %v3058
        %v3151 = vunpack.c.h.b16 %v3058
        %v3152 = vunpack.c.l.b16 %v3059
        %v3153 = vunpack.c.h.b16 %v3059
        %v3154 = vunpack.c.l.b16 %v3060
        %v3155 = vunpack.c.h.b16 %v3060
        %v3156 = vunpack.c.l.b16 %v3061
        %v3157 = vunpack.c.h.b16 %v3061
        %v3158 = vpack.c.b16 %v3096, %v3094
        %v3159 = vpack.c.b16 %v3097, %v3095
        %v3160 = vpack.c.b16 %v3100, %v3098
        %v3161 = vpack.c.b16 %v3101, %v3099
        %v3162 = vpack.c.b16 %v3104, %v3102
        %v3163 = vpack.c.b16 %v3105, %v3103
        %v3164 = vpack.c.b16 %v3108, %v3106
        %v3165 = vpack.c.b16 %v3109, %v3107
        %v3166 = vpack.c.b16 %v3112, %v3110
        %v3167 = vpack.c.b16 %v3113, %v3111
        %v3168 = vpack.c.b16 %v3116, %v3114
        %v3169 = vpack.c.b16 %v3117, %v3115
        %v3170 = vpack.c.b16 %v3120, %v3118
        %v3171 = vpack.c.b16 %v3121, %v3119
        %v3172 = vpack.c.b16 %v3124, %v3122
        %v3173 = vpack.c.b16 %v3125, %v3123
        %v3174 = vpack.c.b16 %v3128, %v3126
        %v3175 = vpack.c.b16 %v3129, %v3127
        %v3176 = vpack.c.b16 %v3132, %v3130
        %v3177 = vpack.c.b16 %v3133, %v3131
        %v3178 = vpack.c.b16 %v3136, %v3134
        %v3179 = vpack.c.b16 %v3137, %v3135
        %v3180 = vpack.c.b16 %v3140, %v3138
        %v3181 = vpack.c.b16 %v3141, %v3139
        %v3182 = vpack.c.b16 %v3144, %v3142
        %v3183 = vpack.c.b16 %v3145, %v3143
        %v3184 = vpack.c.b16 %v3148, %v3146
        %v3185 = vpack.c.b16 %v3149, %v3147
        %v3186 = vpack.c.b16 %v3152, %v3150
        %v3187 = vpack.c.b16 %v3153, %v3151
        %v3188 = vpack.c.b16 %v3156, %v3154
        %v3189 = vpack.c.b16 %v3157, %v3155
        %3222 = vmatprep.subr.bf16.mxu0 %v3159
        %3223 = vmatpush1.bf16.msra.mxu0 %v3158
        %3224 = vmatprep.subr.bf16.mxu0 %v3161
        %3225 = vmatpush1.bf16.msra.mxu0 %v3160
        %3226 = vmatprep.subr.bf16.mxu0 %v3163
        %3227 = vmatpush1.bf16.msra.mxu0 %v3162
        %3228 = vmatprep.subr.bf16.mxu0 %v3165
        %3229 = vmatpush1.bf16.msra.mxu0 %v3164
        %3230 = vmatprep.subr.bf16.mxu0 %v3167
        %3231 = vmatpush1.bf16.msra.mxu0 %v3166
        %3232 = vmatprep.subr.bf16.mxu0 %v3169
        %3233 = vmatpush1.bf16.msra.mxu0 %v3168
        %3234 = vmatprep.subr.bf16.mxu0 %v3171
        %3235 = vmatpush1.bf16.msra.mxu0 %v3170
        %3236 = vmatprep.subr.bf16.mxu0 %v3173
        %3237 = vmatpush1.bf16.msra.mxu0 %v3172
        %3238 = vmatprep.subr.bf16.mxu0 %v3175
        %3239 = vmatpush1.bf16.msra.mxu0 %v3174
        %3240 = vmatprep.subr.bf16.mxu0 %v3177
        %3241 = vmatpush1.bf16.msra.mxu0 %v3176
        %3242 = vmatprep.subr.bf16.mxu0 %v3179
        %3243 = vmatpush1.bf16.msra.mxu0 %v3178
        %3244 = vmatprep.subr.bf16.mxu0 %v3181
        %3245 = vmatpush1.bf16.msra.mxu0 %v3180
        %3246 = vmatprep.subr.bf16.mxu0 %v3183
        %3247 = vmatpush1.bf16.msra.mxu0 %v3182
        %3248 = vmatprep.subr.bf16.mxu0 %v3185
        %3249 = vmatpush1.bf16.msra.mxu0 %v3184
        %3250 = vmatprep.subr.bf16.mxu0 %v3187
        %3251 = vmatpush1.bf16.msra.mxu0 %v3186
        %3252 = vmatprep.subr.bf16.mxu0 %v3189
        %3253 = vmatpush1.bf16.msra.mxu0 %v3188
        %3254 = vmatprep.mubr.bf16.mxu0 %v3028
        %3255 = vmatmul.mubr.bf16.gmra.mrb[0].mxu0 %v3027
        %v3256 = vpop.f32.mrb[0].mxu0
        %v3257 = vadd.f32 0.0, %v3256
        %v3258 = vpop.f32.mrb[0].mxu0
        %v3259 = vadd.f32 0.0, %v3258
        %v3260 = vpop.f32.mrb[0].mxu0
        %v3261 = vpop.f32.mrb[0].mxu0
        %3262 = vdwg.mxu0
        %v3263 = vadd.f32 %v2975, %v3257
        %v3264 = vadd.f32 %v2977, %v3259
        %s3265 = scalar_lea.vmem [#allocation12], 3
        %v3266 = vld [vmem:[%s3265] ss:$8 sm:$0x3]
        %v3268 = vlaneseq
        %v3269 = vshrl.u32 %v3268, 7
        %v3270 = vsub.s32 0, %v3269
        %v3271 = vrot.slane %v3266, %v3270
        %v3272 = vlaneseq
        %v3273 = vshrl.u32 %v3272, 7
        %v3274 = vsub.s32 1, %v3273
        %v3275 = vrot.slane %v3266, %v3274
        %v3278 = vadd.f32 %v3263, %v3271
        %v3279 = vadd.f32 %v3264, %v3275
        %v3280 = vmax.f32 %v3278, 0.0
        %v3281 = vmax.f32 %v3279, 0.0
        %v3282 = vpack.c.bf16 %v3280, %v3280
        %v3283 = vpack.c.bf16 %v3281, %v3281
        %v3286 = vunpack.c.l.b16 %v3282
        %v3287 = vunpack.c.l.b16 %v3283
        %v3288 = vpack.c.b16 %v3287, %v3286
        %v3290 = vshrl.u32 %v3288, 16
        %v3292 = vrot.slane %v3290, 7
        %v3293 = vshll.u32 %v3288, 16
        %v3295 = vor.u32 %v3292, %v3293
        %v3296 = vrot.slane %v3292, 4
        %v3299 = vld [vmem:[#allocation5] sm:$0xff]
        %v3300 = vsel %vm689, %v3295, %v3299
        %3301 = vst [vmem:[#allocation5] sm:$0xff] %v3300
        %v3302 = vld [vmem:[#allocation5 + $0x8] sm:$0x11]
        %v3303 = vsel %vm699, %v3296, %v3302
        %3304 = vst [vmem:[#allocation5 + $0x8] sm:$0x11] %v3303
        %s3305 = scalar_lea.vmem [#allocation10], 4608
        %v3306 = vld [vmem:[%s3305] sm:$0xff]
        %v3307 = vld [vmem:[%s3305 + $0x8] sm:$0xff]
        %v3308 = vld [vmem:[%s3305 + $0x10] sm:$0xff]
        %v3309 = vld [vmem:[%s3305 + $0x18] sm:$0xff]
        %v3310 = vld [vmem:[%s3305 + $0x20] sm:$0xff]
        %v3311 = vld [vmem:[%s3305 + $0x28] sm:$0xff]
        %v3312 = vld [vmem:[%s3305 + $0x30] sm:$0xff]
        %v3313 = vld [vmem:[%s3305 + $0x38] sm:$0xff]
        %v3314 = vld [vmem:[%s3305 + $0x40] sm:$0xff]
        %v3315 = vld [vmem:[%s3305 + $0x48] sm:$0xff]
        %v3316 = vld [vmem:[%s3305 + $0x50] sm:$0xff]
        %v3317 = vld [vmem:[%s3305 + $0x58] sm:$0xff]
        %v3318 = vld [vmem:[%s3305 + $0x60] sm:$0xff]
        %v3319 = vld [vmem:[%s3305 + $0x68] sm:$0xff]
        %v3320 = vld [vmem:[%s3305 + $0x70] sm:$0xff]
        %v3321 = vld [vmem:[%s3305 + $0x78] sm:$0xff]
        %v3322 = vld [vmem:[%s3305 + $0x80] sm:$0xff]
        %v3323 = vld [vmem:[%s3305 + $0x88] sm:$0xff]
        %v3324 = vld [vmem:[%s3305 + $0x90] sm:$0xff]
        %v3325 = vld [vmem:[%s3305 + $0x98] sm:$0xff]
        %v3326 = vld [vmem:[%s3305 + $0xa0] sm:$0xff]
        %v3327 = vld [vmem:[%s3305 + $0xa8] sm:$0xff]
        %v3328 = vld [vmem:[%s3305 + $0xb0] sm:$0xff]
        %v3329 = vld [vmem:[%s3305 + $0xb8] sm:$0xff]
        %v3330 = vld [vmem:[%s3305 + $0xc0] sm:$0xff]
        %v3331 = vld [vmem:[%s3305 + $0xc8] sm:$0xff]
        %v3332 = vld [vmem:[%s3305 + $0xd0] sm:$0xff]
        %v3333 = vld [vmem:[%s3305 + $0xd8] sm:$0xff]
        %v3334 = vld [vmem:[%s3305 + $0xe0] sm:$0xff]
        %v3335 = vld [vmem:[%s3305 + $0xe8] sm:$0xff]
        %v3336 = vld [vmem:[%s3305 + $0xf0] sm:$0xff]
        %v3337 = vld [vmem:[%s3305 + $0xf8] sm:$0xff]
        %v3370 = vunpack.c.l.b16 %v3306
        %v3371 = vunpack.c.h.b16 %v3306
        %v3372 = vunpack.c.l.b16 %v3307
        %v3373 = vunpack.c.h.b16 %v3307
        %v3374 = vunpack.c.l.b16 %v3308
        %v3375 = vunpack.c.h.b16 %v3308
        %v3376 = vunpack.c.l.b16 %v3309
        %v3377 = vunpack.c.h.b16 %v3309
        %v3378 = vunpack.c.l.b16 %v3310
        %v3379 = vunpack.c.h.b16 %v3310
        %v3380 = vunpack.c.l.b16 %v3311
        %v3381 = vunpack.c.h.b16 %v3311
        %v3382 = vunpack.c.l.b16 %v3312
        %v3383 = vunpack.c.h.b16 %v3312
        %v3384 = vunpack.c.l.b16 %v3313
        %v3385 = vunpack.c.h.b16 %v3313
        %v3386 = vunpack.c.l.b16 %v3314
        %v3387 = vunpack.c.h.b16 %v3314
        %v3388 = vunpack.c.l.b16 %v3315
        %v3389 = vunpack.c.h.b16 %v3315
        %v3390 = vunpack.c.l.b16 %v3316
        %v3391 = vunpack.c.h.b16 %v3316
        %v3392 = vunpack.c.l.b16 %v3317
        %v3393 = vunpack.c.h.b16 %v3317
        %v3394 = vunpack.c.l.b16 %v3318
        %v3395 = vunpack.c.h.b16 %v3318
        %v3396 = vunpack.c.l.b16 %v3319
        %v3397 = vunpack.c.h.b16 %v3319
        %v3398 = vunpack.c.l.b16 %v3320
        %v3399 = vunpack.c.h.b16 %v3320
        %v3400 = vunpack.c.l.b16 %v3321
        %v3401 = vunpack.c.h.b16 %v3321
        %v3402 = vunpack.c.l.b16 %v3322
        %v3403 = vunpack.c.h.b16 %v3322
        %v3404 = vunpack.c.l.b16 %v3323
        %v3405 = vunpack.c.h.b16 %v3323
        %v3406 = vunpack.c.l.b16 %v3324
        %v3407 = vunpack.c.h.b16 %v3324
        %v3408 = vunpack.c.l.b16 %v3325
        %v3409 = vunpack.c.h.b16 %v3325
        %v3410 = vunpack.c.l.b16 %v3326
        %v3411 = vunpack.c.h.b16 %v3326
        %v3412 = vunpack.c.l.b16 %v3327
        %v3413 = vunpack.c.h.b16 %v3327
        %v3414 = vunpack.c.l.b16 %v3328
        %v3415 = vunpack.c.h.b16 %v3328
        %v3416 = vunpack.c.l.b16 %v3329
        %v3417 = vunpack.c.h.b16 %v3329
        %v3418 = vunpack.c.l.b16 %v3330
        %v3419 = vunpack.c.h.b16 %v3330
        %v3420 = vunpack.c.l.b16 %v3331
        %v3421 = vunpack.c.h.b16 %v3331
        %v3422 = vunpack.c.l.b16 %v3332
        %v3423 = vunpack.c.h.b16 %v3332
        %v3424 = vunpack.c.l.b16 %v3333
        %v3425 = vunpack.c.h.b16 %v3333
        %v3426 = vunpack.c.l.b16 %v3334
        %v3427 = vunpack.c.h.b16 %v3334
        %v3428 = vunpack.c.l.b16 %v3335
        %v3429 = vunpack.c.h.b16 %v3335
        %v3430 = vunpack.c.l.b16 %v3336
        %v3431 = vunpack.c.h.b16 %v3336
        %v3432 = vunpack.c.l.b16 %v3337
        %v3433 = vunpack.c.h.b16 %v3337
        %v3434 = vpack.c.b16 %v3372, %v3370
        %v3435 = vpack.c.b16 %v3373, %v3371
        %v3436 = vpack.c.b16 %v3376, %v3374
        %v3437 = vpack.c.b16 %v3377, %v3375
        %v3438 = vpack.c.b16 %v3380, %v3378
        %v3439 = vpack.c.b16 %v3381, %v3379
        %v3440 = vpack.c.b16 %v3384, %v3382
        %v3441 = vpack.c.b16 %v3385, %v3383
        %v3442 = vpack.c.b16 %v3388, %v3386
        %v3443 = vpack.c.b16 %v3389, %v3387
        %v3444 = vpack.c.b16 %v3392, %v3390
        %v3445 = vpack.c.b16 %v3393, %v3391
        %v3446 = vpack.c.b16 %v3396, %v3394
        %v3447 = vpack.c.b16 %v3397, %v3395
        %v3448 = vpack.c.b16 %v3400, %v3398
        %v3449 = vpack.c.b16 %v3401, %v3399
        %v3450 = vpack.c.b16 %v3404, %v3402
        %v3451 = vpack.c.b16 %v3405, %v3403
        %v3452 = vpack.c.b16 %v3408, %v3406
        %v3453 = vpack.c.b16 %v3409, %v3407
        %v3454 = vpack.c.b16 %v3412, %v3410
        %v3455 = vpack.c.b16 %v3413, %v3411
        %v3456 = vpack.c.b16 %v3416, %v3414
        %v3457 = vpack.c.b16 %v3417, %v3415
        %v3458 = vpack.c.b16 %v3420, %v3418
        %v3459 = vpack.c.b16 %v3421, %v3419
        %v3460 = vpack.c.b16 %v3424, %v3422
        %v3461 = vpack.c.b16 %v3425, %v3423
        %v3462 = vpack.c.b16 %v3428, %v3426
        %v3463 = vpack.c.b16 %v3429, %v3427
        %v3464 = vpack.c.b16 %v3432, %v3430
        %v3465 = vpack.c.b16 %v3433, %v3431
        %3498 = vmatprep.subr.bf16.mxu0 %v3435
        %3499 = vmatpush1.bf16.msra.mxu0 %v3434
        %3500 = vmatprep.subr.bf16.mxu0 %v3437
        %3501 = vmatpush1.bf16.msra.mxu0 %v3436
        %3502 = vmatprep.subr.bf16.mxu0 %v3439
        %3503 = vmatpush1.bf16.msra.mxu0 %v3438
        %3504 = vmatprep.subr.bf16.mxu0 %v3441
        %3505 = vmatpush1.bf16.msra.mxu0 %v3440
        %3506 = vmatprep.subr.bf16.mxu0 %v3443
        %3507 = vmatpush1.bf16.msra.mxu0 %v3442
        %3508 = vmatprep.subr.bf16.mxu0 %v3445
        %3509 = vmatpush1.bf16.msra.mxu0 %v3444
        %3510 = vmatprep.subr.bf16.mxu0 %v3447
        %3511 = vmatpush1.bf16.msra.mxu0 %v3446
        %3512 = vmatprep.subr.bf16.mxu0 %v3449
        %3513 = vmatpush1.bf16.msra.mxu0 %v3448
        %3514 = vmatprep.subr.bf16.mxu0 %v3451
        %3515 = vmatpush1.bf16.msra.mxu0 %v3450
        %3516 = vmatprep.subr.bf16.mxu0 %v3453
        %3517 = vmatpush1.bf16.msra.mxu0 %v3452
        %3518 = vmatprep.subr.bf16.mxu0 %v3455
        %3519 = vmatpush1.bf16.msra.mxu0 %v3454
        %3520 = vmatprep.subr.bf16.mxu0 %v3457
        %3521 = vmatpush1.bf16.msra.mxu0 %v3456
        %3522 = vmatprep.subr.bf16.mxu0 %v3459
        %3523 = vmatpush1.bf16.msra.mxu0 %v3458
        %3524 = vmatprep.subr.bf16.mxu0 %v3461
        %3525 = vmatpush1.bf16.msra.mxu0 %v3460
        %3526 = vmatprep.subr.bf16.mxu0 %v3463
        %3527 = vmatpush1.bf16.msra.mxu0 %v3462
        %3528 = vmatprep.subr.bf16.mxu0 %v3465
        %3529 = vmatpush1.bf16.msra.mxu0 %v3464
        %3530 = vmatprep.mubr.bf16.mxu0 %v2545
        %3531 = vmatmul.mubr.bf16.gmra.mrb[0].mxu0 %v2544
        %v3532 = vpop.f32.mrb[0].mxu0
        %v3533 = vadd.f32 0.0, %v3532
        %v3534 = vpop.f32.mrb[0].mxu0
        %v3535 = vadd.f32 0.0, %v3534
        %v3536 = vpop.f32.mrb[0].mxu0
        %v3537 = vpop.f32.mrb[0].mxu0
        %3538 = vdwg.mxu0
        %v3539 = vld [vmem:[#allocation5] sm:$0xff]
        %s3540 = scalar_lea.vmem [#allocation10], 2304
        %v3541 = vld [vmem:[%s3540] sm:$0xff]
        %v3542 = vld [vmem:[%s3540 + $0x8] sm:$0xff]
        %v3543 = vld [vmem:[%s3540 + $0x10] sm:$0xff]
        %v3544 = vld [vmem:[%s3540 + $0x18] sm:$0xff]
        %v3545 = vld [vmem:[%s3540 + $0x20] sm:$0xff]
        %v3546 = vld [vmem:[%s3540 + $0x28] sm:$0xff]
        %v3547 = vld [vmem:[%s3540 + $0x30] sm:$0xff]
        %v3548 = vld [vmem:[%s3540 + $0x38] sm:$0xff]
        %v3549 = vld [vmem:[%s3540 + $0x40] sm:$0xff]
        %v3550 = vld [vmem:[%s3540 + $0x48] sm:$0xff]
        %v3551 = vld [vmem:[%s3540 + $0x50] sm:$0xff]
        %v3552 = vld [vmem:[%s3540 + $0x58] sm:$0xff]
        %v3553 = vld [vmem:[%s3540 + $0x60] sm:$0xff]
        %v3554 = vld [vmem:[%s3540 + $0x68] sm:$0xff]
        %v3555 = vld [vmem:[%s3540 + $0x70] sm:$0xff]
        %v3556 = vld [vmem:[%s3540 + $0x78] sm:$0xff]
        %v3557 = vld [vmem:[%s3540 + $0x80] sm:$0xff]
        %v3558 = vld [vmem:[%s3540 + $0x88] sm:$0xff]
        %v3559 = vld [vmem:[%s3540 + $0x90] sm:$0xff]
        %v3560 = vld [vmem:[%s3540 + $0x98] sm:$0xff]
        %v3561 = vld [vmem:[%s3540 + $0xa0] sm:$0xff]
        %v3562 = vld [vmem:[%s3540 + $0xa8] sm:$0xff]
        %v3563 = vld [vmem:[%s3540 + $0xb0] sm:$0xff]
        %v3564 = vld [vmem:[%s3540 + $0xb8] sm:$0xff]
        %v3565 = vld [vmem:[%s3540 + $0xc0] sm:$0xff]
        %v3566 = vld [vmem:[%s3540 + $0xc8] sm:$0xff]
        %v3567 = vld [vmem:[%s3540 + $0xd0] sm:$0xff]
        %v3568 = vld [vmem:[%s3540 + $0xd8] sm:$0xff]
        %v3569 = vld [vmem:[%s3540 + $0xe0] sm:$0xff]
        %v3570 = vld [vmem:[%s3540 + $0xe8] sm:$0xff]
        %v3571 = vld [vmem:[%s3540 + $0xf0] sm:$0xff]
        %v3572 = vld [vmem:[%s3540 + $0xf8] sm:$0xff]
        %v3573 = vld [vmem:[#allocation5 + $0x8] sm:$0x11]
        %s3574 = scalar_lea.vmem [#allocation10], 2560
        %v3575 = vld [vmem:[%s3574] sm:$0xff]
        %v3576 = vld [vmem:[%s3574 + $0x8] sm:$0xff]
        %v3577 = vld [vmem:[%s3574 + $0x10] sm:$0xff]
        %v3578 = vld [vmem:[%s3574 + $0x18] sm:$0xff]
        %v3579 = vld [vmem:[%s3574 + $0x20] sm:$0xff]
        %v3580 = vld [vmem:[%s3574 + $0x28] sm:$0xff]
        %v3581 = vld [vmem:[%s3574 + $0x30] sm:$0xff]
        %v3582 = vld [vmem:[%s3574 + $0x38] sm:$0xff]
        %v3583 = vld [vmem:[%s3574 + $0x40] sm:$0xff]
        %v3584 = vld [vmem:[%s3574 + $0x48] sm:$0xff]
        %v3585 = vld [vmem:[%s3574 + $0x50] sm:$0xff]
        %v3586 = vld [vmem:[%s3574 + $0x58] sm:$0xff]
        %v3587 = vld [vmem:[%s3574 + $0x60] sm:$0xff]
        %v3588 = vld [vmem:[%s3574 + $0x68] sm:$0xff]
        %v3589 = vld [vmem:[%s3574 + $0x70] sm:$0xff]
        %v3590 = vld [vmem:[%s3574 + $0x78] sm:$0xff]
        %v3591 = vld [vmem:[%s3574 + $0x80] sm:$0xff]
        %v3592 = vld [vmem:[%s3574 + $0x88] sm:$0xff]
        %v3593 = vld [vmem:[%s3574 + $0x90] sm:$0xff]
        %v3594 = vld [vmem:[%s3574 + $0x98] sm:$0xff]
        %v3595 = vld [vmem:[%s3574 + $0xa0] sm:$0xff]
        %v3596 = vld [vmem:[%s3574 + $0xa8] sm:$0xff]
        %v3597 = vld [vmem:[%s3574 + $0xb0] sm:$0xff]
        %v3598 = vld [vmem:[%s3574 + $0xb8] sm:$0xff]
        %v3599 = vld [vmem:[%s3574 + $0xc0] sm:$0xff]
        %v3600 = vld [vmem:[%s3574 + $0xc8] sm:$0xff]
        %v3601 = vld [vmem:[%s3574 + $0xd0] sm:$0xff]
        %v3602 = vld [vmem:[%s3574 + $0xd8] sm:$0xff]
        %v3603 = vld [vmem:[%s3574 + $0xe0] sm:$0xff]
        %v3604 = vld [vmem:[%s3574 + $0xe8] sm:$0xff]
        %v3605 = vld [vmem:[%s3574 + $0xf0] sm:$0xff]
        %v3606 = vld [vmem:[%s3574 + $0xf8] sm:$0xff]
        %v3609 = vunpack.c.l.b16 %v3539
        %v3610 = vunpack.c.h.b16 %v3539
        %v3611 = vunpack.c.l.b16 %v3573
        %v3612 = vunpack.c.h.b16 %v3573
        %v3613 = vpack.c.b16 %v3611, %v3609
        %v3614 = vpack.c.b16 %v3612, %v3610
        %v3616 = vshrl.u32 %v3613, 16
        %v3618 = vshll.u32 %v3613, 16
        %v3620 = vrot.slane %v3618, 1
        %v3621 = vor.u32 %v3616, %v3620
        %v3623 = vshrl.u32 %v3614, 16
        %v3625 = vshll.u32 %v3614, 16
        %v3627 = vrot.slane %v3625, 1
        %v3628 = vor.u32 %v3623, %v3627
        %v3663 = vunpack.c.l.b16 %v3575
        %v3664 = vunpack.c.h.b16 %v3575
        %v3665 = vunpack.c.l.b16 %v3576
        %v3666 = vunpack.c.h.b16 %v3576
        %v3667 = vunpack.c.l.b16 %v3577
        %v3668 = vunpack.c.h.b16 %v3577
        %v3669 = vunpack.c.l.b16 %v3578
        %v3670 = vunpack.c.h.b16 %v3578
        %v3671 = vunpack.c.l.b16 %v3579
        %v3672 = vunpack.c.h.b16 %v3579
        %v3673 = vunpack.c.l.b16 %v3580
        %v3674 = vunpack.c.h.b16 %v3580
        %v3675 = vunpack.c.l.b16 %v3581
        %v3676 = vunpack.c.h.b16 %v3581
        %v3677 = vunpack.c.l.b16 %v3582
        %v3678 = vunpack.c.h.b16 %v3582
        %v3679 = vunpack.c.l.b16 %v3583
        %v3680 = vunpack.c.h.b16 %v3583
        %v3681 = vunpack.c.l.b16 %v3584
        %v3682 = vunpack.c.h.b16 %v3584
        %v3683 = vunpack.c.l.b16 %v3585
        %v3684 = vunpack.c.h.b16 %v3585
        %v3685 = vunpack.c.l.b16 %v3586
        %v3686 = vunpack.c.h.b16 %v3586
        %v3687 = vunpack.c.l.b16 %v3587
        %v3688 = vunpack.c.h.b16 %v3587
        %v3689 = vunpack.c.l.b16 %v3588
        %v3690 = vunpack.c.h.b16 %v3588
        %v3691 = vunpack.c.l.b16 %v3589
        %v3692 = vunpack.c.h.b16 %v3589
        %v3693 = vunpack.c.l.b16 %v3590
        %v3694 = vunpack.c.h.b16 %v3590
        %v3695 = vunpack.c.l.b16 %v3591
        %v3696 = vunpack.c.h.b16 %v3591
        %v3697 = vunpack.c.l.b16 %v3592
        %v3698 = vunpack.c.h.b16 %v3592
        %v3699 = vunpack.c.l.b16 %v3593
        %v3700 = vunpack.c.h.b16 %v3593
        %v3701 = vunpack.c.l.b16 %v3594
        %v3702 = vunpack.c.h.b16 %v3594
        %v3703 = vunpack.c.l.b16 %v3595
        %v3704 = vunpack.c.h.b16 %v3595
        %v3705 = vunpack.c.l.b16 %v3596
        %v3706 = vunpack.c.h.b16 %v3596
        %v3707 = vunpack.c.l.b16 %v3597
        %v3708 = vunpack.c.h.b16 %v3597
        %v3709 = vunpack.c.l.b16 %v3598
        %v3710 = vunpack.c.h.b16 %v3598
        %v3711 = vunpack.c.l.b16 %v3599
        %v3712 = vunpack.c.h.b16 %v3599
        %v3713 = vunpack.c.l.b16 %v3600
        %v3714 = vunpack.c.h.b16 %v3600
        %v3715 = vunpack.c.l.b16 %v3601
        %v3716 = vunpack.c.h.b16 %v3601
        %v3717 = vunpack.c.l.b16 %v3602
        %v3718 = vunpack.c.h.b16 %v3602
        %v3719 = vunpack.c.l.b16 %v3603
        %v3720 = vunpack.c.h.b16 %v3603
        %v3721 = vunpack.c.l.b16 %v3604
        %v3722 = vunpack.c.h.b16 %v3604
        %v3723 = vunpack.c.l.b16 %v3605
        %v3724 = vunpack.c.h.b16 %v3605
        %v3725 = vunpack.c.l.b16 %v3606
        %v3726 = vunpack.c.h.b16 %v3606
        %v3727 = vpack.c.b16 %v3665, %v3663
        %v3728 = vpack.c.b16 %v3666, %v3664
        %v3729 = vpack.c.b16 %v3669, %v3667
        %v3730 = vpack.c.b16 %v3670, %v3668
        %v3731 = vpack.c.b16 %v3673, %v3671
        %v3732 = vpack.c.b16 %v3674, %v3672
        %v3733 = vpack.c.b16 %v3677, %v3675
        %v3734 = vpack.c.b16 %v3678, %v3676
        %v3735 = vpack.c.b16 %v3681, %v3679
        %v3736 = vpack.c.b16 %v3682, %v3680
        %v3737 = vpack.c.b16 %v3685, %v3683
        %v3738 = vpack.c.b16 %v3686, %v3684
        %v3739 = vpack.c.b16 %v3689, %v3687
        %v3740 = vpack.c.b16 %v3690, %v3688
        %v3741 = vpack.c.b16 %v3693, %v3691
        %v3742 = vpack.c.b16 %v3694, %v3692
        %v3743 = vpack.c.b16 %v3697, %v3695
        %v3744 = vpack.c.b16 %v3698, %v3696
        %v3745 = vpack.c.b16 %v3701, %v3699
        %v3746 = vpack.c.b16 %v3702, %v3700
        %v3747 = vpack.c.b16 %v3705, %v3703
        %v3748 = vpack.c.b16 %v3706, %v3704
        %v3749 = vpack.c.b16 %v3709, %v3707
        %v3750 = vpack.c.b16 %v3710, %v3708
        %v3751 = vpack.c.b16 %v3713, %v3711
        %v3752 = vpack.c.b16 %v3714, %v3712
        %v3753 = vpack.c.b16 %v3717, %v3715
        %v3754 = vpack.c.b16 %v3718, %v3716
        %v3755 = vpack.c.b16 %v3721, %v3719
        %v3756 = vpack.c.b16 %v3722, %v3720
        %v3757 = vpack.c.b16 %v3725, %v3723
        %v3758 = vpack.c.b16 %v3726, %v3724
        %3791 = vmatprep.subr.bf16.mxu0 %v3728
        %3792 = vmatpush1.bf16.msra.mxu0 %v3727
        %3793 = vmatprep.subr.bf16.mxu0 %v3730
        %3794 = vmatpush1.bf16.msra.mxu0 %v3729
        %3795 = vmatprep.subr.bf16.mxu0 %v3732
        %3796 = vmatpush1.bf16.msra.mxu0 %v3731
        %3797 = vmatprep.subr.bf16.mxu0 %v3734
        %3798 = vmatpush1.bf16.msra.mxu0 %v3733
        %3799 = vmatprep.subr.bf16.mxu0 %v3736
        %3800 = vmatpush1.bf16.msra.mxu0 %v3735
        %3801 = vmatprep.subr.bf16.mxu0 %v3738
        %3802 = vmatpush1.bf16.msra.mxu0 %v3737
        %3803 = vmatprep.subr.bf16.mxu0 %v3740
        %3804 = vmatpush1.bf16.msra.mxu0 %v3739
        %3805 = vmatprep.subr.bf16.mxu0 %v3742
        %3806 = vmatpush1.bf16.msra.mxu0 %v3741
        %3807 = vmatprep.subr.bf16.mxu0 %v3744
        %3808 = vmatpush1.bf16.msra.mxu0 %v3743
        %3809 = vmatprep.subr.bf16.mxu0 %v3746
        %3810 = vmatpush1.bf16.msra.mxu0 %v3745
        %3811 = vmatprep.subr.bf16.mxu0 %v3748
        %3812 = vmatpush1.bf16.msra.mxu0 %v3747
        %3813 = vmatprep.subr.bf16.mxu0 %v3750
        %3814 = vmatpush1.bf16.msra.mxu0 %v3749
        %3815 = vmatprep.subr.bf16.mxu0 %v3752
        %3816 = vmatpush1.bf16.msra.mxu0 %v3751
        %3817 = vmatprep.subr.bf16.mxu0 %v3754
        %3818 = vmatpush1.bf16.msra.mxu0 %v3753
        %3819 = vmatprep.subr.bf16.mxu0 %v3756
        %3820 = vmatpush1.bf16.msra.mxu0 %v3755
        %3821 = vmatprep.subr.bf16.mxu0 %v3758
        %3822 = vmatpush1.bf16.msra.mxu0 %v3757
        %3823 = vmatprep.mubr.bf16.mxu0 %v3628
        %3824 = vmatmul.mubr.bf16.gmra.mrb[0].mxu0 %v3621
        %v3825 = vpop.f32.mrb[0].mxu0
        %v3826 = vadd.f32 0.0, %v3825
        %v3827 = vpop.f32.mrb[0].mxu0
        %v3828 = vadd.f32 0.0, %v3827
        %v3829 = vpop.f32.mrb[0].mxu0
        %v3830 = vpop.f32.mrb[0].mxu0
        %3831 = vdwg.mxu0
        %v3832 = vpack.c.b16 %v3609, %v3609
        %v3833 = vpack.c.b16 %v3610, %v3610
        %v3868 = vunpack.c.l.b16 %v3541
        %v3869 = vunpack.c.h.b16 %v3541
        %v3870 = vunpack.c.l.b16 %v3542
        %v3871 = vunpack.c.h.b16 %v3542
        %v3872 = vunpack.c.l.b16 %v3543
        %v3873 = vunpack.c.h.b16 %v3543
        %v3874 = vunpack.c.l.b16 %v3544
        %v3875 = vunpack.c.h.b16 %v3544
        %v3876 = vunpack.c.l.b16 %v3545
        %v3877 = vunpack.c.h.b16 %v3545
        %v3878 = vunpack.c.l.b16 %v3546
        %v3879 = vunpack.c.h.b16 %v3546
        %v3880 = vunpack.c.l.b16 %v3547
        %v3881 = vunpack.c.h.b16 %v3547
        %v3882 = vunpack.c.l.b16 %v3548
        %v3883 = vunpack.c.h.b16 %v3548
        %v3884 = vunpack.c.l.b16 %v3549
        %v3885 = vunpack.c.h.b16 %v3549
        %v3886 = vunpack.c.l.b16 %v3550
        %v3887 = vunpack.c.h.b16 %v3550
        %v3888 = vunpack.c.l.b16 %v3551
        %v3889 = vunpack.c.h.b16 %v3551
        %v3890 = vunpack.c.l.b16 %v3552
        %v3891 = vunpack.c.h.b16 %v3552
        %v3892 = vunpack.c.l.b16 %v3553
        %v3893 = vunpack.c.h.b16 %v3553
        %v3894 = vunpack.c.l.b16 %v3554
        %v3895 = vunpack.c.h.b16 %v3554
        %v3896 = vunpack.c.l.b16 %v3555
        %v3897 = vunpack.c.h.b16 %v3555
        %v3898 = vunpack.c.l.b16 %v3556
        %v3899 = vunpack.c.h.b16 %v3556
        %v3900 = vunpack.c.l.b16 %v3557
        %v3901 = vunpack.c.h.b16 %v3557
        %v3902 = vunpack.c.l.b16 %v3558
        %v3903 = vunpack.c.h.b16 %v3558
        %v3904 = vunpack.c.l.b16 %v3559
        %v3905 = vunpack.c.h.b16 %v3559
        %v3906 = vunpack.c.l.b16 %v3560
        %v3907 = vunpack.c.h.b16 %v3560
        %v3908 = vunpack.c.l.b16 %v3561
        %v3909 = vunpack.c.h.b16 %v3561
        %v3910 = vunpack.c.l.b16 %v3562
        %v3911 = vunpack.c.h.b16 %v3562
        %v3912 = vunpack.c.l.b16 %v3563
        %v3913 = vunpack.c.h.b16 %v3563
        %v3914 = vunpack.c.l.b16 %v3564
        %v3915 = vunpack.c.h.b16 %v3564
        %v3916 = vunpack.c.l.b16 %v3565
        %v3917 = vunpack.c.h.b16 %v3565
        %v3918 = vunpack.c.l.b16 %v3566
        %v3919 = vunpack.c.h.b16 %v3566
        %v3920 = vunpack.c.l.b16 %v3567
        %v3921 = vunpack.c.h.b16 %v3567
        %v3922 = vunpack.c.l.b16 %v3568
        %v3923 = vunpack.c.h.b16 %v3568
        %v3924 = vunpack.c.l.b16 %v3569
        %v3925 = vunpack.c.h.b16 %v3569
        %v3926 = vunpack.c.l.b16 %v3570
        %v3927 = vunpack.c.h.b16 %v3570
        %v3928 = vunpack.c.l.b16 %v3571
        %v3929 = vunpack.c.h.b16 %v3571
        %v3930 = vunpack.c.l.b16 %v3572
        %v3931 = vunpack.c.h.b16 %v3572
        %v3932 = vpack.c.b16 %v3870, %v3868
        %v3933 = vpack.c.b16 %v3871, %v3869
        %v3934 = vpack.c.b16 %v3874, %v3872
        %v3935 = vpack.c.b16 %v3875, %v3873
        %v3936 = vpack.c.b16 %v3878, %v3876
        %v3937 = vpack.c.b16 %v3879, %v3877
        %v3938 = vpack.c.b16 %v3882, %v3880
        %v3939 = vpack.c.b16 %v3883, %v3881
        %v3940 = vpack.c.b16 %v3886, %v3884
        %v3941 = vpack.c.b16 %v3887, %v3885
        %v3942 = vpack.c.b16 %v3890, %v3888
        %v3943 = vpack.c.b16 %v3891, %v3889
        %v3944 = vpack.c.b16 %v3894, %v3892
        %v3945 = vpack.c.b16 %v3895, %v3893
        %v3946 = vpack.c.b16 %v3898, %v3896
        %v3947 = vpack.c.b16 %v3899, %v3897
        %v3948 = vpack.c.b16 %v3902, %v3900
        %v3949 = vpack.c.b16 %v3903, %v3901
        %v3950 = vpack.c.b16 %v3906, %v3904
        %v3951 = vpack.c.b16 %v3907, %v3905
        %v3952 = vpack.c.b16 %v3910, %v3908
        %v3953 = vpack.c.b16 %v3911, %v3909
        %v3954 = vpack.c.b16 %v3914, %v3912
        %v3955 = vpack.c.b16 %v3915, %v3913
        %v3956 = vpack.c.b16 %v3918, %v3916
        %v3957 = vpack.c.b16 %v3919, %v3917
        %v3958 = vpack.c.b16 %v3922, %v3920
        %v3959 = vpack.c.b16 %v3923, %v3921
        %v3960 = vpack.c.b16 %v3926, %v3924
        %v3961 = vpack.c.b16 %v3927, %v3925
        %v3962 = vpack.c.b16 %v3930, %v3928
        %v3963 = vpack.c.b16 %v3931, %v3929
        %3996 = vmatprep.subr.bf16.mxu0 %v3933
        %3997 = vmatpush1.bf16.msra.mxu0 %v3932
        %3998 = vmatprep.subr.bf16.mxu0 %v3935
        %3999 = vmatpush1.bf16.msra.mxu0 %v3934
        %4000 = vmatprep.subr.bf16.mxu0 %v3937
        %4001 = vmatpush1.bf16.msra.mxu0 %v3936
        %4002 = vmatprep.subr.bf16.mxu0 %v3939
        %4003 = vmatpush1.bf16.msra.mxu0 %v3938
        %4004 = vmatprep.subr.bf16.mxu0 %v3941
        %4005 = vmatpush1.bf16.msra.mxu0 %v3940
        %4006 = vmatprep.subr.bf16.mxu0 %v3943
        %4007 = vmatpush1.bf16.msra.mxu0 %v3942
        %4008 = vmatprep.subr.bf16.mxu0 %v3945
        %4009 = vmatpush1.bf16.msra.mxu0 %v3944
        %4010 = vmatprep.subr.bf16.mxu0 %v3947
        %4011 = vmatpush1.bf16.msra.mxu0 %v3946
        %4012 = vmatprep.subr.bf16.mxu0 %v3949
        %4013 = vmatpush1.bf16.msra.mxu0 %v3948
        %4014 = vmatprep.subr.bf16.mxu0 %v3951
        %4015 = vmatpush1.bf16.msra.mxu0 %v3950
        %4016 = vmatprep.subr.bf16.mxu0 %v3953
        %4017 = vmatpush1.bf16.msra.mxu0 %v3952
        %4018 = vmatprep.subr.bf16.mxu0 %v3955
        %4019 = vmatpush1.bf16.msra.mxu0 %v3954
        %4020 = vmatprep.subr.bf16.mxu0 %v3957
        %4021 = vmatpush1.bf16.msra.mxu0 %v3956
        %4022 = vmatprep.subr.bf16.mxu0 %v3959
        %4023 = vmatpush1.bf16.msra.mxu0 %v3958
        %4024 = vmatprep.subr.bf16.mxu0 %v3961
        %4025 = vmatpush1.bf16.msra.mxu0 %v3960
        %4026 = vmatprep.subr.bf16.mxu0 %v3963
        %4027 = vmatpush1.bf16.msra.mxu0 %v3962
        %4028 = vmatprep.mubr.bf16.mxu0 %v3833
        %4029 = vmatmul.mubr.bf16.gmra.mrb[0].mxu0 %v3832
        %v4030 = vpop.f32.mrb[0].mxu0
        %v4031 = vadd.f32 %v3826, %v4030
        %v4032 = vpop.f32.mrb[0].mxu0
        %v4033 = vadd.f32 %v3828, %v4032
        %v4034 = vpop.f32.mrb[0].mxu0
        %v4035 = vpop.f32.mrb[0].mxu0
        %4036 = vdwg.mxu0
        %v4037 = vld [vmem:[#allocation5] sm:$0xee]
        %s4038 = scalar_lea.vmem [#allocation10], 2816
        %v4039 = vld [vmem:[%s4038] sm:$0xff]
        %v4040 = vld [vmem:[%s4038 + $0x8] sm:$0xff]
        %v4041 = vld [vmem:[%s4038 + $0x10] sm:$0xff]
        %v4042 = vld [vmem:[%s4038 + $0x18] sm:$0xff]
        %v4043 = vld [vmem:[%s4038 + $0x20] sm:$0xff]
        %v4044 = vld [vmem:[%s4038 + $0x28] sm:$0xff]
        %v4045 = vld [vmem:[%s4038 + $0x30] sm:$0xff]
        %v4046 = vld [vmem:[%s4038 + $0x38] sm:$0xff]
        %v4047 = vld [vmem:[%s4038 + $0x40] sm:$0xff]
        %v4048 = vld [vmem:[%s4038 + $0x48] sm:$0xff]
        %v4049 = vld [vmem:[%s4038 + $0x50] sm:$0xff]
        %v4050 = vld [vmem:[%s4038 + $0x58] sm:$0xff]
        %v4051 = vld [vmem:[%s4038 + $0x60] sm:$0xff]
        %v4052 = vld [vmem:[%s4038 + $0x68] sm:$0xff]
        %v4053 = vld [vmem:[%s4038 + $0x70] sm:$0xff]
        %v4054 = vld [vmem:[%s4038 + $0x78] sm:$0xff]
        %v4055 = vld [vmem:[%s4038 + $0x80] sm:$0xff]
        %v4056 = vld [vmem:[%s4038 + $0x88] sm:$0xff]
        %v4057 = vld [vmem:[%s4038 + $0x90] sm:$0xff]
        %v4058 = vld [vmem:[%s4038 + $0x98] sm:$0xff]
        %v4059 = vld [vmem:[%s4038 + $0xa0] sm:$0xff]
        %v4060 = vld [vmem:[%s4038 + $0xa8] sm:$0xff]
        %v4061 = vld [vmem:[%s4038 + $0xb0] sm:$0xff]
        %v4062 = vld [vmem:[%s4038 + $0xb8] sm:$0xff]
        %v4063 = vld [vmem:[%s4038 + $0xc0] sm:$0xff]
        %v4064 = vld [vmem:[%s4038 + $0xc8] sm:$0xff]
        %v4065 = vld [vmem:[%s4038 + $0xd0] sm:$0xff]
        %v4066 = vld [vmem:[%s4038 + $0xd8] sm:$0xff]
        %v4067 = vld [vmem:[%s4038 + $0xe0] sm:$0xff]
        %v4068 = vld [vmem:[%s4038 + $0xe8] sm:$0xff]
        %v4069 = vld [vmem:[%s4038 + $0xf0] sm:$0xff]
        %v4070 = vld [vmem:[%s4038 + $0xf8] sm:$0xff]
        %v4072 = vunpack.c.l.b16 %v4037
        %v4073 = vunpack.c.h.b16 %v4037
        %v4074 = vpack.c.b16 %v3611, %v4072
        %v4075 = vpack.c.b16 %v3612, %v4073
        %v4076 = vrot.slane %v4074, 1
        %v4077 = vrot.slane %v4075, 1
        %v4112 = vunpack.c.l.b16 %v4039
        %v4113 = vunpack.c.h.b16 %v4039
        %v4114 = vunpack.c.l.b16 %v4040
        %v4115 = vunpack.c.h.b16 %v4040
        %v4116 = vunpack.c.l.b16 %v4041
        %v4117 = vunpack.c.h.b16 %v4041
        %v4118 = vunpack.c.l.b16 %v4042
        %v4119 = vunpack.c.h.b16 %v4042
        %v4120 = vunpack.c.l.b16 %v4043
        %v4121 = vunpack.c.h.b16 %v4043
        %v4122 = vunpack.c.l.b16 %v4044
        %v4123 = vunpack.c.h.b16 %v4044
        %v4124 = vunpack.c.l.b16 %v4045
        %v4125 = vunpack.c.h.b16 %v4045
        %v4126 = vunpack.c.l.b16 %v4046
        %v4127 = vunpack.c.h.b16 %v4046
        %v4128 = vunpack.c.l.b16 %v4047
        %v4129 = vunpack.c.h.b16 %v4047
        %v4130 = vunpack.c.l.b16 %v4048
        %v4131 = vunpack.c.h.b16 %v4048
        %v4132 = vunpack.c.l.b16 %v4049
        %v4133 = vunpack.c.h.b16 %v4049
        %v4134 = vunpack.c.l.b16 %v4050
        %v4135 = vunpack.c.h.b16 %v4050
        %v4136 = vunpack.c.l.b16 %v4051
        %v4137 = vunpack.c.h.b16 %v4051
        %v4138 = vunpack.c.l.b16 %v4052
        %v4139 = vunpack.c.h.b16 %v4052
        %v4140 = vunpack.c.l.b16 %v4053
        %v4141 = vunpack.c.h.b16 %v4053
        %v4142 = vunpack.c.l.b16 %v4054
        %v4143 = vunpack.c.h.b16 %v4054
        %v4144 = vunpack.c.l.b16 %v4055
        %v4145 = vunpack.c.h.b16 %v4055
        %v4146 = vunpack.c.l.b16 %v4056
        %v4147 = vunpack.c.h.b16 %v4056
        %v4148 = vunpack.c.l.b16 %v4057
        %v4149 = vunpack.c.h.b16 %v4057
        %v4150 = vunpack.c.l.b16 %v4058
        %v4151 = vunpack.c.h.b16 %v4058
        %v4152 = vunpack.c.l.b16 %v4059
        %v4153 = vunpack.c.h.b16 %v4059
        %v4154 = vunpack.c.l.b16 %v4060
        %v4155 = vunpack.c.h.b16 %v4060
        %v4156 = vunpack.c.l.b16 %v4061
        %v4157 = vunpack.c.h.b16 %v4061
        %v4158 = vunpack.c.l.b16 %v4062
        %v4159 = vunpack.c.h.b16 %v4062
        %v4160 = vunpack.c.l.b16 %v4063
        %v4161 = vunpack.c.h.b16 %v4063
        %v4162 = vunpack.c.l.b16 %v4064
        %v4163 = vunpack.c.h.b16 %v4064
        %v4164 = vunpack.c.l.b16 %v4065
        %v4165 = vunpack.c.h.b16 %v4065
        %v4166 = vunpack.c.l.b16 %v4066
        %v4167 = vunpack.c.h.b16 %v4066
        %v4168 = vunpack.c.l.b16 %v4067
        %v4169 = vunpack.c.h.b16 %v4067
        %v4170 = vunpack.c.l.b16 %v4068
        %v4171 = vunpack.c.h.b16 %v4068
        %v4172 = vunpack.c.l.b16 %v4069
        %v4173 = vunpack.c.h.b16 %v4069
        %v4174 = vunpack.c.l.b16 %v4070
        %v4175 = vunpack.c.h.b16 %v4070
        %v4176 = vpack.c.b16 %v4114, %v4112
        %v4177 = vpack.c.b16 %v4115, %v4113
        %v4178 = vpack.c.b16 %v4118, %v4116
        %v4179 = vpack.c.b16 %v4119, %v4117
        %v4180 = vpack.c.b16 %v4122, %v4120
        %v4181 = vpack.c.b16 %v4123, %v4121
        %v4182 = vpack.c.b16 %v4126, %v4124
        %v4183 = vpack.c.b16 %v4127, %v4125
        %v4184 = vpack.c.b16 %v4130, %v4128
        %v4185 = vpack.c.b16 %v4131, %v4129
        %v4186 = vpack.c.b16 %v4134, %v4132
        %v4187 = vpack.c.b16 %v4135, %v4133
        %v4188 = vpack.c.b16 %v4138, %v4136
        %v4189 = vpack.c.b16 %v4139, %v4137
        %v4190 = vpack.c.b16 %v4142, %v4140
        %v4191 = vpack.c.b16 %v4143, %v4141
        %v4192 = vpack.c.b16 %v4146, %v4144
        %v4193 = vpack.c.b16 %v4147, %v4145
        %v4194 = vpack.c.b16 %v4150, %v4148
        %v4195 = vpack.c.b16 %v4151, %v4149
        %v4196 = vpack.c.b16 %v4154, %v4152
        %v4197 = vpack.c.b16 %v4155, %v4153
        %v4198 = vpack.c.b16 %v4158, %v4156
        %v4199 = vpack.c.b16 %v4159, %v4157
        %v4200 = vpack.c.b16 %v4162, %v4160
        %v4201 = vpack.c.b16 %v4163, %v4161
        %v4202 = vpack.c.b16 %v4166, %v4164
        %v4203 = vpack.c.b16 %v4167, %v4165
        %v4204 = vpack.c.b16 %v4170, %v4168
        %v4205 = vpack.c.b16 %v4171, %v4169
        %v4206 = vpack.c.b16 %v4174, %v4172
        %v4207 = vpack.c.b16 %v4175, %v4173
        %4240 = vmatprep.subr.bf16.mxu0 %v4177
        %4241 = vmatpush1.bf16.msra.mxu0 %v4176
        %4242 = vmatprep.subr.bf16.mxu0 %v4179
        %4243 = vmatpush1.bf16.msra.mxu0 %v4178
        %4244 = vmatprep.subr.bf16.mxu0 %v4181
        %4245 = vmatpush1.bf16.msra.mxu0 %v4180
        %4246 = vmatprep.subr.bf16.mxu0 %v4183
        %4247 = vmatpush1.bf16.msra.mxu0 %v4182
        %4248 = vmatprep.subr.bf16.mxu0 %v4185
        %4249 = vmatpush1.bf16.msra.mxu0 %v4184
        %4250 = vmatprep.subr.bf16.mxu0 %v4187
        %4251 = vmatpush1.bf16.msra.mxu0 %v4186
        %4252 = vmatprep.subr.bf16.mxu0 %v4189
        %4253 = vmatpush1.bf16.msra.mxu0 %v4188
        %4254 = vmatprep.subr.bf16.mxu0 %v4191
        %4255 = vmatpush1.bf16.msra.mxu0 %v4190
        %4256 = vmatprep.subr.bf16.mxu0 %v4193
        %4257 = vmatpush1.bf16.msra.mxu0 %v4192
        %4258 = vmatprep.subr.bf16.mxu0 %v4195
        %4259 = vmatpush1.bf16.msra.mxu0 %v4194
        %4260 = vmatprep.subr.bf16.mxu0 %v4197
        %4261 = vmatpush1.bf16.msra.mxu0 %v4196
        %4262 = vmatprep.subr.bf16.mxu0 %v4199
        %4263 = vmatpush1.bf16.msra.mxu0 %v4198
        %4264 = vmatprep.subr.bf16.mxu0 %v4201
        %4265 = vmatpush1.bf16.msra.mxu0 %v4200
        %4266 = vmatprep.subr.bf16.mxu0 %v4203
        %4267 = vmatpush1.bf16.msra.mxu0 %v4202
        %4268 = vmatprep.subr.bf16.mxu0 %v4205
        %4269 = vmatpush1.bf16.msra.mxu0 %v4204
        %4270 = vmatprep.subr.bf16.mxu0 %v4207
        %4271 = vmatpush1.bf16.msra.mxu0 %v4206
        %4272 = vmatprep.mubr.bf16.mxu0 %v4077
        %4273 = vmatmul.mubr.bf16.gmra.mrb[0].mxu0 %v4076
        %v4274 = vpop.f32.mrb[0].mxu0
        %v4275 = vadd.f32 0.0, %v4274
        %v4276 = vpop.f32.mrb[0].mxu0
        %v4277 = vadd.f32 0.0, %v4276
        %v4278 = vpop.f32.mrb[0].mxu0
        %v4279 = vpop.f32.mrb[0].mxu0
        %4280 = vdwg.mxu0
        %v4281 = vadd.f32 %v4031, %v4275
        %v4282 = vadd.f32 %v4033, %v4277
        %s4283 = scalar_lea.vmem [#allocation12], 4
        %v4284 = vld [vmem:[%s4283] ss:$8 sm:$0x3]
        %v4286 = vlaneseq
        %v4287 = vshrl.u32 %v4286, 7
        %v4288 = vsub.s32 0, %v4287
        %v4289 = vrot.slane %v4284, %v4288
        %v4290 = vlaneseq
        %v4291 = vshrl.u32 %v4290, 7
        %v4292 = vsub.s32 1, %v4291
        %v4293 = vrot.slane %v4284, %v4292
        %v4296 = vadd.f32 %v4281, %v4289
        %v4297 = vadd.f32 %v4282, %v4293
        %v4298 = vadd.f32 %v4296, %v3533
        %v4299 = vadd.f32 %v4297, %v3535
        %v4300 = vmax.f32 %v4298, 0.0
        %v4301 = vmax.f32 %v4299, 0.0
        %v4302 = vpack.c.bf16 %v4300, %v4300
        %v4303 = vpack.c.bf16 %v4301, %v4301
        %v4306 = vunpack.c.l.b16 %v4302
        %v4307 = vunpack.c.l.b16 %v4303
        %v4308 = vpack.c.b16 %v4307, %v4306
        %v4310 = vshrl.u32 %v4308, 16
        %v4312 = vrot.slane %v4310, 7
        %v4313 = vshll.u32 %v4308, 16
        %v4315 = vor.u32 %v4312, %v4313
        %v4316 = vrot.slane %v4312, 4
        %v4319 = vld [vmem:[#allocation6] sm:$0xff]
        %v4320 = vsel %vm689, %v4315, %v4319
        %4321 = vst [vmem:[#allocation6] sm:$0xff] %v4320
        %v4322 = vld [vmem:[#allocation6 + $0x8] sm:$0x11]
        %v4323 = vsel %vm699, %v4316, %v4322
        %4324 = vst [vmem:[#allocation6 + $0x8] sm:$0x11] %v4323
        %v4325 = vld [vmem:[#allocation6] sm:$0xff]
        %v4326 = vld [vmem:[#allocation6 + $0x8] sm:$0x11]
        %v4327 = vld [vmem:[#allocation15] sm:$0x3]
        %v4330 = vunpack.c.l.b16 %v4325
        %v4331 = vunpack.c.h.b16 %v4325
        %v4332 = vunpack.c.l.b16 %v4326
        %v4333 = vunpack.c.h.b16 %v4326
        %v4334 = vpack.c.b16 %v4332, %v4330
        %v4335 = vpack.c.b16 %v4333, %v4331
        %vm4336 = vcmask 80896
        %v4338 = vsel %vm4336, %v4327, 0
        %vm4340 = vcmask 1044480
        %v4342 = vsel %vm4340, %v4334, 0
        %v4345 = vsel %vm4340, %v4335, 0
        %4347 = vmatprep.subr.bf16.mxu0 %v4345
        %4348 = vmatpush1.bf16.msra.mxu0 %v4342
        %4349 = vmatprep.subr.bf16.mxu0 0
        %4350 = vmatpush1.bf16.msra.mxu0 0
        %4351 = vmatprep.subr.bf16.mxu0 0
        %4352 = vmatpush1.bf16.msra.mxu0 0
        %4353 = vmatprep.subr.bf16.mxu0 0
        %4354 = vmatpush1.bf16.msra.mxu0 0
        %4355 = vmatprep.subr.bf16.mxu0 0
        %4356 = vmatpush1.bf16.msra.mxu0 0
        %4357 = vmatprep.subr.bf16.mxu0 0
        %4358 = vmatpush1.bf16.msra.mxu0 0
        %4359 = vmatprep.subr.bf16.mxu0 0
        %4360 = vmatpush1.bf16.msra.mxu0 0
        %4361 = vmatprep.subr.bf16.mxu0 0
        %4362 = vmatpush1.bf16.msra.mxu0 0
        %4363 = vmatprep.subr.bf16.mxu0 0
        %4364 = vmatpush1.bf16.msra.mxu0 0
        %4365 = vmatprep.subr.bf16.mxu0 0
        %4366 = vmatpush1.bf16.msra.mxu0 0
        %4367 = vmatprep.subr.bf16.mxu0 0
        %4368 = vmatpush1.bf16.msra.mxu0 0
        %4369 = vmatprep.subr.bf16.mxu0 0
        %4370 = vmatpush1.bf16.msra.mxu0 0
        %4371 = vmatprep.subr.bf16.mxu0 0
        %4372 = vmatpush1.bf16.msra.mxu0 0
        %4373 = vmatprep.subr.bf16.mxu0 0
        %4374 = vmatpush1.bf16.msra.mxu0 0
        %4375 = vmatprep.subr.bf16.mxu0 0
        %4376 = vmatpush1.bf16.msra.mxu0 0
        %4377 = vmatprep.subr.bf16.mxu0 0
        %4378 = vmatpush1.bf16.msra.mxu0 0
        %4379 = vmatprep.mubr.bf16.mxu0 0
        %4380 = vmatmul.mubr.bf16.gmra.mrb[0].mxu0 %v4338
        %v4381 = vpop.f32.mrb[0].mxu0
        %v4382 = vadd.f32 0.0, %v4381
        %v4383 = vpop.f32.mrb[0].mxu0
        %v4384 = vadd.f32 0.0, %v4383
        %v4385 = vpop.f32.mrb[0].mxu0
        %v4386 = vpop.f32.mrb[0].mxu0
        %4387 = vdwg.mxu0
        %v4388 = vpack.c.bf16 %v4382, %v4382
        %v4389 = vpack.c.bf16 %v4384, %v4384
        %s4390 = scalar_lea.vmem [#allocation10], 3072
        %v4391 = vld [vmem:[%s4390] sm:$0xff]
        %v4392 = vld [vmem:[%s4390 + $0x8] sm:$0xff]
        %v4393 = vld [vmem:[%s4390 + $0x10] sm:$0xff]
        %v4394 = vld [vmem:[%s4390 + $0x18] sm:$0xff]
        %v4395 = vld [vmem:[%s4390 + $0x20] sm:$0xff]
        %v4396 = vld [vmem:[%s4390 + $0x28] sm:$0xff]
        %v4397 = vld [vmem:[%s4390 + $0x30] sm:$0xff]
        %v4398 = vld [vmem:[%s4390 + $0x38] sm:$0xff]
        %v4399 = vld [vmem:[%s4390 + $0x40] sm:$0xff]
        %v4400 = vld [vmem:[%s4390 + $0x48] sm:$0xff]
        %v4401 = vld [vmem:[%s4390 + $0x50] sm:$0xff]
        %v4402 = vld [vmem:[%s4390 + $0x58] sm:$0xff]
        %v4403 = vld [vmem:[%s4390 + $0x60] sm:$0xff]
        %v4404 = vld [vmem:[%s4390 + $0x68] sm:$0xff]
        %v4405 = vld [vmem:[%s4390 + $0x70] sm:$0xff]
        %v4406 = vld [vmem:[%s4390 + $0x78] sm:$0xff]
        %v4407 = vld [vmem:[%s4390 + $0x80] sm:$0xff]
        %v4408 = vld [vmem:[%s4390 + $0x88] sm:$0xff]
        %v4409 = vld [vmem:[%s4390 + $0x90] sm:$0xff]
        %v4410 = vld [vmem:[%s4390 + $0x98] sm:$0xff]
        %v4411 = vld [vmem:[%s4390 + $0xa0] sm:$0xff]
        %v4412 = vld [vmem:[%s4390 + $0xa8] sm:$0xff]
        %v4413 = vld [vmem:[%s4390 + $0xb0] sm:$0xff]
        %v4414 = vld [vmem:[%s4390 + $0xb8] sm:$0xff]
        %v4415 = vld [vmem:[%s4390 + $0xc0] sm:$0xff]
        %v4416 = vld [vmem:[%s4390 + $0xc8] sm:$0xff]
        %v4417 = vld [vmem:[%s4390 + $0xd0] sm:$0xff]
        %v4418 = vld [vmem:[%s4390 + $0xd8] sm:$0xff]
        %v4419 = vld [vmem:[%s4390 + $0xe0] sm:$0xff]
        %v4420 = vld [vmem:[%s4390 + $0xe8] sm:$0xff]
        %v4421 = vld [vmem:[%s4390 + $0xf0] sm:$0xff]
        %v4422 = vld [vmem:[%s4390 + $0xf8] sm:$0xff]
        %s4423 = scalar_lea.vmem [#allocation15], 2
        %v4424 = vld [vmem:[%s4423] sm:$0x3]
        %v4426 = vsel %vm4336, %v4424, 0
        %4428 = vmatprep.subr.bf16.mxu0 %v4345
        %4429 = vmatpush1.bf16.msra.mxu0 %v4342
        %4430 = vmatprep.subr.bf16.mxu0 0
        %4431 = vmatpush1.bf16.msra.mxu0 0
        %4432 = vmatprep.subr.bf16.mxu0 0
        %4433 = vmatpush1.bf16.msra.mxu0 0
        %4434 = vmatprep.subr.bf16.mxu0 0
        %4435 = vmatpush1.bf16.msra.mxu0 0
        %4436 = vmatprep.subr.bf16.mxu0 0
        %4437 = vmatpush1.bf16.msra.mxu0 0
        %4438 = vmatprep.subr.bf16.mxu0 0
        %4439 = vmatpush1.bf16.msra.mxu0 0
        %4440 = vmatprep.subr.bf16.mxu0 0
        %4441 = vmatpush1.bf16.msra.mxu0 0
        %4442 = vmatprep.subr.bf16.mxu0 0
        %4443 = vmatpush1.bf16.msra.mxu0 0
        %4444 = vmatprep.subr.bf16.mxu0 0
        %4445 = vmatpush1.bf16.msra.mxu0 0
        %4446 = vmatprep.subr.bf16.mxu0 0
        %4447 = vmatpush1.bf16.msra.mxu0 0
        %4448 = vmatprep.subr.bf16.mxu0 0
        %4449 = vmatpush1.bf16.msra.mxu0 0
        %4450 = vmatprep.subr.bf16.mxu0 0
        %4451 = vmatpush1.bf16.msra.mxu0 0
        %4452 = vmatprep.subr.bf16.mxu0 0
        %4453 = vmatpush1.bf16.msra.mxu0 0
        %4454 = vmatprep.subr.bf16.mxu0 0
        %4455 = vmatpush1.bf16.msra.mxu0 0
        %4456 = vmatprep.subr.bf16.mxu0 0
        %4457 = vmatpush1.bf16.msra.mxu0 0
        %4458 = vmatprep.subr.bf16.mxu0 0
        %4459 = vmatpush1.bf16.msra.mxu0 0
        %4460 = vmatprep.mubr.bf16.mxu0 0
        %4461 = vmatmul.mubr.bf16.gmra.mrb[0].mxu0 %v4426
        %v4462 = vpop.f32.mrb[0].mxu0
        %v4463 = vadd.f32 0.0, %v4462
        %v4464 = vpop.f32.mrb[0].mxu0
        %v4465 = vadd.f32 0.0, %v4464
        %v4466 = vpop.f32.mrb[0].mxu0
        %v4467 = vpop.f32.mrb[0].mxu0
        %4468 = vdwg.mxu0
        %v4469 = vpack.c.bf16 %v4463, %v4463
        %v4470 = vpack.c.bf16 %v4465, %v4465
        %s4471 = scalar_lea.vmem [#allocation10], 3328
        %v4472 = vld [vmem:[%s4471] sm:$0xff]
        %v4473 = vld [vmem:[%s4471 + $0x8] sm:$0xff]
        %v4474 = vld [vmem:[%s4471 + $0x10] sm:$0xff]
        %v4475 = vld [vmem:[%s4471 + $0x18] sm:$0xff]
        %v4476 = vld [vmem:[%s4471 + $0x20] sm:$0xff]
        %v4477 = vld [vmem:[%s4471 + $0x28] sm:$0xff]
        %v4478 = vld [vmem:[%s4471 + $0x30] sm:$0xff]
        %v4479 = vld [vmem:[%s4471 + $0x38] sm:$0xff]
        %v4480 = vld [vmem:[%s4471 + $0x40] sm:$0xff]
        %v4481 = vld [vmem:[%s4471 + $0x48] sm:$0xff]
        %v4482 = vld [vmem:[%s4471 + $0x50] sm:$0xff]
        %v4483 = vld [vmem:[%s4471 + $0x58] sm:$0xff]
        %v4484 = vld [vmem:[%s4471 + $0x60] sm:$0xff]
        %v4485 = vld [vmem:[%s4471 + $0x68] sm:$0xff]
        %v4486 = vld [vmem:[%s4471 + $0x70] sm:$0xff]
        %v4487 = vld [vmem:[%s4471 + $0x78] sm:$0xff]
        %v4488 = vld [vmem:[%s4471 + $0x80] sm:$0xff]
        %v4489 = vld [vmem:[%s4471 + $0x88] sm:$0xff]
        %v4490 = vld [vmem:[%s4471 + $0x90] sm:$0xff]
        %v4491 = vld [vmem:[%s4471 + $0x98] sm:$0xff]
        %v4492 = vld [vmem:[%s4471 + $0xa0] sm:$0xff]
        %v4493 = vld [vmem:[%s4471 + $0xa8] sm:$0xff]
        %v4494 = vld [vmem:[%s4471 + $0xb0] sm:$0xff]
        %v4495 = vld [vmem:[%s4471 + $0xb8] sm:$0xff]
        %v4496 = vld [vmem:[%s4471 + $0xc0] sm:$0xff]
        %v4497 = vld [vmem:[%s4471 + $0xc8] sm:$0xff]
        %v4498 = vld [vmem:[%s4471 + $0xd0] sm:$0xff]
        %v4499 = vld [vmem:[%s4471 + $0xd8] sm:$0xff]
        %v4500 = vld [vmem:[%s4471 + $0xe0] sm:$0xff]
        %v4501 = vld [vmem:[%s4471 + $0xe8] sm:$0xff]
        %v4502 = vld [vmem:[%s4471 + $0xf0] sm:$0xff]
        %v4503 = vld [vmem:[%s4471 + $0xf8] sm:$0xff]
        %v4536 = vunpack.c.l.b16 %v4472
        %v4537 = vunpack.c.h.b16 %v4472
        %v4538 = vunpack.c.l.b16 %v4473
        %v4539 = vunpack.c.h.b16 %v4473
        %v4540 = vunpack.c.l.b16 %v4474
        %v4541 = vunpack.c.h.b16 %v4474
        %v4542 = vunpack.c.l.b16 %v4475
        %v4543 = vunpack.c.h.b16 %v4475
        %v4544 = vunpack.c.l.b16 %v4476
        %v4545 = vunpack.c.h.b16 %v4476
        %v4546 = vunpack.c.l.b16 %v4477
        %v4547 = vunpack.c.h.b16 %v4477
        %v4548 = vunpack.c.l.b16 %v4478
        %v4549 = vunpack.c.h.b16 %v4478
        %v4550 = vunpack.c.l.b16 %v4479
        %v4551 = vunpack.c.h.b16 %v4479
        %v4552 = vunpack.c.l.b16 %v4480
        %v4553 = vunpack.c.h.b16 %v4480
        %v4554 = vunpack.c.l.b16 %v4481
        %v4555 = vunpack.c.h.b16 %v4481
        %v4556 = vunpack.c.l.b16 %v4482
        %v4557 = vunpack.c.h.b16 %v4482
        %v4558 = vunpack.c.l.b16 %v4483
        %v4559 = vunpack.c.h.b16 %v4483
        %v4560 = vunpack.c.l.b16 %v4484
        %v4561 = vunpack.c.h.b16 %v4484
        %v4562 = vunpack.c.l.b16 %v4485
        %v4563 = vunpack.c.h.b16 %v4485
        %v4564 = vunpack.c.l.b16 %v4486
        %v4565 = vunpack.c.h.b16 %v4486
        %v4566 = vunpack.c.l.b16 %v4487
        %v4567 = vunpack.c.h.b16 %v4487
        %v4568 = vunpack.c.l.b16 %v4488
        %v4569 = vunpack.c.h.b16 %v4488
        %v4570 = vunpack.c.l.b16 %v4489
        %v4571 = vunpack.c.h.b16 %v4489
        %v4572 = vunpack.c.l.b16 %v4490
        %v4573 = vunpack.c.h.b16 %v4490
        %v4574 = vunpack.c.l.b16 %v4491
        %v4575 = vunpack.c.h.b16 %v4491
        %v4576 = vunpack.c.l.b16 %v4492
        %v4577 = vunpack.c.h.b16 %v4492
        %v4578 = vunpack.c.l.b16 %v4493
        %v4579 = vunpack.c.h.b16 %v4493
        %v4580 = vunpack.c.l.b16 %v4494
        %v4581 = vunpack.c.h.b16 %v4494
        %v4582 = vunpack.c.l.b16 %v4495
        %v4583 = vunpack.c.h.b16 %v4495
        %v4584 = vunpack.c.l.b16 %v4496
        %v4585 = vunpack.c.h.b16 %v4496
        %v4586 = vunpack.c.l.b16 %v4497
        %v4587 = vunpack.c.h.b16 %v4497
        %v4588 = vunpack.c.l.b16 %v4498
        %v4589 = vunpack.c.h.b16 %v4498
        %v4590 = vunpack.c.l.b16 %v4499
        %v4591 = vunpack.c.h.b16 %v4499
        %v4592 = vunpack.c.l.b16 %v4500
        %v4593 = vunpack.c.h.b16 %v4500
        %v4594 = vunpack.c.l.b16 %v4501
        %v4595 = vunpack.c.h.b16 %v4501
        %v4596 = vunpack.c.l.b16 %v4502
        %v4597 = vunpack.c.h.b16 %v4502
        %v4598 = vunpack.c.l.b16 %v4503
        %v4599 = vunpack.c.h.b16 %v4503
        %v4600 = vpack.c.b16 %v4538, %v4536
        %v4601 = vpack.c.b16 %v4539, %v4537
        %v4602 = vpack.c.b16 %v4542, %v4540
        %v4603 = vpack.c.b16 %v4543, %v4541
        %v4604 = vpack.c.b16 %v4546, %v4544
        %v4605 = vpack.c.b16 %v4547, %v4545
        %v4606 = vpack.c.b16 %v4550, %v4548
        %v4607 = vpack.c.b16 %v4551, %v4549
        %v4608 = vpack.c.b16 %v4554, %v4552
        %v4609 = vpack.c.b16 %v4555, %v4553
        %v4610 = vpack.c.b16 %v4558, %v4556
        %v4611 = vpack.c.b16 %v4559, %v4557
        %v4612 = vpack.c.b16 %v4562, %v4560
        %v4613 = vpack.c.b16 %v4563, %v4561
        %v4614 = vpack.c.b16 %v4566, %v4564
        %v4615 = vpack.c.b16 %v4567, %v4565
        %v4616 = vpack.c.b16 %v4570, %v4568
        %v4617 = vpack.c.b16 %v4571, %v4569
        %v4618 = vpack.c.b16 %v4574, %v4572
        %v4619 = vpack.c.b16 %v4575, %v4573
        %v4620 = vpack.c.b16 %v4578, %v4576
        %v4621 = vpack.c.b16 %v4579, %v4577
        %v4622 = vpack.c.b16 %v4582, %v4580
        %v4623 = vpack.c.b16 %v4583, %v4581
        %v4624 = vpack.c.b16 %v4586, %v4584
        %v4625 = vpack.c.b16 %v4587, %v4585
        %v4626 = vpack.c.b16 %v4590, %v4588
        %v4627 = vpack.c.b16 %v4591, %v4589
        %v4628 = vpack.c.b16 %v4594, %v4592
        %v4629 = vpack.c.b16 %v4595, %v4593
        %v4630 = vpack.c.b16 %v4598, %v4596
        %v4631 = vpack.c.b16 %v4599, %v4597
        %4664 = vmatprep.subr.bf16.mxu0 %v4601
        %4665 = vmatpush1.bf16.msra.mxu0 %v4600
        %4666 = vmatprep.subr.bf16.mxu0 %v4603
        %4667 = vmatpush1.bf16.msra.mxu0 %v4602
        %4668 = vmatprep.subr.bf16.mxu0 %v4605
        %4669 = vmatpush1.bf16.msra.mxu0 %v4604
        %4670 = vmatprep.subr.bf16.mxu0 %v4607
        %4671 = vmatpush1.bf16.msra.mxu0 %v4606
        %4672 = vmatprep.subr.bf16.mxu0 %v4609
        %4673 = vmatpush1.bf16.msra.mxu0 %v4608
        %4674 = vmatprep.subr.bf16.mxu0 %v4611
        %4675 = vmatpush1.bf16.msra.mxu0 %v4610
        %4676 = vmatprep.subr.bf16.mxu0 %v4613
        %4677 = vmatpush1.bf16.msra.mxu0 %v4612
        %4678 = vmatprep.subr.bf16.mxu0 %v4615
        %4679 = vmatpush1.bf16.msra.mxu0 %v4614
        %4680 = vmatprep.subr.bf16.mxu0 %v4617
        %4681 = vmatpush1.bf16.msra.mxu0 %v4616
        %4682 = vmatprep.subr.bf16.mxu0 %v4619
        %4683 = vmatpush1.bf16.msra.mxu0 %v4618
        %4684 = vmatprep.subr.bf16.mxu0 %v4621
        %4685 = vmatpush1.bf16.msra.mxu0 %v4620
        %4686 = vmatprep.subr.bf16.mxu0 %v4623
        %4687 = vmatpush1.bf16.msra.mxu0 %v4622
        %4688 = vmatprep.subr.bf16.mxu0 %v4625
        %4689 = vmatpush1.bf16.msra.mxu0 %v4624
        %4690 = vmatprep.subr.bf16.mxu0 %v4627
        %4691 = vmatpush1.bf16.msra.mxu0 %v4626
        %4692 = vmatprep.subr.bf16.mxu0 %v4629
        %4693 = vmatpush1.bf16.msra.mxu0 %v4628
        %4694 = vmatprep.subr.bf16.mxu0 %v4631
        %4695 = vmatpush1.bf16.msra.mxu0 %v4630
        %4696 = vmatprep.mubr.bf16.mxu0 %v4470
        %4697 = vmatmul.mubr.bf16.gmra.mrb[0].mxu0 %v4469
        %v4698 = vpop.f32.mrb[0].mxu0
        %v4699 = vadd.f32 0.0, %v4698
        %v4700 = vpop.f32.mrb[0].mxu0
        %v4701 = vadd.f32 0.0, %v4700
        %v4702 = vpop.f32.mrb[0].mxu0
        %v4703 = vpop.f32.mrb[0].mxu0
        %4704 = vdwg.mxu0
        %v4737 = vunpack.c.l.b16 %v4391
        %v4738 = vunpack.c.h.b16 %v4391
        %v4739 = vunpack.c.l.b16 %v4392
        %v4740 = vunpack.c.h.b16 %v4392
        %v4741 = vunpack.c.l.b16 %v4393
        %v4742 = vunpack.c.h.b16 %v4393
        %v4743 = vunpack.c.l.b16 %v4394
        %v4744 = vunpack.c.h.b16 %v4394
        %v4745 = vunpack.c.l.b16 %v4395
        %v4746 = vunpack.c.h.b16 %v4395
        %v4747 = vunpack.c.l.b16 %v4396
        %v4748 = vunpack.c.h.b16 %v4396
        %v4749 = vunpack.c.l.b16 %v4397
        %v4750 = vunpack.c.h.b16 %v4397
        %v4751 = vunpack.c.l.b16 %v4398
        %v4752 = vunpack.c.h.b16 %v4398
        %v4753 = vunpack.c.l.b16 %v4399
        %v4754 = vunpack.c.h.b16 %v4399
        %v4755 = vunpack.c.l.b16 %v4400
        %v4756 = vunpack.c.h.b16 %v4400
        %v4757 = vunpack.c.l.b16 %v4401
        %v4758 = vunpack.c.h.b16 %v4401
        %v4759 = vunpack.c.l.b16 %v4402
        %v4760 = vunpack.c.h.b16 %v4402
        %v4761 = vunpack.c.l.b16 %v4403
        %v4762 = vunpack.c.h.b16 %v4403
        %v4763 = vunpack.c.l.b16 %v4404
        %v4764 = vunpack.c.h.b16 %v4404
        %v4765 = vunpack.c.l.b16 %v4405
        %v4766 = vunpack.c.h.b16 %v4405
        %v4767 = vunpack.c.l.b16 %v4406
        %v4768 = vunpack.c.h.b16 %v4406
        %v4769 = vunpack.c.l.b16 %v4407
        %v4770 = vunpack.c.h.b16 %v4407
        %v4771 = vunpack.c.l.b16 %v4408
        %v4772 = vunpack.c.h.b16 %v4408
        %v4773 = vunpack.c.l.b16 %v4409
        %v4774 = vunpack.c.h.b16 %v4409
        %v4775 = vunpack.c.l.b16 %v4410
        %v4776 = vunpack.c.h.b16 %v4410
        %v4777 = vunpack.c.l.b16 %v4411
        %v4778 = vunpack.c.h.b16 %v4411
        %v4779 = vunpack.c.l.b16 %v4412
        %v4780 = vunpack.c.h.b16 %v4412
        %v4781 = vunpack.c.l.b16 %v4413
        %v4782 = vunpack.c.h.b16 %v4413
        %v4783 = vunpack.c.l.b16 %v4414
        %v4784 = vunpack.c.h.b16 %v4414
        %v4785 = vunpack.c.l.b16 %v4415
        %v4786 = vunpack.c.h.b16 %v4415
        %v4787 = vunpack.c.l.b16 %v4416
        %v4788 = vunpack.c.h.b16 %v4416
        %v4789 = vunpack.c.l.b16 %v4417
        %v4790 = vunpack.c.h.b16 %v4417
        %v4791 = vunpack.c.l.b16 %v4418
        %v4792 = vunpack.c.h.b16 %v4418
        %v4793 = vunpack.c.l.b16 %v4419
        %v4794 = vunpack.c.h.b16 %v4419
        %v4795 = vunpack.c.l.b16 %v4420
        %v4796 = vunpack.c.h.b16 %v4420
        %v4797 = vunpack.c.l.b16 %v4421
        %v4798 = vunpack.c.h.b16 %v4421
        %v4799 = vunpack.c.l.b16 %v4422
        %v4800 = vunpack.c.h.b16 %v4422
        %v4801 = vpack.c.b16 %v4739, %v4737
        %v4802 = vpack.c.b16 %v4740, %v4738
        %v4803 = vpack.c.b16 %v4743, %v4741
        %v4804 = vpack.c.b16 %v4744, %v4742
        %v4805 = vpack.c.b16 %v4747, %v4745
        %v4806 = vpack.c.b16 %v4748, %v4746
        %v4807 = vpack.c.b16 %v4751, %v4749
        %v4808 = vpack.c.b16 %v4752, %v4750
        %v4809 = vpack.c.b16 %v4755, %v4753
        %v4810 = vpack.c.b16 %v4756, %v4754
        %v4811 = vpack.c.b16 %v4759, %v4757
        %v4812 = vpack.c.b16 %v4760, %v4758
        %v4813 = vpack.c.b16 %v4763, %v4761
        %v4814 = vpack.c.b16 %v4764, %v4762
        %v4815 = vpack.c.b16 %v4767, %v4765
        %v4816 = vpack.c.b16 %v4768, %v4766
        %v4817 = vpack.c.b16 %v4771, %v4769
        %v4818 = vpack.c.b16 %v4772, %v4770
        %v4819 = vpack.c.b16 %v4775, %v4773
        %v4820 = vpack.c.b16 %v4776, %v4774
        %v4821 = vpack.c.b16 %v4779, %v4777
        %v4822 = vpack.c.b16 %v4780, %v4778
        %v4823 = vpack.c.b16 %v4783, %v4781
        %v4824 = vpack.c.b16 %v4784, %v4782
        %v4825 = vpack.c.b16 %v4787, %v4785
        %v4826 = vpack.c.b16 %v4788, %v4786
        %v4827 = vpack.c.b16 %v4791, %v4789
        %v4828 = vpack.c.b16 %v4792, %v4790
        %v4829 = vpack.c.b16 %v4795, %v4793
        %v4830 = vpack.c.b16 %v4796, %v4794
        %v4831 = vpack.c.b16 %v4799, %v4797
        %v4832 = vpack.c.b16 %v4800, %v4798
        %4865 = vmatprep.subr.bf16.mxu0 %v4802
        %4866 = vmatpush1.bf16.msra.mxu0 %v4801
        %4867 = vmatprep.subr.bf16.mxu0 %v4804
        %4868 = vmatpush1.bf16.msra.mxu0 %v4803
        %4869 = vmatprep.subr.bf16.mxu0 %v4806
        %4870 = vmatpush1.bf16.msra.mxu0 %v4805
        %4871 = vmatprep.subr.bf16.mxu0 %v4808
        %4872 = vmatpush1.bf16.msra.mxu0 %v4807
        %4873 = vmatprep.subr.bf16.mxu0 %v4810
        %4874 = vmatpush1.bf16.msra.mxu0 %v4809
        %4875 = vmatprep.subr.bf16.mxu0 %v4812
        %4876 = vmatpush1.bf16.msra.mxu0 %v4811
        %4877 = vmatprep.subr.bf16.mxu0 %v4814
        %4878 = vmatpush1.bf16.msra.mxu0 %v4813
        %4879 = vmatprep.subr.bf16.mxu0 %v4816
        %4880 = vmatpush1.bf16.msra.mxu0 %v4815
        %4881 = vmatprep.subr.bf16.mxu0 %v4818
        %4882 = vmatpush1.bf16.msra.mxu0 %v4817
        %4883 = vmatprep.subr.bf16.mxu0 %v4820
        %4884 = vmatpush1.bf16.msra.mxu0 %v4819
        %4885 = vmatprep.subr.bf16.mxu0 %v4822
        %4886 = vmatpush1.bf16.msra.mxu0 %v4821
        %4887 = vmatprep.subr.bf16.mxu0 %v4824
        %4888 = vmatpush1.bf16.msra.mxu0 %v4823
        %4889 = vmatprep.subr.bf16.mxu0 %v4826
        %4890 = vmatpush1.bf16.msra.mxu0 %v4825
        %4891 = vmatprep.subr.bf16.mxu0 %v4828
        %4892 = vmatpush1.bf16.msra.mxu0 %v4827
        %4893 = vmatprep.subr.bf16.mxu0 %v4830
        %4894 = vmatpush1.bf16.msra.mxu0 %v4829
        %4895 = vmatprep.subr.bf16.mxu0 %v4832
        %4896 = vmatpush1.bf16.msra.mxu0 %v4831
        %4897 = vmatprep.mubr.bf16.mxu0 %v4389
        %4898 = vmatmul.mubr.bf16.gmra.mrb[0].mxu0 %v4388
        %v4899 = vpop.f32.mrb[0].mxu0
        %v4900 = vadd.f32 %v4699, %v4899
        %v4901 = vpop.f32.mrb[0].mxu0
        %v4902 = vadd.f32 %v4701, %v4901
        %v4903 = vpop.f32.mrb[0].mxu0
        %v4904 = vpop.f32.mrb[0].mxu0
        %4905 = vdwg.mxu0
        %s4906 = scalar_lea.vmem [#allocation15], 4
        %v4907 = vld [vmem:[%s4906] sm:$0x3]
        %v4909 = vsel %vm4336, %v4907, 0
        %4911 = vmatprep.subr.bf16.mxu0 %v4345
        %4912 = vmatpush1.bf16.msra.mxu0 %v4342
        %4913 = vmatprep.subr.bf16.mxu0 0
        %4914 = vmatpush1.bf16.msra.mxu0 0
        %4915 = vmatprep.subr.bf16.mxu0 0
        %4916 = vmatpush1.bf16.msra.mxu0 0
        %4917 = vmatprep.subr.bf16.mxu0 0
        %4918 = vmatpush1.bf16.msra.mxu0 0
        %4919 = vmatprep.subr.bf16.mxu0 0
        %4920 = vmatpush1.bf16.msra.mxu0 0
        %4921 = vmatprep.subr.bf16.mxu0 0
        %4922 = vmatpush1.bf16.msra.mxu0 0
        %4923 = vmatprep.subr.bf16.mxu0 0
        %4924 = vmatpush1.bf16.msra.mxu0 0
        %4925 = vmatprep.subr.bf16.mxu0 0
        %4926 = vmatpush1.bf16.msra.mxu0 0
        %4927 = vmatprep.subr.bf16.mxu0 0
        %4928 = vmatpush1.bf16.msra.mxu0 0
        %4929 = vmatprep.subr.bf16.mxu0 0
        %4930 = vmatpush1.bf16.msra.mxu0 0
        %4931 = vmatprep.subr.bf16.mxu0 0
        %4932 = vmatpush1.bf16.msra.mxu0 0
        %4933 = vmatprep.subr.bf16.mxu0 0
        %4934 = vmatpush1.bf16.msra.mxu0 0
        %4935 = vmatprep.subr.bf16.mxu0 0
        %4936 = vmatpush1.bf16.msra.mxu0 0
        %4937 = vmatprep.subr.bf16.mxu0 0
        %4938 = vmatpush1.bf16.msra.mxu0 0
        %4939 = vmatprep.subr.bf16.mxu0 0
        %4940 = vmatpush1.bf16.msra.mxu0 0
        %4941 = vmatprep.subr.bf16.mxu0 0
        %4942 = vmatpush1.bf16.msra.mxu0 0
        %4943 = vmatprep.mubr.bf16.mxu0 0
        %4944 = vmatmul.mubr.bf16.gmra.mrb[0].mxu0 %v4909
        %v4945 = vpop.f32.mrb[0].mxu0
        %v4946 = vadd.f32 0.0, %v4945
        %v4947 = vpop.f32.mrb[0].mxu0
        %v4948 = vadd.f32 0.0, %v4947
        %v4949 = vpop.f32.mrb[0].mxu0
        %v4950 = vpop.f32.mrb[0].mxu0
        %4951 = vdwg.mxu0
        %v4952 = vpack.c.bf16 %v4946, %v4946
        %v4953 = vpack.c.bf16 %v4948, %v4948
        %s4954 = scalar_lea.vmem [#allocation10], 3584
        %v4955 = vld [vmem:[%s4954] sm:$0xff]
        %v4956 = vld [vmem:[%s4954 + $0x8] sm:$0xff]
        %v4957 = vld [vmem:[%s4954 + $0x10] sm:$0xff]
        %v4958 = vld [vmem:[%s4954 + $0x18] sm:$0xff]
        %v4959 = vld [vmem:[%s4954 + $0x20] sm:$0xff]
        %v4960 = vld [vmem:[%s4954 + $0x28] sm:$0xff]
        %v4961 = vld [vmem:[%s4954 + $0x30] sm:$0xff]
        %v4962 = vld [vmem:[%s4954 + $0x38] sm:$0xff]
        %v4963 = vld [vmem:[%s4954 + $0x40] sm:$0xff]
        %v4964 = vld [vmem:[%s4954 + $0x48] sm:$0xff]
        %v4965 = vld [vmem:[%s4954 + $0x50] sm:$0xff]
        %v4966 = vld [vmem:[%s4954 + $0x58] sm:$0xff]
        %v4967 = vld [vmem:[%s4954 + $0x60] sm:$0xff]
        %v4968 = vld [vmem:[%s4954 + $0x68] sm:$0xff]
        %v4969 = vld [vmem:[%s4954 + $0x70] sm:$0xff]
        %v4970 = vld [vmem:[%s4954 + $0x78] sm:$0xff]
        %v4971 = vld [vmem:[%s4954 + $0x80] sm:$0xff]
        %v4972 = vld [vmem:[%s4954 + $0x88] sm:$0xff]
        %v4973 = vld [vmem:[%s4954 + $0x90] sm:$0xff]
        %v4974 = vld [vmem:[%s4954 + $0x98] sm:$0xff]
        %v4975 = vld [vmem:[%s4954 + $0xa0] sm:$0xff]
        %v4976 = vld [vmem:[%s4954 + $0xa8] sm:$0xff]
        %v4977 = vld [vmem:[%s4954 + $0xb0] sm:$0xff]
        %v4978 = vld [vmem:[%s4954 + $0xb8] sm:$0xff]
        %v4979 = vld [vmem:[%s4954 + $0xc0] sm:$0xff]
        %v4980 = vld [vmem:[%s4954 + $0xc8] sm:$0xff]
        %v4981 = vld [vmem:[%s4954 + $0xd0] sm:$0xff]
        %v4982 = vld [vmem:[%s4954 + $0xd8] sm:$0xff]
        %v4983 = vld [vmem:[%s4954 + $0xe0] sm:$0xff]
        %v4984 = vld [vmem:[%s4954 + $0xe8] sm:$0xff]
        %v4985 = vld [vmem:[%s4954 + $0xf0] sm:$0xff]
        %v4986 = vld [vmem:[%s4954 + $0xf8] sm:$0xff]
        %v5019 = vunpack.c.l.b16 %v4955
        %v5020 = vunpack.c.h.b16 %v4955
        %v5021 = vunpack.c.l.b16 %v4956
        %v5022 = vunpack.c.h.b16 %v4956
        %v5023 = vunpack.c.l.b16 %v4957
        %v5024 = vunpack.c.h.b16 %v4957
        %v5025 = vunpack.c.l.b16 %v4958
        %v5026 = vunpack.c.h.b16 %v4958
        %v5027 = vunpack.c.l.b16 %v4959
        %v5028 = vunpack.c.h.b16 %v4959
        %v5029 = vunpack.c.l.b16 %v4960
        %v5030 = vunpack.c.h.b16 %v4960
        %v5031 = vunpack.c.l.b16 %v4961
        %v5032 = vunpack.c.h.b16 %v4961
        %v5033 = vunpack.c.l.b16 %v4962
        %v5034 = vunpack.c.h.b16 %v4962
        %v5035 = vunpack.c.l.b16 %v4963
        %v5036 = vunpack.c.h.b16 %v4963
        %v5037 = vunpack.c.l.b16 %v4964
        %v5038 = vunpack.c.h.b16 %v4964
        %v5039 = vunpack.c.l.b16 %v4965
        %v5040 = vunpack.c.h.b16 %v4965
        %v5041 = vunpack.c.l.b16 %v4966
        %v5042 = vunpack.c.h.b16 %v4966
        %v5043 = vunpack.c.l.b16 %v4967
        %v5044 = vunpack.c.h.b16 %v4967
        %v5045 = vunpack.c.l.b16 %v4968
        %v5046 = vunpack.c.h.b16 %v4968
        %v5047 = vunpack.c.l.b16 %v4969
        %v5048 = vunpack.c.h.b16 %v4969
        %v5049 = vunpack.c.l.b16 %v4970
        %v5050 = vunpack.c.h.b16 %v4970
        %v5051 = vunpack.c.l.b16 %v4971
        %v5052 = vunpack.c.h.b16 %v4971
        %v5053 = vunpack.c.l.b16 %v4972
        %v5054 = vunpack.c.h.b16 %v4972
        %v5055 = vunpack.c.l.b16 %v4973
        %v5056 = vunpack.c.h.b16 %v4973
        %v5057 = vunpack.c.l.b16 %v4974
        %v5058 = vunpack.c.h.b16 %v4974
        %v5059 = vunpack.c.l.b16 %v4975
        %v5060 = vunpack.c.h.b16 %v4975
        %v5061 = vunpack.c.l.b16 %v4976
        %v5062 = vunpack.c.h.b16 %v4976
        %v5063 = vunpack.c.l.b16 %v4977
        %v5064 = vunpack.c.h.b16 %v4977
        %v5065 = vunpack.c.l.b16 %v4978
        %v5066 = vunpack.c.h.b16 %v4978
        %v5067 = vunpack.c.l.b16 %v4979
        %v5068 = vunpack.c.h.b16 %v4979
        %v5069 = vunpack.c.l.b16 %v4980
        %v5070 = vunpack.c.h.b16 %v4980
        %v5071 = vunpack.c.l.b16 %v4981
        %v5072 = vunpack.c.h.b16 %v4981
        %v5073 = vunpack.c.l.b16 %v4982
        %v5074 = vunpack.c.h.b16 %v4982
        %v5075 = vunpack.c.l.b16 %v4983
        %v5076 = vunpack.c.h.b16 %v4983
        %v5077 = vunpack.c.l.b16 %v4984
        %v5078 = vunpack.c.h.b16 %v4984
        %v5079 = vunpack.c.l.b16 %v4985
        %v5080 = vunpack.c.h.b16 %v4985
        %v5081 = vunpack.c.l.b16 %v4986
        %v5082 = vunpack.c.h.b16 %v4986
        %v5083 = vpack.c.b16 %v5021, %v5019
        %v5084 = vpack.c.b16 %v5022, %v5020
        %v5085 = vpack.c.b16 %v5025, %v5023
        %v5086 = vpack.c.b16 %v5026, %v5024
        %v5087 = vpack.c.b16 %v5029, %v5027
        %v5088 = vpack.c.b16 %v5030, %v5028
        %v5089 = vpack.c.b16 %v5033, %v5031
        %v5090 = vpack.c.b16 %v5034, %v5032
        %v5091 = vpack.c.b16 %v5037, %v5035
        %v5092 = vpack.c.b16 %v5038, %v5036
        %v5093 = vpack.c.b16 %v5041, %v5039
        %v5094 = vpack.c.b16 %v5042, %v5040
        %v5095 = vpack.c.b16 %v5045, %v5043
        %v5096 = vpack.c.b16 %v5046, %v5044
        %v5097 = vpack.c.b16 %v5049, %v5047
        %v5098 = vpack.c.b16 %v5050, %v5048
        %v5099 = vpack.c.b16 %v5053, %v5051
        %v5100 = vpack.c.b16 %v5054, %v5052
        %v5101 = vpack.c.b16 %v5057, %v5055
        %v5102 = vpack.c.b16 %v5058, %v5056
        %v5103 = vpack.c.b16 %v5061, %v5059
        %v5104 = vpack.c.b16 %v5062, %v5060
        %v5105 = vpack.c.b16 %v5065, %v5063
        %v5106 = vpack.c.b16 %v5066, %v5064
        %v5107 = vpack.c.b16 %v5069, %v5067
        %v5108 = vpack.c.b16 %v5070, %v5068
        %v5109 = vpack.c.b16 %v5073, %v5071
        %v5110 = vpack.c.b16 %v5074, %v5072
        %v5111 = vpack.c.b16 %v5077, %v5075
        %v5112 = vpack.c.b16 %v5078, %v5076
        %v5113 = vpack.c.b16 %v5081, %v5079
        %v5114 = vpack.c.b16 %v5082, %v5080
        %5147 = vmatprep.subr.bf16.mxu0 %v5084
        %5148 = vmatpush1.bf16.msra.mxu0 %v5083
        %5149 = vmatprep.subr.bf16.mxu0 %v5086
        %5150 = vmatpush1.bf16.msra.mxu0 %v5085
        %5151 = vmatprep.subr.bf16.mxu0 %v5088
        %5152 = vmatpush1.bf16.msra.mxu0 %v5087
        %5153 = vmatprep.subr.bf16.mxu0 %v5090
        %5154 = vmatpush1.bf16.msra.mxu0 %v5089
        %5155 = vmatprep.subr.bf16.mxu0 %v5092
        %5156 = vmatpush1.bf16.msra.mxu0 %v5091
        %5157 = vmatprep.subr.bf16.mxu0 %v5094
        %5158 = vmatpush1.bf16.msra.mxu0 %v5093
        %5159 = vmatprep.subr.bf16.mxu0 %v5096
        %5160 = vmatpush1.bf16.msra.mxu0 %v5095
        %5161 = vmatprep.subr.bf16.mxu0 %v5098
        %5162 = vmatpush1.bf16.msra.mxu0 %v5097
        %5163 = vmatprep.subr.bf16.mxu0 %v5100
        %5164 = vmatpush1.bf16.msra.mxu0 %v5099
        %5165 = vmatprep.subr.bf16.mxu0 %v5102
        %5166 = vmatpush1.bf16.msra.mxu0 %v5101
        %5167 = vmatprep.subr.bf16.mxu0 %v5104
        %5168 = vmatpush1.bf16.msra.mxu0 %v5103
        %5169 = vmatprep.subr.bf16.mxu0 %v5106
        %5170 = vmatpush1.bf16.msra.mxu0 %v5105
        %5171 = vmatprep.subr.bf16.mxu0 %v5108
        %5172 = vmatpush1.bf16.msra.mxu0 %v5107
        %5173 = vmatprep.subr.bf16.mxu0 %v5110
        %5174 = vmatpush1.bf16.msra.mxu0 %v5109
        %5175 = vmatprep.subr.bf16.mxu0 %v5112
        %5176 = vmatpush1.bf16.msra.mxu0 %v5111
        %5177 = vmatprep.subr.bf16.mxu0 %v5114
        %5178 = vmatpush1.bf16.msra.mxu0 %v5113
        %5179 = vmatprep.mubr.bf16.mxu0 %v4953
        %5180 = vmatmul.mubr.bf16.gmra.mrb[0].mxu0 %v4952
        %v5181 = vpop.f32.mrb[0].mxu0
        %v5182 = vadd.f32 0.0, %v5181
        %v5183 = vpop.f32.mrb[0].mxu0
        %v5184 = vadd.f32 0.0, %v5183
        %v5185 = vpop.f32.mrb[0].mxu0
        %v5186 = vpop.f32.mrb[0].mxu0
        %5187 = vdwg.mxu0
        %v5188 = vadd.f32 %v4900, %v5182
        %v5189 = vadd.f32 %v4902, %v5184
        %s5190 = scalar_lea.vmem [#allocation12], 5
        %v5191 = vld [vmem:[%s5190] ss:$8 sm:$0x3]
        %v5193 = vlaneseq
        %v5194 = vshrl.u32 %v5193, 7
        %v5195 = vsub.s32 0, %v5194
        %v5196 = vrot.slane %v5191, %v5195
        %v5197 = vlaneseq
        %v5198 = vshrl.u32 %v5197, 7
        %v5199 = vsub.s32 1, %v5198
        %v5200 = vrot.slane %v5191, %v5199
        %v5203 = vadd.f32 %v5188, %v5196
        %v5204 = vadd.f32 %v5189, %v5200
        %v5205 = vmax.f32 %v5203, 0.0
        %v5206 = vmax.f32 %v5204, 0.0
        %v5207 = vpack.c.bf16 %v5205, %v5205
        %v5208 = vpack.c.bf16 %v5206, %v5206
        %v5211 = vunpack.c.l.b16 %v5207
        %v5212 = vunpack.c.l.b16 %v5208
        %v5213 = vpack.c.b16 %v5212, %v5211
        %v5215 = vshrl.u32 %v5213, 16
        %v5217 = vrot.slane %v5215, 7
        %v5218 = vshll.u32 %v5213, 16
        %v5220 = vor.u32 %v5217, %v5218
        %vm5222 = vcmask 1042432
        %vm5223 = vsmask.f32 2306
        %vm5224 = vmand %vm5222, %vm5223
        %vm5225 = vcmask 1046532
        %vm5226 = vsmask.f32 6418
        %vm5227 = vmand %vm5225, %vm5226
        %vm5228 = vmor %vm5227, %vm5224
        %v5229 = vld [vmem:[#allocation7] sm:$0x77]
        %v5230 = vsel %vm5228, %v5220, %v5229
        %5231 = vst [vmem:[#allocation7] sm:$0x77] %v5230
        %s5232 = scalar_lea.vmem [#allocation10], 4864
        %v5233 = vld [vmem:[%s5232] sm:$0xff]
        %v5234 = vld [vmem:[%s5232 + $0x8] sm:$0xff]
        %v5235 = vld [vmem:[%s5232 + $0x10] sm:$0xff]
        %v5236 = vld [vmem:[%s5232 + $0x18] sm:$0xff]
        %v5237 = vld [vmem:[%s5232 + $0x20] sm:$0xff]
        %v5238 = vld [vmem:[%s5232 + $0x28] sm:$0xff]
        %v5239 = vld [vmem:[%s5232 + $0x30] sm:$0xff]
        %v5240 = vld [vmem:[%s5232 + $0x38] sm:$0xff]
        %v5241 = vld [vmem:[%s5232 + $0x40] sm:$0xff]
        %v5242 = vld [vmem:[%s5232 + $0x48] sm:$0xff]
        %v5243 = vld [vmem:[%s5232 + $0x50] sm:$0xff]
        %v5244 = vld [vmem:[%s5232 + $0x58] sm:$0xff]
        %v5245 = vld [vmem:[%s5232 + $0x60] sm:$0xff]
        %v5246 = vld [vmem:[%s5232 + $0x68] sm:$0xff]
        %v5247 = vld [vmem:[%s5232 + $0x70] sm:$0xff]
        %v5248 = vld [vmem:[%s5232 + $0x78] sm:$0xff]
        %v5249 = vld [vmem:[%s5232 + $0x80] sm:$0xff]
        %v5250 = vld [vmem:[%s5232 + $0x88] sm:$0xff]
        %v5251 = vld [vmem:[%s5232 + $0x90] sm:$0xff]
        %v5252 = vld [vmem:[%s5232 + $0x98] sm:$0xff]
        %v5253 = vld [vmem:[%s5232 + $0xa0] sm:$0xff]
        %v5254 = vld [vmem:[%s5232 + $0xa8] sm:$0xff]
        %v5255 = vld [vmem:[%s5232 + $0xb0] sm:$0xff]
        %v5256 = vld [vmem:[%s5232 + $0xb8] sm:$0xff]
        %v5257 = vld [vmem:[%s5232 + $0xc0] sm:$0xff]
        %v5258 = vld [vmem:[%s5232 + $0xc8] sm:$0xff]
        %v5259 = vld [vmem:[%s5232 + $0xd0] sm:$0xff]
        %v5260 = vld [vmem:[%s5232 + $0xd8] sm:$0xff]
        %v5261 = vld [vmem:[%s5232 + $0xe0] sm:$0xff]
        %v5262 = vld [vmem:[%s5232 + $0xe8] sm:$0xff]
        %v5263 = vld [vmem:[%s5232 + $0xf0] sm:$0xff]
        %v5264 = vld [vmem:[%s5232 + $0xf8] sm:$0xff]
        %v5297 = vunpack.c.l.b16 %v5233
        %v5298 = vunpack.c.h.b16 %v5233
        %v5299 = vunpack.c.l.b16 %v5234
        %v5300 = vunpack.c.h.b16 %v5234
        %v5301 = vunpack.c.l.b16 %v5235
        %v5302 = vunpack.c.h.b16 %v5235
        %v5303 = vunpack.c.l.b16 %v5236
        %v5304 = vunpack.c.h.b16 %v5236
        %v5305 = vunpack.c.l.b16 %v5237
        %v5306 = vunpack.c.h.b16 %v5237
        %v5307 = vunpack.c.l.b16 %v5238
        %v5308 = vunpack.c.h.b16 %v5238
        %v5309 = vunpack.c.l.b16 %v5239
        %v5310 = vunpack.c.h.b16 %v5239
        %v5311 = vunpack.c.l.b16 %v5240
        %v5312 = vunpack.c.h.b16 %v5240
        %v5313 = vunpack.c.l.b16 %v5241
        %v5314 = vunpack.c.h.b16 %v5241
        %v5315 = vunpack.c.l.b16 %v5242
        %v5316 = vunpack.c.h.b16 %v5242
        %v5317 = vunpack.c.l.b16 %v5243
        %v5318 = vunpack.c.h.b16 %v5243
        %v5319 = vunpack.c.l.b16 %v5244
        %v5320 = vunpack.c.h.b16 %v5244
        %v5321 = vunpack.c.l.b16 %v5245
        %v5322 = vunpack.c.h.b16 %v5245
        %v5323 = vunpack.c.l.b16 %v5246
        %v5324 = vunpack.c.h.b16 %v5246
        %v5325 = vunpack.c.l.b16 %v5247
        %v5326 = vunpack.c.h.b16 %v5247
        %v5327 = vunpack.c.l.b16 %v5248
        %v5328 = vunpack.c.h.b16 %v5248
        %v5329 = vunpack.c.l.b16 %v5249
        %v5330 = vunpack.c.h.b16 %v5249
        %v5331 = vunpack.c.l.b16 %v5250
        %v5332 = vunpack.c.h.b16 %v5250
        %v5333 = vunpack.c.l.b16 %v5251
        %v5334 = vunpack.c.h.b16 %v5251
        %v5335 = vunpack.c.l.b16 %v5252
        %v5336 = vunpack.c.h.b16 %v5252
        %v5337 = vunpack.c.l.b16 %v5253
        %v5338 = vunpack.c.h.b16 %v5253
        %v5339 = vunpack.c.l.b16 %v5254
        %v5340 = vunpack.c.h.b16 %v5254
        %v5341 = vunpack.c.l.b16 %v5255
        %v5342 = vunpack.c.h.b16 %v5255
        %v5343 = vunpack.c.l.b16 %v5256
        %v5344 = vunpack.c.h.b16 %v5256
        %v5345 = vunpack.c.l.b16 %v5257
        %v5346 = vunpack.c.h.b16 %v5257
        %v5347 = vunpack.c.l.b16 %v5258
        %v5348 = vunpack.c.h.b16 %v5258
        %v5349 = vunpack.c.l.b16 %v5259
        %v5350 = vunpack.c.h.b16 %v5259
        %v5351 = vunpack.c.l.b16 %v5260
        %v5352 = vunpack.c.h.b16 %v5260
        %v5353 = vunpack.c.l.b16 %v5261
        %v5354 = vunpack.c.h.b16 %v5261
        %v5355 = vunpack.c.l.b16 %v5262
        %v5356 = vunpack.c.h.b16 %v5262
        %v5357 = vunpack.c.l.b16 %v5263
        %v5358 = vunpack.c.h.b16 %v5263
        %v5359 = vunpack.c.l.b16 %v5264
        %v5360 = vunpack.c.h.b16 %v5264
        %v5361 = vpack.c.b16 %v5299, %v5297
        %v5362 = vpack.c.b16 %v5300, %v5298
        %v5363 = vpack.c.b16 %v5303, %v5301
        %v5364 = vpack.c.b16 %v5304, %v5302
        %v5365 = vpack.c.b16 %v5307, %v5305
        %v5366 = vpack.c.b16 %v5308, %v5306
        %v5367 = vpack.c.b16 %v5311, %v5309
        %v5368 = vpack.c.b16 %v5312, %v5310
        %v5369 = vpack.c.b16 %v5315, %v5313
        %v5370 = vpack.c.b16 %v5316, %v5314
        %v5371 = vpack.c.b16 %v5319, %v5317
        %v5372 = vpack.c.b16 %v5320, %v5318
        %v5373 = vpack.c.b16 %v5323, %v5321
        %v5374 = vpack.c.b16 %v5324, %v5322
        %v5375 = vpack.c.b16 %v5327, %v5325
        %v5376 = vpack.c.b16 %v5328, %v5326
        %v5377 = vpack.c.b16 %v5331, %v5329
        %v5378 = vpack.c.b16 %v5332, %v5330
        %v5379 = vpack.c.b16 %v5335, %v5333
        %v5380 = vpack.c.b16 %v5336, %v5334
        %v5381 = vpack.c.b16 %v5339, %v5337
        %v5382 = vpack.c.b16 %v5340, %v5338
        %v5383 = vpack.c.b16 %v5343, %v5341
        %v5384 = vpack.c.b16 %v5344, %v5342
        %v5385 = vpack.c.b16 %v5347, %v5345
        %v5386 = vpack.c.b16 %v5348, %v5346
        %v5387 = vpack.c.b16 %v5351, %v5349
        %v5388 = vpack.c.b16 %v5352, %v5350
        %v5389 = vpack.c.b16 %v5355, %v5353
        %v5390 = vpack.c.b16 %v5356, %v5354
        %v5391 = vpack.c.b16 %v5359, %v5357
        %v5392 = vpack.c.b16 %v5360, %v5358
        %5425 = vmatprep.subr.bf16.mxu0 %v5362
        %5426 = vmatpush1.bf16.msra.mxu0 %v5361
        %5427 = vmatprep.subr.bf16.mxu0 %v5364
        %5428 = vmatpush1.bf16.msra.mxu0 %v5363
        %5429 = vmatprep.subr.bf16.mxu0 %v5366
        %5430 = vmatpush1.bf16.msra.mxu0 %v5365
        %5431 = vmatprep.subr.bf16.mxu0 %v5368
        %5432 = vmatpush1.bf16.msra.mxu0 %v5367
        %5433 = vmatprep.subr.bf16.mxu0 %v5370
        %5434 = vmatpush1.bf16.msra.mxu0 %v5369
        %5435 = vmatprep.subr.bf16.mxu0 %v5372
        %5436 = vmatpush1.bf16.msra.mxu0 %v5371
        %5437 = vmatprep.subr.bf16.mxu0 %v5374
        %5438 = vmatpush1.bf16.msra.mxu0 %v5373
        %5439 = vmatprep.subr.bf16.mxu0 %v5376
        %5440 = vmatpush1.bf16.msra.mxu0 %v5375
        %5441 = vmatprep.subr.bf16.mxu0 %v5378
        %5442 = vmatpush1.bf16.msra.mxu0 %v5377
        %5443 = vmatprep.subr.bf16.mxu0 %v5380
        %5444 = vmatpush1.bf16.msra.mxu0 %v5379
        %5445 = vmatprep.subr.bf16.mxu0 %v5382
        %5446 = vmatpush1.bf16.msra.mxu0 %v5381
        %5447 = vmatprep.subr.bf16.mxu0 %v5384
        %5448 = vmatpush1.bf16.msra.mxu0 %v5383
        %5449 = vmatprep.subr.bf16.mxu0 %v5386
        %5450 = vmatpush1.bf16.msra.mxu0 %v5385
        %5451 = vmatprep.subr.bf16.mxu0 %v5388
        %5452 = vmatpush1.bf16.msra.mxu0 %v5387
        %5453 = vmatprep.subr.bf16.mxu0 %v5390
        %5454 = vmatpush1.bf16.msra.mxu0 %v5389
        %5455 = vmatprep.subr.bf16.mxu0 %v5392
        %5456 = vmatpush1.bf16.msra.mxu0 %v5391
        %5457 = vmatprep.mubr.bf16.mxu0 %v4470
        %5458 = vmatmul.mubr.bf16.gmra.mrb[0].mxu0 %v4469
        %v5459 = vpop.f32.mrb[0].mxu0
        %v5460 = vadd.f32 0.0, %v5459
        %v5461 = vpop.f32.mrb[0].mxu0
        %v5462 = vadd.f32 0.0, %v5461
        %v5463 = vpop.f32.mrb[0].mxu0
        %v5464 = vpop.f32.mrb[0].mxu0
        %5465 = vdwg.mxu0
        %v5466 = vld [vmem:[#allocation7] sm:$0x33]
        %s5467 = scalar_lea.vmem [#allocation10], 3840
        %v5468 = vld [vmem:[%s5467] sm:$0xff]
        %v5469 = vld [vmem:[%s5467 + $0x8] sm:$0xff]
        %v5470 = vld [vmem:[%s5467 + $0x10] sm:$0xff]
        %v5471 = vld [vmem:[%s5467 + $0x18] sm:$0xff]
        %v5472 = vld [vmem:[%s5467 + $0x20] sm:$0xff]
        %v5473 = vld [vmem:[%s5467 + $0x28] sm:$0xff]
        %v5474 = vld [vmem:[%s5467 + $0x30] sm:$0xff]
        %v5475 = vld [vmem:[%s5467 + $0x38] sm:$0xff]
        %v5476 = vld [vmem:[%s5467 + $0x40] sm:$0xff]
        %v5477 = vld [vmem:[%s5467 + $0x48] sm:$0xff]
        %v5478 = vld [vmem:[%s5467 + $0x50] sm:$0xff]
        %v5479 = vld [vmem:[%s5467 + $0x58] sm:$0xff]
        %v5480 = vld [vmem:[%s5467 + $0x60] sm:$0xff]
        %v5481 = vld [vmem:[%s5467 + $0x68] sm:$0xff]
        %v5482 = vld [vmem:[%s5467 + $0x70] sm:$0xff]
        %v5483 = vld [vmem:[%s5467 + $0x78] sm:$0xff]
        %v5484 = vld [vmem:[%s5467 + $0x80] sm:$0xff]
        %v5485 = vld [vmem:[%s5467 + $0x88] sm:$0xff]
        %v5486 = vld [vmem:[%s5467 + $0x90] sm:$0xff]
        %v5487 = vld [vmem:[%s5467 + $0x98] sm:$0xff]
        %v5488 = vld [vmem:[%s5467 + $0xa0] sm:$0xff]
        %v5489 = vld [vmem:[%s5467 + $0xa8] sm:$0xff]
        %v5490 = vld [vmem:[%s5467 + $0xb0] sm:$0xff]
        %v5491 = vld [vmem:[%s5467 + $0xb8] sm:$0xff]
        %v5492 = vld [vmem:[%s5467 + $0xc0] sm:$0xff]
        %v5493 = vld [vmem:[%s5467 + $0xc8] sm:$0xff]
        %v5494 = vld [vmem:[%s5467 + $0xd0] sm:$0xff]
        %v5495 = vld [vmem:[%s5467 + $0xd8] sm:$0xff]
        %v5496 = vld [vmem:[%s5467 + $0xe0] sm:$0xff]
        %v5497 = vld [vmem:[%s5467 + $0xe8] sm:$0xff]
        %v5498 = vld [vmem:[%s5467 + $0xf0] sm:$0xff]
        %v5499 = vld [vmem:[%s5467 + $0xf8] sm:$0xff]
        %v5500 = vld [vmem:[#allocation7] sm:$0x77]
        %s5501 = scalar_lea.vmem [#allocation10], 4096
        %v5502 = vld [vmem:[%s5501] sm:$0xff]
        %v5503 = vld [vmem:[%s5501 + $0x8] sm:$0xff]
        %v5504 = vld [vmem:[%s5501 + $0x10] sm:$0xff]
        %v5505 = vld [vmem:[%s5501 + $0x18] sm:$0xff]
        %v5506 = vld [vmem:[%s5501 + $0x20] sm:$0xff]
        %v5507 = vld [vmem:[%s5501 + $0x28] sm:$0xff]
        %v5508 = vld [vmem:[%s5501 + $0x30] sm:$0xff]
        %v5509 = vld [vmem:[%s5501 + $0x38] sm:$0xff]
        %v5510 = vld [vmem:[%s5501 + $0x40] sm:$0xff]
        %v5511 = vld [vmem:[%s5501 + $0x48] sm:$0xff]
        %v5512 = vld [vmem:[%s5501 + $0x50] sm:$0xff]
        %v5513 = vld [vmem:[%s5501 + $0x58] sm:$0xff]
        %v5514 = vld [vmem:[%s5501 + $0x60] sm:$0xff]
        %v5515 = vld [vmem:[%s5501 + $0x68] sm:$0xff]
        %v5516 = vld [vmem:[%s5501 + $0x70] sm:$0xff]
        %v5517 = vld [vmem:[%s5501 + $0x78] sm:$0xff]
        %v5518 = vld [vmem:[%s5501 + $0x80] sm:$0xff]
        %v5519 = vld [vmem:[%s5501 + $0x88] sm:$0xff]
        %v5520 = vld [vmem:[%s5501 + $0x90] sm:$0xff]
        %v5521 = vld [vmem:[%s5501 + $0x98] sm:$0xff]
        %v5522 = vld [vmem:[%s5501 + $0xa0] sm:$0xff]
        %v5523 = vld [vmem:[%s5501 + $0xa8] sm:$0xff]
        %v5524 = vld [vmem:[%s5501 + $0xb0] sm:$0xff]
        %v5525 = vld [vmem:[%s5501 + $0xb8] sm:$0xff]
        %v5526 = vld [vmem:[%s5501 + $0xc0] sm:$0xff]
        %v5527 = vld [vmem:[%s5501 + $0xc8] sm:$0xff]
        %v5528 = vld [vmem:[%s5501 + $0xd0] sm:$0xff]
        %v5529 = vld [vmem:[%s5501 + $0xd8] sm:$0xff]
        %v5530 = vld [vmem:[%s5501 + $0xe0] sm:$0xff]
        %v5531 = vld [vmem:[%s5501 + $0xe8] sm:$0xff]
        %v5532 = vld [vmem:[%s5501 + $0xf0] sm:$0xff]
        %v5533 = vld [vmem:[%s5501 + $0xf8] sm:$0xff]
        %v5535 = vunpack.c.l.b16 %v5500
        %v5536 = vunpack.c.h.b16 %v5500
        %v5537 = vpack.c.b16 %v5535, %v5535
        %v5538 = vpack.c.b16 %v5536, %v5536
        %v5540 = vshrl.u32 %v5537, 16
        %v5542 = vshll.u32 %v5537, 16
        %v5544 = vrot.slane %v5542, 1
        %v5545 = vor.u32 %v5540, %v5544
        %v5547 = vshrl.u32 %v5538, 16
        %v5549 = vshll.u32 %v5538, 16
        %v5551 = vrot.slane %v5549, 1
        %v5552 = vor.u32 %v5547, %v5551
        %v5587 = vunpack.c.l.b16 %v5502
        %v5588 = vunpack.c.h.b16 %v5502
        %v5589 = vunpack.c.l.b16 %v5503
        %v5590 = vunpack.c.h.b16 %v5503
        %v5591 = vunpack.c.l.b16 %v5504
        %v5592 = vunpack.c.h.b16 %v5504
        %v5593 = vunpack.c.l.b16 %v5505
        %v5594 = vunpack.c.h.b16 %v5505
        %v5595 = vunpack.c.l.b16 %v5506
        %v5596 = vunpack.c.h.b16 %v5506
        %v5597 = vunpack.c.l.b16 %v5507
        %v5598 = vunpack.c.h.b16 %v5507
        %v5599 = vunpack.c.l.b16 %v5508
        %v5600 = vunpack.c.h.b16 %v5508
        %v5601 = vunpack.c.l.b16 %v5509
        %v5602 = vunpack.c.h.b16 %v5509
        %v5603 = vunpack.c.l.b16 %v5510
        %v5604 = vunpack.c.h.b16 %v5510
        %v5605 = vunpack.c.l.b16 %v5511
        %v5606 = vunpack.c.h.b16 %v5511
        %v5607 = vunpack.c.l.b16 %v5512
        %v5608 = vunpack.c.h.b16 %v5512
        %v5609 = vunpack.c.l.b16 %v5513
        %v5610 = vunpack.c.h.b16 %v5513
        %v5611 = vunpack.c.l.b16 %v5514
        %v5612 = vunpack.c.h.b16 %v5514
        %v5613 = vunpack.c.l.b16 %v5515
        %v5614 = vunpack.c.h.b16 %v5515
        %v5615 = vunpack.c.l.b16 %v5516
        %v5616 = vunpack.c.h.b16 %v5516
        %v5617 = vunpack.c.l.b16 %v5517
        %v5618 = vunpack.c.h.b16 %v5517
        %v5619 = vunpack.c.l.b16 %v5518
        %v5620 = vunpack.c.h.b16 %v5518
        %v5621 = vunpack.c.l.b16 %v5519
        %v5622 = vunpack.c.h.b16 %v5519
        %v5623 = vunpack.c.l.b16 %v5520
        %v5624 = vunpack.c.h.b16 %v5520
        %v5625 = vunpack.c.l.b16 %v5521
        %v5626 = vunpack.c.h.b16 %v5521
        %v5627 = vunpack.c.l.b16 %v5522
        %v5628 = vunpack.c.h.b16 %v5522
        %v5629 = vunpack.c.l.b16 %v5523
        %v5630 = vunpack.c.h.b16 %v5523
        %v5631 = vunpack.c.l.b16 %v5524
        %v5632 = vunpack.c.h.b16 %v5524
        %v5633 = vunpack.c.l.b16 %v5525
        %v5634 = vunpack.c.h.b16 %v5525
        %v5635 = vunpack.c.l.b16 %v5526
        %v5636 = vunpack.c.h.b16 %v5526
        %v5637 = vunpack.c.l.b16 %v5527
        %v5638 = vunpack.c.h.b16 %v5527
        %v5639 = vunpack.c.l.b16 %v5528
        %v5640 = vunpack.c.h.b16 %v5528
        %v5641 = vunpack.c.l.b16 %v5529
        %v5642 = vunpack.c.h.b16 %v5529
        %v5643 = vunpack.c.l.b16 %v5530
        %v5644 = vunpack.c.h.b16 %v5530
        %v5645 = vunpack.c.l.b16 %v5531
        %v5646 = vunpack.c.h.b16 %v5531
        %v5647 = vunpack.c.l.b16 %v5532
        %v5648 = vunpack.c.h.b16 %v5532
        %v5649 = vunpack.c.l.b16 %v5533
        %v5650 = vunpack.c.h.b16 %v5533
        %v5651 = vpack.c.b16 %v5589, %v5587
        %v5652 = vpack.c.b16 %v5590, %v5588
        %v5653 = vpack.c.b16 %v5593, %v5591
        %v5654 = vpack.c.b16 %v5594, %v5592
        %v5655 = vpack.c.b16 %v5597, %v5595
        %v5656 = vpack.c.b16 %v5598, %v5596
        %v5657 = vpack.c.b16 %v5601, %v5599
        %v5658 = vpack.c.b16 %v5602, %v5600
        %v5659 = vpack.c.b16 %v5605, %v5603
        %v5660 = vpack.c.b16 %v5606, %v5604
        %v5661 = vpack.c.b16 %v5609, %v5607
        %v5662 = vpack.c.b16 %v5610, %v5608
        %v5663 = vpack.c.b16 %v5613, %v5611
        %v5664 = vpack.c.b16 %v5614, %v5612
        %v5665 = vpack.c.b16 %v5617, %v5615
        %v5666 = vpack.c.b16 %v5618, %v5616
        %v5667 = vpack.c.b16 %v5621, %v5619
        %v5668 = vpack.c.b16 %v5622, %v5620
        %v5669 = vpack.c.b16 %v5625, %v5623
        %v5670 = vpack.c.b16 %v5626, %v5624
        %v5671 = vpack.c.b16 %v5629, %v5627
        %v5672 = vpack.c.b16 %v5630, %v5628
        %v5673 = vpack.c.b16 %v5633, %v5631
        %v5674 = vpack.c.b16 %v5634, %v5632
        %v5675 = vpack.c.b16 %v5637, %v5635
        %v5676 = vpack.c.b16 %v5638, %v5636
        %v5677 = vpack.c.b16 %v5641, %v5639
        %v5678 = vpack.c.b16 %v5642, %v5640
        %v5679 = vpack.c.b16 %v5645, %v5643
        %v5680 = vpack.c.b16 %v5646, %v5644
        %v5681 = vpack.c.b16 %v5649, %v5647
        %v5682 = vpack.c.b16 %v5650, %v5648
        %5715 = vmatprep.subr.bf16.mxu0 %v5652
        %5716 = vmatpush1.bf16.msra.mxu0 %v5651
        %5717 = vmatprep.subr.bf16.mxu0 %v5654
        %5718 = vmatpush1.bf16.msra.mxu0 %v5653
        %5719 = vmatprep.subr.bf16.mxu0 %v5656
        %5720 = vmatpush1.bf16.msra.mxu0 %v5655
        %5721 = vmatprep.subr.bf16.mxu0 %v5658
        %5722 = vmatpush1.bf16.msra.mxu0 %v5657
        %5723 = vmatprep.subr.bf16.mxu0 %v5660
        %5724 = vmatpush1.bf16.msra.mxu0 %v5659
        %5725 = vmatprep.subr.bf16.mxu0 %v5662
        %5726 = vmatpush1.bf16.msra.mxu0 %v5661
        %5727 = vmatprep.subr.bf16.mxu0 %v5664
        %5728 = vmatpush1.bf16.msra.mxu0 %v5663
        %5729 = vmatprep.subr.bf16.mxu0 %v5666
        %5730 = vmatpush1.bf16.msra.mxu0 %v5665
        %5731 = vmatprep.subr.bf16.mxu0 %v5668
        %5732 = vmatpush1.bf16.msra.mxu0 %v5667
        %5733 = vmatprep.subr.bf16.mxu0 %v5670
        %5734 = vmatpush1.bf16.msra.mxu0 %v5669
        %5735 = vmatprep.subr.bf16.mxu0 %v5672
        %5736 = vmatpush1.bf16.msra.mxu0 %v5671
        %5737 = vmatprep.subr.bf16.mxu0 %v5674
        %5738 = vmatpush1.bf16.msra.mxu0 %v5673
        %5739 = vmatprep.subr.bf16.mxu0 %v5676
        %5740 = vmatpush1.bf16.msra.mxu0 %v5675
        %5741 = vmatprep.subr.bf16.mxu0 %v5678
        %5742 = vmatpush1.bf16.msra.mxu0 %v5677
        %5743 = vmatprep.subr.bf16.mxu0 %v5680
        %5744 = vmatpush1.bf16.msra.mxu0 %v5679
        %5745 = vmatprep.subr.bf16.mxu0 %v5682
        %5746 = vmatpush1.bf16.msra.mxu0 %v5681
        %5747 = vmatprep.mubr.bf16.mxu0 %v5552
        %5748 = vmatmul.mubr.bf16.gmra.mrb[0].mxu0 %v5545
        %v5749 = vpop.f32.mrb[0].mxu0
        %v5750 = vadd.f32 0.0, %v5749
        %v5751 = vpop.f32.mrb[0].mxu0
        %v5752 = vadd.f32 0.0, %v5751
        %v5753 = vpop.f32.mrb[0].mxu0
        %v5754 = vpop.f32.mrb[0].mxu0
        %5755 = vdwg.mxu0
        %v5757 = vunpack.c.l.b16 %v5466
        %v5758 = vunpack.c.h.b16 %v5466
        %v5759 = vpack.c.b16 %v5757, %v5757
        %v5760 = vpack.c.b16 %v5758, %v5758
        %v5795 = vunpack.c.l.b16 %v5468
        %v5796 = vunpack.c.h.b16 %v5468
        %v5797 = vunpack.c.l.b16 %v5469
        %v5798 = vunpack.c.h.b16 %v5469
        %v5799 = vunpack.c.l.b16 %v5470
        %v5800 = vunpack.c.h.b16 %v5470
        %v5801 = vunpack.c.l.b16 %v5471
        %v5802 = vunpack.c.h.b16 %v5471
        %v5803 = vunpack.c.l.b16 %v5472
        %v5804 = vunpack.c.h.b16 %v5472
        %v5805 = vunpack.c.l.b16 %v5473
        %v5806 = vunpack.c.h.b16 %v5473
        %v5807 = vunpack.c.l.b16 %v5474
        %v5808 = vunpack.c.h.b16 %v5474
        %v5809 = vunpack.c.l.b16 %v5475
        %v5810 = vunpack.c.h.b16 %v5475
        %v5811 = vunpack.c.l.b16 %v5476
        %v5812 = vunpack.c.h.b16 %v5476
        %v5813 = vunpack.c.l.b16 %v5477
        %v5814 = vunpack.c.h.b16 %v5477
        %v5815 = vunpack.c.l.b16 %v5478
        %v5816 = vunpack.c.h.b16 %v5478
        %v5817 = vunpack.c.l.b16 %v5479
        %v5818 = vunpack.c.h.b16 %v5479
        %v5819 = vunpack.c.l.b16 %v5480
        %v5820 = vunpack.c.h.b16 %v5480
        %v5821 = vunpack.c.l.b16 %v5481
        %v5822 = vunpack.c.h.b16 %v5481
        %v5823 = vunpack.c.l.b16 %v5482
        %v5824 = vunpack.c.h.b16 %v5482
        %v5825 = vunpack.c.l.b16 %v5483
        %v5826 = vunpack.c.h.b16 %v5483
        %v5827 = vunpack.c.l.b16 %v5484
        %v5828 = vunpack.c.h.b16 %v5484
        %v5829 = vunpack.c.l.b16 %v5485
        %v5830 = vunpack.c.h.b16 %v5485
        %v5831 = vunpack.c.l.b16 %v5486
        %v5832 = vunpack.c.h.b16 %v5486
        %v5833 = vunpack.c.l.b16 %v5487
        %v5834 = vunpack.c.h.b16 %v5487
        %v5835 = vunpack.c.l.b16 %v5488
        %v5836 = vunpack.c.h.b16 %v5488
        %v5837 = vunpack.c.l.b16 %v5489
        %v5838 = vunpack.c.h.b16 %v5489
        %v5839 = vunpack.c.l.b16 %v5490
        %v5840 = vunpack.c.h.b16 %v5490
        %v5841 = vunpack.c.l.b16 %v5491
        %v5842 = vunpack.c.h.b16 %v5491
        %v5843 = vunpack.c.l.b16 %v5492
        %v5844 = vunpack.c.h.b16 %v5492
        %v5845 = vunpack.c.l.b16 %v5493
        %v5846 = vunpack.c.h.b16 %v5493
        %v5847 = vunpack.c.l.b16 %v5494
        %v5848 = vunpack.c.h.b16 %v5494
        %v5849 = vunpack.c.l.b16 %v5495
        %v5850 = vunpack.c.h.b16 %v5495
        %v5851 = vunpack.c.l.b16 %v5496
        %v5852 = vunpack.c.h.b16 %v5496
        %v5853 = vunpack.c.l.b16 %v5497
        %v5854 = vunpack.c.h.b16 %v5497
        %v5855 = vunpack.c.l.b16 %v5498
        %v5856 = vunpack.c.h.b16 %v5498
        %v5857 = vunpack.c.l.b16 %v5499
        %v5858 = vunpack.c.h.b16 %v5499
        %v5859 = vpack.c.b16 %v5797, %v5795
        %v5860 = vpack.c.b16 %v5798, %v5796
        %v5861 = vpack.c.b16 %v5801, %v5799
        %v5862 = vpack.c.b16 %v5802, %v5800
        %v5863 = vpack.c.b16 %v5805, %v5803
        %v5864 = vpack.c.b16 %v5806, %v5804
        %v5865 = vpack.c.b16 %v5809, %v5807
        %v5866 = vpack.c.b16 %v5810, %v5808
        %v5867 = vpack.c.b16 %v5813, %v5811
        %v5868 = vpack.c.b16 %v5814, %v5812
        %v5869 = vpack.c.b16 %v5817, %v5815
        %v5870 = vpack.c.b16 %v5818, %v5816
        %v5871 = vpack.c.b16 %v5821, %v5819
        %v5872 = vpack.c.b16 %v5822, %v5820
        %v5873 = vpack.c.b16 %v5825, %v5823
        %v5874 = vpack.c.b16 %v5826, %v5824
        %v5875 = vpack.c.b16 %v5829, %v5827
        %v5876 = vpack.c.b16 %v5830, %v5828
        %v5877 = vpack.c.b16 %v5833, %v5831
        %v5878 = vpack.c.b16 %v5834, %v5832
        %v5879 = vpack.c.b16 %v5837, %v5835
        %v5880 = vpack.c.b16 %v5838, %v5836
        %v5881 = vpack.c.b16 %v5841, %v5839
        %v5882 = vpack.c.b16 %v5842, %v5840
        %v5883 = vpack.c.b16 %v5845, %v5843
        %v5884 = vpack.c.b16 %v5846, %v5844
        %v5885 = vpack.c.b16 %v5849, %v5847
        %v5886 = vpack.c.b16 %v5850, %v5848
        %v5887 = vpack.c.b16 %v5853, %v5851
        %v5888 = vpack.c.b16 %v5854, %v5852
        %v5889 = vpack.c.b16 %v5857, %v5855
        %v5890 = vpack.c.b16 %v5858, %v5856
        %5923 = vmatprep.subr.bf16.mxu0 %v5860
        %5924 = vmatpush1.bf16.msra.mxu0 %v5859
        %5925 = vmatprep.subr.bf16.mxu0 %v5862
        %5926 = vmatpush1.bf16.msra.mxu0 %v5861
        %5927 = vmatprep.subr.bf16.mxu0 %v5864
        %5928 = vmatpush1.bf16.msra.mxu0 %v5863
        %5929 = vmatprep.subr.bf16.mxu0 %v5866
        %5930 = vmatpush1.bf16.msra.mxu0 %v5865
        %5931 = vmatprep.subr.bf16.mxu0 %v5868
        %5932 = vmatpush1.bf16.msra.mxu0 %v5867
        %5933 = vmatprep.subr.bf16.mxu0 %v5870
        %5934 = vmatpush1.bf16.msra.mxu0 %v5869
        %5935 = vmatprep.subr.bf16.mxu0 %v5872
        %5936 = vmatpush1.bf16.msra.mxu0 %v5871
        %5937 = vmatprep.subr.bf16.mxu0 %v5874
        %5938 = vmatpush1.bf16.msra.mxu0 %v5873
        %5939 = vmatprep.subr.bf16.mxu0 %v5876
        %5940 = vmatpush1.bf16.msra.mxu0 %v5875
        %5941 = vmatprep.subr.bf16.mxu0 %v5878
        %5942 = vmatpush1.bf16.msra.mxu0 %v5877
        %5943 = vmatprep.subr.bf16.mxu0 %v5880
        %5944 = vmatpush1.bf16.msra.mxu0 %v5879
        %5945 = vmatprep.subr.bf16.mxu0 %v5882
        %5946 = vmatpush1.bf16.msra.mxu0 %v5881
        %5947 = vmatprep.subr.bf16.mxu0 %v5884
        %5948 = vmatpush1.bf16.msra.mxu0 %v5883
        %5949 = vmatprep.subr.bf16.mxu0 %v5886
        %5950 = vmatpush1.bf16.msra.mxu0 %v5885
        %5951 = vmatprep.subr.bf16.mxu0 %v5888
        %5952 = vmatpush1.bf16.msra.mxu0 %v5887
        %5953 = vmatprep.subr.bf16.mxu0 %v5890
        %5954 = vmatpush1.bf16.msra.mxu0 %v5889
        %5955 = vmatprep.mubr.bf16.mxu0 %v5760
        %5956 = vmatmul.mubr.bf16.gmra.mrb[0].mxu0 %v5759
        %v5957 = vpop.f32.mrb[0].mxu0
        %v5958 = vadd.f32 %v5750, %v5957
        %v5959 = vpop.f32.mrb[0].mxu0
        %v5960 = vadd.f32 %v5752, %v5959
        %v5961 = vpop.f32.mrb[0].mxu0
        %v5962 = vpop.f32.mrb[0].mxu0
        %5963 = vdwg.mxu0
        %v5964 = vld [vmem:[#allocation7] sm:$0x66]
        %s5965 = scalar_lea.vmem [#allocation10], 4352
        %v5966 = vld [vmem:[%s5965] sm:$0xff]
        %v5967 = vld [vmem:[%s5965 + $0x8] sm:$0xff]
        %v5968 = vld [vmem:[%s5965 + $0x10] sm:$0xff]
        %v5969 = vld [vmem:[%s5965 + $0x18] sm:$0xff]
        %v5970 = vld [vmem:[%s5965 + $0x20] sm:$0xff]
        %v5971 = vld [vmem:[%s5965 + $0x28] sm:$0xff]
        %v5972 = vld [vmem:[%s5965 + $0x30] sm:$0xff]
        %v5973 = vld [vmem:[%s5965 + $0x38] sm:$0xff]
        %v5974 = vld [vmem:[%s5965 + $0x40] sm:$0xff]
        %v5975 = vld [vmem:[%s5965 + $0x48] sm:$0xff]
        %v5976 = vld [vmem:[%s5965 + $0x50] sm:$0xff]
        %v5977 = vld [vmem:[%s5965 + $0x58] sm:$0xff]
        %v5978 = vld [vmem:[%s5965 + $0x60] sm:$0xff]
        %v5979 = vld [vmem:[%s5965 + $0x68] sm:$0xff]
        %v5980 = vld [vmem:[%s5965 + $0x70] sm:$0xff]
        %v5981 = vld [vmem:[%s5965 + $0x78] sm:$0xff]
        %v5982 = vld [vmem:[%s5965 + $0x80] sm:$0xff]
        %v5983 = vld [vmem:[%s5965 + $0x88] sm:$0xff]
        %v5984 = vld [vmem:[%s5965 + $0x90] sm:$0xff]
        %v5985 = vld [vmem:[%s5965 + $0x98] sm:$0xff]
        %v5986 = vld [vmem:[%s5965 + $0xa0] sm:$0xff]
        %v5987 = vld [vmem:[%s5965 + $0xa8] sm:$0xff]
        %v5988 = vld [vmem:[%s5965 + $0xb0] sm:$0xff]
        %v5989 = vld [vmem:[%s5965 + $0xb8] sm:$0xff]
        %v5990 = vld [vmem:[%s5965 + $0xc0] sm:$0xff]
        %v5991 = vld [vmem:[%s5965 + $0xc8] sm:$0xff]
        %v5992 = vld [vmem:[%s5965 + $0xd0] sm:$0xff]
        %v5993 = vld [vmem:[%s5965 + $0xd8] sm:$0xff]
        %v5994 = vld [vmem:[%s5965 + $0xe0] sm:$0xff]
        %v5995 = vld [vmem:[%s5965 + $0xe8] sm:$0xff]
        %v5996 = vld [vmem:[%s5965 + $0xf0] sm:$0xff]
        %v5997 = vld [vmem:[%s5965 + $0xf8] sm:$0xff]
        %v5999 = vunpack.c.l.b16 %v5964
        %v6000 = vunpack.c.h.b16 %v5964
        %v6001 = vpack.c.b16 %v5999, %v5999
        %v6002 = vpack.c.b16 %v6000, %v6000
        %v6003 = vrot.slane %v6001, 1
        %v6004 = vrot.slane %v6002, 1
        %v6039 = vunpack.c.l.b16 %v5966
        %v6040 = vunpack.c.h.b16 %v5966
        %v6041 = vunpack.c.l.b16 %v5967
        %v6042 = vunpack.c.h.b16 %v5967
        %v6043 = vunpack.c.l.b16 %v5968
        %v6044 = vunpack.c.h.b16 %v5968
        %v6045 = vunpack.c.l.b16 %v5969
        %v6046 = vunpack.c.h.b16 %v5969
        %v6047 = vunpack.c.l.b16 %v5970
        %v6048 = vunpack.c.h.b16 %v5970
        %v6049 = vunpack.c.l.b16 %v5971
        %v6050 = vunpack.c.h.b16 %v5971
        %v6051 = vunpack.c.l.b16 %v5972
        %v6052 = vunpack.c.h.b16 %v5972
        %v6053 = vunpack.c.l.b16 %v5973
        %v6054 = vunpack.c.h.b16 %v5973
        %v6055 = vunpack.c.l.b16 %v5974
        %v6056 = vunpack.c.h.b16 %v5974
        %v6057 = vunpack.c.l.b16 %v5975
        %v6058 = vunpack.c.h.b16 %v5975
        %v6059 = vunpack.c.l.b16 %v5976
        %v6060 = vunpack.c.h.b16 %v5976
        %v6061 = vunpack.c.l.b16 %v5977
        %v6062 = vunpack.c.h.b16 %v5977
        %v6063 = vunpack.c.l.b16 %v5978
        %v6064 = vunpack.c.h.b16 %v5978
        %v6065 = vunpack.c.l.b16 %v5979
        %v6066 = vunpack.c.h.b16 %v5979
        %v6067 = vunpack.c.l.b16 %v5980
        %v6068 = vunpack.c.h.b16 %v5980
        %v6069 = vunpack.c.l.b16 %v5981
        %v6070 = vunpack.c.h.b16 %v5981
        %v6071 = vunpack.c.l.b16 %v5982
        %v6072 = vunpack.c.h.b16 %v5982
        %v6073 = vunpack.c.l.b16 %v5983
        %v6074 = vunpack.c.h.b16 %v5983
        %v6075 = vunpack.c.l.b16 %v5984
        %v6076 = vunpack.c.h.b16 %v5984
        %v6077 = vunpack.c.l.b16 %v5985
        %v6078 = vunpack.c.h.b16 %v5985
        %v6079 = vunpack.c.l.b16 %v5986
        %v6080 = vunpack.c.h.b16 %v5986
        %v6081 = vunpack.c.l.b16 %v5987
        %v6082 = vunpack.c.h.b16 %v5987
        %v6083 = vunpack.c.l.b16 %v5988
        %v6084 = vunpack.c.h.b16 %v5988
        %v6085 = vunpack.c.l.b16 %v5989
        %v6086 = vunpack.c.h.b16 %v5989
        %v6087 = vunpack.c.l.b16 %v5990
        %v6088 = vunpack.c.h.b16 %v5990
        %v6089 = vunpack.c.l.b16 %v5991
        %v6090 = vunpack.c.h.b16 %v5991
        %v6091 = vunpack.c.l.b16 %v5992
        %v6092 = vunpack.c.h.b16 %v5992
        %v6093 = vunpack.c.l.b16 %v5993
        %v6094 = vunpack.c.h.b16 %v5993
        %v6095 = vunpack.c.l.b16 %v5994
        %v6096 = vunpack.c.h.b16 %v5994
        %v6097 = vunpack.c.l.b16 %v5995
        %v6098 = vunpack.c.h.b16 %v5995
        %v6099 = vunpack.c.l.b16 %v5996
        %v6100 = vunpack.c.h.b16 %v5996
        %v6101 = vunpack.c.l.b16 %v5997
        %v6102 = vunpack.c.h.b16 %v5997
        %v6103 = vpack.c.b16 %v6041, %v6039
        %v6104 = vpack.c.b16 %v6042, %v6040
        %v6105 = vpack.c.b16 %v6045, %v6043
        %v6106 = vpack.c.b16 %v6046, %v6044
        %v6107 = vpack.c.b16 %v6049, %v6047
        %v6108 = vpack.c.b16 %v6050, %v6048
        %v6109 = vpack.c.b16 %v6053, %v6051
        %v6110 = vpack.c.b16 %v6054, %v6052
        %v6111 = vpack.c.b16 %v6057, %v6055
        %v6112 = vpack.c.b16 %v6058, %v6056
        %v6113 = vpack.c.b16 %v6061, %v6059
        %v6114 = vpack.c.b16 %v6062, %v6060
        %v6115 = vpack.c.b16 %v6065, %v6063
        %v6116 = vpack.c.b16 %v6066, %v6064
        %v6117 = vpack.c.b16 %v6069, %v6067
        %v6118 = vpack.c.b16 %v6070, %v6068
        %v6119 = vpack.c.b16 %v6073, %v6071
        %v6120 = vpack.c.b16 %v6074, %v6072
        %v6121 = vpack.c.b16 %v6077, %v6075
        %v6122 = vpack.c.b16 %v6078, %v6076
        %v6123 = vpack.c.b16 %v6081, %v6079
        %v6124 = vpack.c.b16 %v6082, %v6080
        %v6125 = vpack.c.b16 %v6085, %v6083
        %v6126 = vpack.c.b16 %v6086, %v6084
        %v6127 = vpack.c.b16 %v6089, %v6087
        %v6128 = vpack.c.b16 %v6090, %v6088
        %v6129 = vpack.c.b16 %v6093, %v6091
        %v6130 = vpack.c.b16 %v6094, %v6092
        %v6131 = vpack.c.b16 %v6097, %v6095
        %v6132 = vpack.c.b16 %v6098, %v6096
        %v6133 = vpack.c.b16 %v6101, %v6099
        %v6134 = vpack.c.b16 %v6102, %v6100
        %6167 = vmatprep.subr.bf16.mxu0 %v6104
        %6168 = vmatpush1.bf16.msra.mxu0 %v6103
        %6169 = vmatprep.subr.bf16.mxu0 %v6106
        %6170 = vmatpush1.bf16.msra.mxu0 %v6105
        %6171 = vmatprep.subr.bf16.mxu0 %v6108
        %6172 = vmatpush1.bf16.msra.mxu0 %v6107
        %6173 = vmatprep.subr.bf16.mxu0 %v6110
        %6174 = vmatpush1.bf16.msra.mxu0 %v6109
        %6175 = vmatprep.subr.bf16.mxu0 %v6112
        %6176 = vmatpush1.bf16.msra.mxu0 %v6111
        %6177 = vmatprep.subr.bf16.mxu0 %v6114
        %6178 = vmatpush1.bf16.msra.mxu0 %v6113
        %6179 = vmatprep.subr.bf16.mxu0 %v6116
        %6180 = vmatpush1.bf16.msra.mxu0 %v6115
        %6181 = vmatprep.subr.bf16.mxu0 %v6118
        %6182 = vmatpush1.bf16.msra.mxu0 %v6117
        %6183 = vmatprep.subr.bf16.mxu0 %v6120
        %6184 = vmatpush1.bf16.msra.mxu0 %v6119
        %6185 = vmatprep.subr.bf16.mxu0 %v6122
        %6186 = vmatpush1.bf16.msra.mxu0 %v6121
        %6187 = vmatprep.subr.bf16.mxu0 %v6124
        %6188 = vmatpush1.bf16.msra.mxu0 %v6123
        %6189 = vmatprep.subr.bf16.mxu0 %v6126
        %6190 = vmatpush1.bf16.msra.mxu0 %v6125
        %6191 = vmatprep.subr.bf16.mxu0 %v6128
        %6192 = vmatpush1.bf16.msra.mxu0 %v6127
        %6193 = vmatprep.subr.bf16.mxu0 %v6130
        %6194 = vmatpush1.bf16.msra.mxu0 %v6129
        %6195 = vmatprep.subr.bf16.mxu0 %v6132
        %6196 = vmatpush1.bf16.msra.mxu0 %v6131
        %6197 = vmatprep.subr.bf16.mxu0 %v6134
        %6198 = vmatpush1.bf16.msra.mxu0 %v6133
        %6199 = vmatprep.mubr.bf16.mxu0 %v6004
        %6200 = vmatmul.mubr.bf16.gmra.mrb[0].mxu0 %v6003
        %v6201 = vpop.f32.mrb[0].mxu0
        %v6202 = vadd.f32 0.0, %v6201
        %v6203 = vpop.f32.mrb[0].mxu0
        %v6204 = vadd.f32 0.0, %v6203
        %v6205 = vpop.f32.mrb[0].mxu0
        %v6206 = vpop.f32.mrb[0].mxu0
        %6207 = vdwg.mxu0
        %v6208 = vadd.f32 %v5958, %v6202
        %v6209 = vadd.f32 %v5960, %v6204
        %s6210 = scalar_lea.vmem [#allocation12], 6
        %v6211 = vld [vmem:[%s6210] ss:$8 sm:$0x3]
        %v6213 = vlaneseq
        %v6214 = vshrl.u32 %v6213, 7
        %v6215 = vsub.s32 0, %v6214
        %v6216 = vrot.slane %v6211, %v6215
        %v6217 = vlaneseq
        %v6218 = vshrl.u32 %v6217, 7
        %v6219 = vsub.s32 1, %v6218
        %v6220 = vrot.slane %v6211, %v6219
        %v6223 = vadd.f32 %v6208, %v6216
        %v6224 = vadd.f32 %v6209, %v6220
        %v6225 = vadd.f32 %v6223, %v5460
        %v6226 = vadd.f32 %v6224, %v5462
        %v6227 = vmax.f32 %v6225, 0.0
        %v6228 = vmax.f32 %v6226, 0.0
        %v6231 = vcombine.low %v6227, %v6228
        %6233 = vst [vmem:[%s322] sm:$0xff] %v6231
        %p6234 = scmp.lt.s32.totalorder %s20, 1
        %s6235 = scalar_select %p6234, %s20, 1
        %s6236 = smul.addr %s6235, 2
        %s6237 = smul.addr %s6236, 4
        %s6238 = scalar_lea.vmem %s6, %s6237
        // Predicated region
        $region65: #{resnet_forward.1} parent=43 // pred_check
          %p6239 = pneg %p169
        $region66: #{resnet_forward.1} parent=43 // pred_check_branch
          %6241 = sbr.rel (%p6239) target = $region68
        $region67: #{resnet_forward.1} parent=43 // pred_region
          _
        $region68: #{resnet_forward.1} parent=43 // pred_fallthru
          _
      $region44: #{resnet_forward.1} parent=5 // pred_fallthru
        _
      %p6242 = scmp.le.s32.totalorder 2, %s15
      // Predicated region
      $region69: #{resnet_forward.1} parent=5 // pred_check
        %p6243 = pneg %p6242
      $region70: #{resnet_forward.1} parent=5 // pred_check_branch
        %6245 = sbr.rel (%p6243) target = $region72
      $region71: #{resnet_forward.1} parent=5 // pred_region
        %s6246 = ssub.s32 %s15, 2
        // Predicated region
        $region73: #{resnet_forward.1} parent=71 // pred_check
          %p6247 = pneg %p175
        $region74: #{resnet_forward.1} parent=71 // pred_check_branch
          %6249 = sbr.rel (%p6247) target = $region76
        $region75: #{resnet_forward.1} parent=71 // pred_region
          %p6250 = scmp.lt.s32.totalorder %s21, 1
          %s6251 = scalar_select %p6250, %s21, 1
          %s6252 = smul.addr %s6251, 2
          %s6253 = smul.addr %s6252, 4
          %s6254 = scalar_lea.vmem %s6, %s6253
        $region76: #{resnet_forward.1} parent=71 // pred_fallthru
          _
      $region72: #{resnet_forward.1} parent=5 // pred_fallthru
        _
    $region6: #{resnet_forward.1} parent=1 // loop_footer
      %s19 = sadd.s32 1, %s15
    $region7: #{resnet_forward.1} parent=1 // loop_footer_branch
      %14 = sbr.rel target = $region3
    $region8: #{resnet_forward.1} parent=1 // loop_exit
      _
    %6255 = vsyncpa [#allocation9], 1
    %s6256 = scalar_lea.sflag [#allocation9], 1
    %6257 = vsyncpa %s6256, 1
    %6258 = vsyncpa [#allocation11], 1
    %6259 = vsyncpa [#allocation14], 1

</llo_original>
